<compile_context>
chip_gen: v5e
topology: v5e:2x2
jax: 0.10.0
libtpu: 0.0.40
codegen_flags: <defaults>
</compile_context>

<pallas_src>
import jax
import jax.numpy as jnp
from jax.experimental import pallas as pl
from jax.experimental.pallas import tpu as pltpu


# ---------------------------------------------------------------------------
# Kernel: whole MLP forward for one (TB, 784) batch tile.
# ---------------------------------------------------------------------------
def _mlp_kernel(x_ref,
                w1_ref, b1_ref,
                w2_ref, b2_ref,
                w3_ref, b3_ref,
                w4_ref, b4_ref,
                w5_ref, b5_ref,
                w6_ref, b6_ref,
                out_ref):
    def dense(h_bf16, w_ref, b_ref, relu):
        # bf16 x bf16 matmul on the MXU, f32 accumulation, f32 bias/activation.
        z = jnp.dot(h_bf16, w_ref[...], preferred_element_type=jnp.float32)
        z = z + b_ref[...]
        if relu:
            z = jnp.maximum(z, 0.0)
        return z

    h = x_ref[...]                                                # bf16 (TB, 784)
    h = dense(h, w1_ref, b1_ref, True).astype(jnp.bfloat16)       # (TB, 1024)
    h = dense(h, w2_ref, b2_ref, True).astype(jnp.bfloat16)       # (TB, 128) [20 real]
    h = dense(h, w3_ref, b3_ref, True).astype(jnp.bfloat16)       # (TB, 128)
    h = dense(h, w4_ref, b4_ref, True).astype(jnp.bfloat16)       # (TB, 128)
    h = dense(h, w5_ref, b5_ref, True).astype(jnp.bfloat16)       # (TB, 128)
    logits = dense(h, w6_ref, b6_ref, False)                      # f32 (TB, 128)
    # padded lanes of logits are ~-1e30 (via bias padding) -> exp() == 0.

    # Numerically stable softmax over the feature axis (torch dim=1).
    m = jnp.max(logits, axis=-1, keepdims=True)
    e = jnp.exp(logits - m)
    denom = jnp.sum(e, axis=-1, keepdims=True)
    r = pl.reciprocal(denom, approx=True)       # EUP slot (free)
    r = r * (2.0 - denom * r)                   # one Newton step -> f32 accuracy
    out_ref[...] = (e * r).astype(out_ref.dtype)


# ---------------------------------------------------------------------------
# Wrapper helpers
# ---------------------------------------------------------------------------
def _round_up(x, m):
    return ((x + m - 1) // m) * m


def _pick_tile_and_vmem():
    """Generation-aware batch tile and VMEM budget (conservative fallback)."""
    try:
        vmem_phys = pltpu.get_tpu_info().vmem_capacity_bytes
    except Exception:
        vmem_phys = 64 << 20            # assume the smaller (v7x-like) budget
    if vmem_phys <= (64 << 20):         # v7x class: 64 MiB / TensorCore
        return 2048, 48 << 20
    return 4096, 96 << 20               # v5e / v6e: 128 MiB


def _prepare_params(params):
    """Pad hidden/output widths to 128 lanes; bf16 weights, f32 biases.

    Zero-padded weight columns + zero bias keep padded ReLU activations at 0,
    so they contribute nothing downstream.  The last layer's padded bias lanes
    get -1e30 so the padded logits disappear under softmax.
    """
    prepped = []
    n = len(params)
    for idx, (w, b) in enumerate(params):
        fan_in, fan_out = w.shape
        in_pad = fan_in if idx == 0 else _round_up(fan_in, 128)
        out_pad = _round_up(fan_out, 128)
        wp = jnp.zeros((in_pad, out_pad), jnp.float32).at[:fan_in, :fan_out].set(w)
        bias_fill = -1e30 if idx == n - 1 else 0.0
        bp = jnp.full((1, out_pad), bias_fill, jnp.float32)
        bp = bp.at[:, :fan_out].set(jnp.asarray(b, jnp.float32).reshape(1, -1))
        prepped.append((wp.astype(jnp.bfloat16), bp))
    return prepped


def simple_mlp_forward(x, params, *, batch_tile=None):
    """x: (B, 1, 28, 28) or (B, 784) float32.
    params: list of (W, b) with W (in, out), b (1, out) -- torch-transposed."""
    x2d = x.reshape(-1, 28 * 28).astype(jnp.float32)
    B = x2d.shape[0]

    if batch_tile is None:
        tb_max, vmem_limit = _pick_tile_and_vmem()
    else:
        tb_max, vmem_limit = batch_tile, 48 << 20

    TB = min(tb_max, _round_up(B, 16))          # bf16 sublane-aligned tile
    B_pad = _round_up(B, TB)

    xp = jnp.zeros((B_pad, 28 * 28), jnp.bfloat16)
    xp = xp.at[:B].set(x2d.astype(jnp.bfloat16))

    prepped = _prepare_params(params)

    flat_params = []
    in_specs = [pl.BlockSpec((TB, 28 * 28), lambda i: (i, 0))]
    for (w, b) in prepped:
        flat_params += [w, b]
        in_specs += [pl.BlockSpec(w.shape, lambda i: (0, 0)),
                     pl.BlockSpec(b.shape, lambda i: (0, 0))]

    out_padded = pl.pallas_call(
        _mlp_kernel,
        out_shape=jax.ShapeDtypeStruct((B_pad, 128), jnp.float32),
        grid=(B_pad // TB,),
        in_specs=in_specs,
        out_specs=pl.BlockSpec((TB, 128), lambda i: (i, 0)),
        compiler_params=pltpu.CompilerParams(
            dimension_semantics=("parallel",),
            vmem_limit_bytes=vmem_limit),
    )(xp, *flat_params)

    return out_padded[:B, :10]


# ---------------------------------------------------------------------------
# Init & reference (pure f32, torch-equivalent semantics)
# ---------------------------------------------------------------------------
def init_params(key):
    """Matches torch.nn.Linear's U(-1/sqrt(fan_in), 1/sqrt(fan_in)) init."""
    dims = [(28 * 28, 1024), (1024, 20), (20, 20), (20, 20), (20, 20), (20, 10)]
    params = []
    for (fan_in, fan_out) in dims:
        key, kw, kb = jax.random.split(key, 3)
        bound = 1.0 / jnp.sqrt(float(fan_in))
        w = jax.random.uniform(kw, (fan_in, fan_out), jnp.float32, -bound, bound)
        b = jax.random.uniform(kb, (1, fan_out), jnp.float32, -bound, bound)
        params.append((w, b))
    return params


def _reference_forward(x, params):
    h = x.reshape(-1, 28 * 28).astype(jnp.float32)
    for i, (w, b) in enumerate(params):
        h = h @ w + b
        if i < len(params) - 1:
            h = jnp.maximum(h, 0.0)
    return jax.nn.softmax(h, axis=1)


if __name__ == "__main__":
    key = jax.random.PRNGKey(0)
    k_in, k_par = jax.random.split(key)

    # NCHW MNIST-style input, as implied by the torch module.
    x = jax.random.normal(k_in, (2, 1, 28, 28), dtype=jnp.float32)
    params = init_params(k_par)

    out = jax.block_until_ready(simple_mlp_forward(x, params))
    ref = _reference_forward(x, params)

    assert out.shape == (2, 10)
    # Softmax rows must sum to 1 (exact f32 normalization after Newton step).
    assert jnp.allclose(jnp.sum(out, axis=1), 1.0, atol=1e-4), "softmax rows must sum to 1"
    # bf16 matmuls with f32 accumulation vs pure-f32 reference: loose tolerance.
    assert jnp.max(jnp.abs(out - ref)) < 2e-2, "mismatch vs f32 reference"
    assert jnp.array_equal(jnp.argmax(out, axis=1), jnp.argmax(ref, axis=1)), "argmax mismatch"

    print("KERNEL_OK")
</pallas_src>

<mosaic_0001>
module attributes {stable_mosaic.version = 11 : i64} {
  func.func @_mlp_kernel(%arg0: i32, %arg1: memref<16x784xbf16, #tpu.memory_space<vmem>>, %arg2: memref<784x1024xbf16, #tpu.memory_space<vmem>>, %arg3: memref<1x1024xf32, #tpu.memory_space<vmem>>, %arg4: memref<1024x128xbf16, #tpu.memory_space<vmem>>, %arg5: memref<1x128xf32, #tpu.memory_space<vmem>>, %arg6: memref<128x128xbf16, #tpu.memory_space<vmem>>, %arg7: memref<1x128xf32, #tpu.memory_space<vmem>>, %arg8: memref<128x128xbf16, #tpu.memory_space<vmem>>, %arg9: memref<1x128xf32, #tpu.memory_space<vmem>>, %arg10: memref<128x128xbf16, #tpu.memory_space<vmem>>, %arg11: memref<1x128xf32, #tpu.memory_space<vmem>>, %arg12: memref<128x128xbf16, #tpu.memory_space<vmem>>, %arg13: memref<1x128xf32, #tpu.memory_space<vmem>>, %arg14: memref<16x128xf32, #tpu.memory_space<vmem>>) attributes {dimension_semantics = [#tpu.dimension_semantics<parallel>], iteration_bounds = array<i64: 1>, scalar_prefetch = 0 : i64, scratch_operands = 0 : i64, tpu.core_type = #tpu.core_type<tc>, window_params = [{transform_indices = @transform_0, window_bounds = array<i64: 16, 784>}, {pipeline_mode = #tpu.pipeline_mode<synchronous>, transform_indices = @transform_1, window_bounds = array<i64: 784, 1024>}, {pipeline_mode = #tpu.pipeline_mode<synchronous>, transform_indices = @transform_2, window_bounds = array<i64: 1, 1024>}, {pipeline_mode = #tpu.pipeline_mode<synchronous>, transform_indices = @transform_3, window_bounds = array<i64: 1024, 128>}, {pipeline_mode = #tpu.pipeline_mode<synchronous>, transform_indices = @transform_4, window_bounds = array<i64: 1, 128>}, {pipeline_mode = #tpu.pipeline_mode<synchronous>, transform_indices = @transform_5, window_bounds = array<i64: 128, 128>}, {pipeline_mode = #tpu.pipeline_mode<synchronous>, transform_indices = @transform_6, window_bounds = array<i64: 1, 128>}, {pipeline_mode = #tpu.pipeline_mode<synchronous>, transform_indices = @transform_7, window_bounds = array<i64: 128, 128>}, {pipeline_mode = #tpu.pipeline_mode<synchronous>, transform_indices = @transform_8, window_bounds = array<i64: 1, 128>}, {pipeline_mode = #tpu.pipeline_mode<synchronous>, transform_indices = @transform_9, window_bounds = array<i64: 128, 128>}, {pipeline_mode = #tpu.pipeline_mode<synchronous>, transform_indices = @transform_10, window_bounds = array<i64: 1, 128>}, {pipeline_mode = #tpu.pipeline_mode<synchronous>, transform_indices = @transform_11, window_bounds = array<i64: 128, 128>}, {pipeline_mode = #tpu.pipeline_mode<synchronous>, transform_indices = @transform_12, window_bounds = array<i64: 1, 128>}, {transform_indices = @transform_13, window_bounds = array<i64: 16, 128>}]} {
    %c0 = arith.constant 0 : index
    %c0_0 = arith.constant 0 : index
    %0 = vector.load %arg1[%c0, %c0_0] : memref<16x784xbf16, #tpu.memory_space<vmem>>, vector<16x784xbf16>
    %c0_1 = arith.constant 0 : index
    %c0_2 = arith.constant 0 : index
    %1 = vector.load %arg2[%c0_1, %c0_2] : memref<784x1024xbf16, #tpu.memory_space<vmem>>, vector<784x1024xbf16>
    %cst = arith.constant dense<0.000000e+00> : vector<16x1024xf32>
    %2 = tpu.matmul %0, %1, %cst {dimension_numbers = #tpu.dot_dimension_numbers<[1], [0], [0], [1], [0, 0, 1, 1], [], []>} : vector<16x784xbf16>, vector<784x1024xbf16>, vector<16x1024xf32> -> vector<16x1024xf32>
    %c0_3 = arith.constant 0 : index
    %c0_4 = arith.constant 0 : index
    %3 = vector.load %arg3[%c0_3, %c0_4] : memref<1x1024xf32, #tpu.memory_space<vmem>>, vector<1x1024xf32>
    %4 = vector.broadcast %3 : vector<1x1024xf32> to vector<16x1024xf32>
    %5 = arith.addf %2, %4 : vector<16x1024xf32>
    %cst_5 = arith.constant 0.000000e+00 : f32
    %6 = vector.broadcast %cst_5 : f32 to vector<16x1024xf32>
    %7 = arith.maximumf %5, %6 : vector<16x1024xf32>
    %8 = arith.truncf %7 : vector<16x1024xf32> to vector<16x1024xbf16>
    %c0_6 = arith.constant 0 : index
    %c0_7 = arith.constant 0 : index
    %9 = vector.load %arg4[%c0_6, %c0_7] : memref<1024x128xbf16, #tpu.memory_space<vmem>>, vector<1024x128xbf16>
    %cst_8 = arith.constant dense<0.000000e+00> : vector<16x128xf32>
    %10 = tpu.matmul %8, %9, %cst_8 {dimension_numbers = #tpu.dot_dimension_numbers<[1], [0], [0], [1], [0, 0, 1, 1], [], []>} : vector<16x1024xbf16>, vector<1024x128xbf16>, vector<16x128xf32> -> vector<16x128xf32>
    %c0_9 = arith.constant 0 : index
    %c0_10 = arith.constant 0 : index
    %11 = vector.load %arg5[%c0_9, %c0_10] : memref<1x128xf32, #tpu.memory_space<vmem>>, vector<1x128xf32>
    %12 = vector.broadcast %11 : vector<1x128xf32> to vector<16x128xf32>
    %13 = arith.addf %10, %12 : vector<16x128xf32>
    %cst_11 = arith.constant 0.000000e+00 : f32
    %14 = vector.broadcast %cst_11 : f32 to vector<16x128xf32>
    %15 = arith.maximumf %13, %14 : vector<16x128xf32>
    %16 = arith.truncf %15 : vector<16x128xf32> to vector<16x128xbf16>
    %c0_12 = arith.constant 0 : index
    %c0_13 = arith.constant 0 : index
    %17 = vector.load %arg6[%c0_12, %c0_13] : memref<128x128xbf16, #tpu.memory_space<vmem>>, vector<128x128xbf16>
    %cst_14 = arith.constant dense<0.000000e+00> : vector<16x128xf32>
    %18 = tpu.matmul %16, %17, %cst_14 {dimension_numbers = #tpu.dot_dimension_numbers<[1], [0], [0], [1], [0, 0, 1, 1], [], []>} : vector<16x128xbf16>, vector<128x128xbf16>, vector<16x128xf32> -> vector<16x128xf32>
    %c0_15 = arith.constant 0 : index
    %c0_16 = arith.constant 0 : index
    %19 = vector.load %arg7[%c0_15, %c0_16] : memref<1x128xf32, #tpu.memory_space<vmem>>, vector<1x128xf32>
    %20 = vector.broadcast %19 : vector<1x128xf32> to vector<16x128xf32>
    %21 = arith.addf %18, %20 : vector<16x128xf32>
    %cst_17 = arith.constant 0.000000e+00 : f32
    %22 = vector.broadcast %cst_17 : f32 to vector<16x128xf32>
    %23 = arith.maximumf %21, %22 : vector<16x128xf32>
    %24 = arith.truncf %23 : vector<16x128xf32> to vector<16x128xbf16>
    %c0_18 = arith.constant 0 : index
    %c0_19 = arith.constant 0 : index
    %25 = vector.load %arg8[%c0_18, %c0_19] : memref<128x128xbf16, #tpu.memory_space<vmem>>, vector<128x128xbf16>
    %cst_20 = arith.constant dense<0.000000e+00> : vector<16x128xf32>
    %26 = tpu.matmul %24, %25, %cst_20 {dimension_numbers = #tpu.dot_dimension_numbers<[1], [0], [0], [1], [0, 0, 1, 1], [], []>} : vector<16x128xbf16>, vector<128x128xbf16>, vector<16x128xf32> -> vector<16x128xf32>
    %c0_21 = arith.constant 0 : index
    %c0_22 = arith.constant 0 : index
    %27 = vector.load %arg9[%c0_21, %c0_22] : memref<1x128xf32, #tpu.memory_space<vmem>>, vector<1x128xf32>
    %28 = vector.broadcast %27 : vector<1x128xf32> to vector<16x128xf32>
    %29 = arith.addf %26, %28 : vector<16x128xf32>
    %cst_23 = arith.constant 0.000000e+00 : f32
    %30 = vector.broadcast %cst_23 : f32 to vector<16x128xf32>
    %31 = arith.maximumf %29, %30 : vector<16x128xf32>
    %32 = arith.truncf %31 : vector<16x128xf32> to vector<16x128xbf16>
    %c0_24 = arith.constant 0 : index
    %c0_25 = arith.constant 0 : index
    %33 = vector.load %arg10[%c0_24, %c0_25] : memref<128x128xbf16, #tpu.memory_space<vmem>>, vector<128x128xbf16>
    %cst_26 = arith.constant dense<0.000000e+00> : vector<16x128xf32>
    %34 = tpu.matmul %32, %33, %cst_26 {dimension_numbers = #tpu.dot_dimension_numbers<[1], [0], [0], [1], [0, 0, 1, 1], [], []>} : vector<16x128xbf16>, vector<128x128xbf16>, vector<16x128xf32> -> vector<16x128xf32>
    %c0_27 = arith.constant 0 : index
    %c0_28 = arith.constant 0 : index
    %35 = vector.load %arg11[%c0_27, %c0_28] : memref<1x128xf32, #tpu.memory_space<vmem>>, vector<1x128xf32>
    %36 = vector.broadcast %35 : vector<1x128xf32> to vector<16x128xf32>
    %37 = arith.addf %34, %36 : vector<16x128xf32>
    %cst_29 = arith.constant 0.000000e+00 : f32
    %38 = vector.broadcast %cst_29 : f32 to vector<16x128xf32>
    %39 = arith.maximumf %37, %38 : vector<16x128xf32>
    %40 = arith.truncf %39 : vector<16x128xf32> to vector<16x128xbf16>
    %c0_30 = arith.constant 0 : index
    %c0_31 = arith.constant 0 : index
    %41 = vector.load %arg12[%c0_30, %c0_31] : memref<128x128xbf16, #tpu.memory_space<vmem>>, vector<128x128xbf16>
    %cst_32 = arith.constant dense<0.000000e+00> : vector<16x128xf32>
    %42 = tpu.matmul %40, %41, %cst_32 {dimension_numbers = #tpu.dot_dimension_numbers<[1], [0], [0], [1], [0, 0, 1, 1], [], []>} : vector<16x128xbf16>, vector<128x128xbf16>, vector<16x128xf32> -> vector<16x128xf32>
    %c0_33 = arith.constant 0 : index
    %c0_34 = arith.constant 0 : index
    %43 = vector.load %arg13[%c0_33, %c0_34] : memref<1x128xf32, #tpu.memory_space<vmem>>, vector<1x128xf32>
    %44 = vector.broadcast %43 : vector<1x128xf32> to vector<16x128xf32>
    %45 = arith.addf %42, %44 : vector<16x128xf32>
    %cst_35 = arith.constant dense<0xFF800000> : vector<16xf32>
    %46 = vector.multi_reduction <maximumf>, %45, %cst_35 [1] : vector<16x128xf32> to vector<16xf32>
    %47 = vector.shape_cast %46 : vector<16xf32> to vector<16x1xf32>
    %48 = vector.broadcast %47 : vector<16x1xf32> to vector<16x128xf32>
    %49 = arith.subf %45, %48 : vector<16x128xf32>
    %50 = math.exp %49 : vector<16x128xf32>
    %cst_36 = arith.constant dense<0.000000e+00> : vector<16xf32>
    %51 = vector.multi_reduction <add>, %50, %cst_36 [1] : vector<16x128xf32> to vector<16xf32>
    %52 = vector.shape_cast %51 : vector<16xf32> to vector<16x1xf32>
    %53 = tpu.reciprocal %52 {approx = true} : vector<16x1xf32> -> vector<16x1xf32>
    %54 = arith.mulf %52, %53 : vector<16x1xf32>
    %cst_37 = arith.constant 2.000000e+00 : f32
    %55 = vector.broadcast %cst_37 : f32 to vector<16x1xf32>
    %56 = arith.subf %55, %54 : vector<16x1xf32>
    %57 = arith.mulf %53, %56 : vector<16x1xf32>
    %58 = vector.broadcast %57 : vector<16x1xf32> to vector<16x128xf32>
    %59 = arith.mulf %50, %58 : vector<16x128xf32>
    %c0_38 = arith.constant 0 : index
    %c0_39 = arith.constant 0 : index
    %60 = vector.load %arg14[%c0_38, %c0_39] : memref<16x128xf32, #tpu.memory_space<vmem>>, vector<16x128xf32>
    tpu.vector_store %arg14[%c0_38, %c0_39], %59 {strides = array<i32>} : memref<16x128xf32, #tpu.memory_space<vmem>>, vector<16x128xf32>,
    return
  }
  func.func @transform_0(%arg0: i32) -> (i32, i32) {
    %c0_i32 = arith.constant 0 : i32
    %c0_i32_0 = arith.constant 0 : i32
    return %arg0, %c0_i32 : i32, i32
  }
  func.func @transform_1(%arg0: i32) -> (i32, i32) {
    %c0_i32 = arith.constant 0 : i32
    %c0_i32_0 = arith.constant 0 : i32
    %c0_i32_1 = arith.constant 0 : i32
    return %c0_i32, %c0_i32_0 : i32, i32
  }
  func.func @transform_2(%arg0: i32) -> (i32, i32) {
    %c0_i32 = arith.constant 0 : i32
    %c0_i32_0 = arith.constant 0 : i32
    %c0_i32_1 = arith.constant 0 : i32
    return %c0_i32, %c0_i32_0 : i32, i32
  }
  func.func @transform_3(%arg0: i32) -> (i32, i32) {
    %c0_i32 = arith.constant 0 : i32
    %c0_i32_0 = arith.constant 0 : i32
    %c0_i32_1 = arith.constant 0 : i32
    return %c0_i32, %c0_i32_0 : i32, i32
  }
  func.func @transform_4(%arg0: i32) -> (i32, i32) {
    %c0_i32 = arith.constant 0 : i32
    %c0_i32_0 = arith.constant 0 : i32
    %c0_i32_1 = arith.constant 0 : i32
    return %c0_i32, %c0_i32_0 : i32, i32
  }
  func.func @transform_5(%arg0: i32) -> (i32, i32) {
    %c0_i32 = arith.constant 0 : i32
    %c0_i32_0 = arith.constant 0 : i32
    %c0_i32_1 = arith.constant 0 : i32
    return %c0_i32, %c0_i32_0 : i32, i32
  }
  func.func @transform_6(%arg0: i32) -> (i32, i32) {
    %c0_i32 = arith.constant 0 : i32
    %c0_i32_0 = arith.constant 0 : i32
    %c0_i32_1 = arith.constant 0 : i32
    return %c0_i32, %c0_i32_0 : i32, i32
  }
  func.func @transform_7(%arg0: i32) -> (i32, i32) {
    %c0_i32 = arith.constant 0 : i32
    %c0_i32_0 = arith.constant 0 : i32
    %c0_i32_1 = arith.constant 0 : i32
    return %c0_i32, %c0_i32_0 : i32, i32
  }
  func.func @transform_8(%arg0: i32) -> (i32, i32) {
    %c0_i32 = arith.constant 0 : i32
    %c0_i32_0 = arith.constant 0 : i32
    %c0_i32_1 = arith.constant 0 : i32
    return %c0_i32, %c0_i32_0 : i32, i32
  }
  func.func @transform_9(%arg0: i32) -> (i32, i32) {
    %c0_i32 = arith.constant 0 : i32
    %c0_i32_0 = arith.constant 0 : i32
    %c0_i32_1 = arith.constant 0 : i32
    return %c0_i32, %c0_i32_0 : i32, i32
  }
  func.func @transform_10(%arg0: i32) -> (i32, i32) {
    %c0_i32 = arith.constant 0 : i32
    %c0_i32_0 = arith.constant 0 : i32
    %c0_i32_1 = arith.constant 0 : i32
    return %c0_i32, %c0_i32_0 : i32, i32
  }
  func.func @transform_11(%arg0: i32) -> (i32, i32) {
    %c0_i32 = arith.constant 0 : i32
    %c0_i32_0 = arith.constant 0 : i32
    %c0_i32_1 = arith.constant 0 : i32
    return %c0_i32, %c0_i32_0 : i32, i32
  }
  func.func @transform_12(%arg0: i32) -> (i32, i32) {
    %c0_i32 = arith.constant 0 : i32
    %c0_i32_0 = arith.constant 0 : i32
    %c0_i32_1 = arith.constant 0 : i32
    return %c0_i32, %c0_i32_0 : i32, i32
  }
  func.func @transform_13(%arg0: i32) -> (i32, i32) {
    %c0_i32 = arith.constant 0 : i32
    %c0_i32_0 = arith.constant 0 : i32
    return %arg0, %c0_i32 : i32, i32
  }
}

</mosaic_0001>

<llo_original>
// kernel: tpu_custom_call.1
$region0: #{tpu_custom_call.1}
  #allocation0 [shape = 'u32[]', space=smem, size = 0x4, offset = 0x4, fixed_abs, tag = 'smem constant byte address 0x4 - core index']
  #allocation1 [shape = 'u32[72,128]{1,0:T(1,128)}', space=vmem, size = 0x9000, scoped, tag = 'internal scratch']
  %s0 = inlined_call_operand.hbm [shape: bf16[16,784], index: 0, kind: input, shape index: {}]
  %s1 = inlined_call_operand.hbm [shape: bf16[784,1024], index: 1, kind: input, shape index: {}]
  %s2 = inlined_call_operand.hbm [shape: f32[1,1024], index: 2, kind: input, shape index: {}]
  %s3 = inlined_call_operand.hbm [shape: bf16[1024,128], index: 3, kind: input, shape index: {}]
  %s4 = inlined_call_operand.hbm [shape: f32[1,128], index: 4, kind: input, shape index: {}]
  %s5 = inlined_call_operand.hbm [shape: bf16[128,128], index: 5, kind: input, shape index: {}]
  %s6 = inlined_call_operand.hbm [shape: f32[1,128], index: 6, kind: input, shape index: {}]
  %s7 = inlined_call_operand.hbm [shape: bf16[128,128], index: 7, kind: input, shape index: {}]
  %s8 = inlined_call_operand.hbm [shape: f32[1,128], index: 8, kind: input, shape index: {}]
  %s9 = inlined_call_operand.hbm [shape: bf16[128,128], index: 9, kind: input, shape index: {}]
  %s10 = inlined_call_operand.hbm [shape: f32[1,128], index: 10, kind: input, shape index: {}]
  %s11 = inlined_call_operand.hbm [shape: bf16[128,128], index: 11, kind: input, shape index: {}]
  %s12 = inlined_call_operand.hbm [shape: f32[1,128], index: 12, kind: input, shape index: {}]
  %s13 = inlined_call_operand.hbm [shape: f32[16,128], index: 13, kind: output, shape index: {}]
  %s14 = sld [smem:[#allocation0]]
  $region114: #{tpu_custom_call.1} parent=0
    _
  %s16 = ssub.s32 1, %s14
  %s17 = scalar_select 0, %s16, %s14
  $region1: #{tpu_custom_call.1} parent=0
    #allocation2 [shape = 'u8[28672]{0}', space=vmem, size = 0x7000, scoped, tag = 'input window, operand 0, single buffered']
    #allocation3 [shape = 's32[1]{0}', space=sflag, size = 0x4, scoped, tag = 'scoped memory for tpu_custom_call.1']
    #allocation4 [shape = 's32[1]{0}', space=sflag, size = 0x4, scoped, tag = 'scoped memory for tpu_custom_call.1']
    #allocation5 [shape = 'u8[1605632]{0}', space=vmem, size = 0x188000, scoped, tag = 'input window, operand 1, single buffered']
    #allocation6 [shape = 's32[1]{0}', space=sflag, size = 0x4, scoped, tag = 'scoped memory for tpu_custom_call.1']
    #allocation7 [shape = 'u8[4096]{0}', space=vmem, size = 0x1000, scoped, tag = 'input window, operand 2, single buffered']
    #allocation8 [shape = 'u8[262144]{0}', space=vmem, size = 0x40000, scoped, tag = 'input window, operand 3, single buffered']
    #allocation9 [shape = 's32[1]{0}', space=sflag, size = 0x4, scoped, tag = 'scoped memory for tpu_custom_call.1']
    #allocation10 [shape = 'u8[512]{0}', space=vmem, size = 0x400, scoped, tag = 'input window, operand 4, single buffered']
    #allocation11 [shape = 'u8[32768]{0}', space=vmem, size = 0x8000, scoped, tag = 'input window, operand 5, single buffered']
    #allocation12 [shape = 's32[1]{0}', space=sflag, size = 0x4, scoped, tag = 'scoped memory for tpu_custom_call.1']
    #allocation13 [shape = 'u8[512]{0}', space=vmem, size = 0x400, scoped, tag = 'input window, operand 6, single buffered']
    #allocation14 [shape = 'u8[32768]{0}', space=vmem, size = 0x8000, scoped, tag = 'input window, operand 7, single buffered']
    #allocation15 [shape = 's32[1]{0}', space=sflag, size = 0x4, scoped, tag = 'scoped memory for tpu_custom_call.1']
    #allocation16 [shape = 'u8[512]{0}', space=vmem, size = 0x400, scoped, tag = 'input window, operand 8, single buffered']
    #allocation17 [shape = 'u8[32768]{0}', space=vmem, size = 0x8000, scoped, tag = 'input window, operand 9, single buffered']
    #allocation18 [shape = 's32[1]{0}', space=sflag, size = 0x4, scoped, tag = 'scoped memory for tpu_custom_call.1']
    #allocation19 [shape = 'u8[512]{0}', space=vmem, size = 0x400, scoped, tag = 'input window, operand 10, single buffered']
    #allocation20 [shape = 'u8[32768]{0}', space=vmem, size = 0x8000, scoped, tag = 'input window, operand 11, single buffered']
    #allocation21 [shape = 's32[1]{0}', space=sflag, size = 0x4, scoped, tag = 'scoped memory for tpu_custom_call.1']
    #allocation22 [shape = 'u8[512]{0}', space=vmem, size = 0x400, scoped, tag = 'input window, operand 12, single buffered']
    #allocation23 [shape = 'u8[8192]{0}', space=vmem, size = 0x2000, scoped, tag = 'output window, operand 0, single buffered']
    %18 = vsyncpa [#allocation3], 0
    %19 = vsyncpa [#allocation6], 0
    %20 = vsyncpa [#allocation9], 0
    %21 = vsyncpa [#allocation12], 0
    %22 = vsyncpa [#allocation15], 0
    %23 = vsyncpa [#allocation18], 0
    %24 = vsyncpa [#allocation21], 0
    %25 = vsyncpa [#allocation4], 0
    // Predicated region
    $region2: #{tpu_custom_call.1} parent=1 // pred_check
      _
    $region3: #{tpu_custom_call.1} parent=1 // pred_check_branch
      %27 = sbr.rel (0) target = $region5
    $region4: #{tpu_custom_call.1} parent=1 // pred_region
      %29 = vsyncadd [#allocation3], 0
      %s30 = sshll.u32 %s0, 4
      %s31 = int_to_ptr.hbm [resolvable:$true] %s30
      %s32 = sshll.u32 [#allocation2], 4
      %s33 = int_to_ptr.vmem [resolvable:$true] %s32
      %38 = dma.hbm_to_vmem [thread:$0]  %s31, 896, %s33, [#allocation3], 448, 448, 28
    $region5: #{tpu_custom_call.1} parent=1 // pred_fallthru
      _
    // Predicated region
    $region6: #{tpu_custom_call.1} parent=1 // pred_check
      _
    $region7: #{tpu_custom_call.1} parent=1 // pred_check_branch
      %40 = sbr.rel (0) target = $region9
    $region8: #{tpu_custom_call.1} parent=1 // pred_region
      %42 = vsyncadd [#allocation6], 0
      %s43 = sshll.u32 %s1, 4
      %s44 = int_to_ptr.hbm [resolvable:$true] %s43
      %s45 = sshll.u32 [#allocation5], 4
      %s46 = int_to_ptr.vmem [resolvable:$true] %s45
      %51 = dma.hbm_to_vmem [thread:$0]  %s44, 50176, %s46, [#allocation6], 512, 512, 32
    $region9: #{tpu_custom_call.1} parent=1 // pred_fallthru
      _
    // Predicated region
    $region10: #{tpu_custom_call.1} parent=1 // pred_check
      _
    $region11: #{tpu_custom_call.1} parent=1 // pred_check_branch
      %53 = sbr.rel (0) target = $region13
    $region12: #{tpu_custom_call.1} parent=1 // pred_region
      %55 = vsyncadd [#allocation6], 0
      %s57 = sshll.u32 %s2, 4
      %s58 = int_to_ptr.hbm [resolvable:$true] %s57
      %s59 = sshll.u32 [#allocation7], 4
      %s60 = int_to_ptr.vmem [resolvable:$true] %s59
      %62 = dma.hbm_to_vmem [thread:$0]  %s58, 128, %s60, [#allocation6]
    $region13: #{tpu_custom_call.1} parent=1 // pred_fallthru
      _
    // Predicated region
    $region14: #{tpu_custom_call.1} parent=1 // pred_check
      _
    $region15: #{tpu_custom_call.1} parent=1 // pred_check_branch
      %64 = sbr.rel (0) target = $region17
    $region16: #{tpu_custom_call.1} parent=1 // pred_region
      %66 = vsyncadd [#allocation9], 0
      %s67 = sshll.u32 %s3, 4
      %s68 = int_to_ptr.hbm [resolvable:$true] %s67
      %s69 = sshll.u32 [#allocation8], 4
      %s70 = int_to_ptr.vmem [resolvable:$true] %s69
      %75 = dma.hbm_to_vmem [thread:$0]  %s68, 8192, %s70, [#allocation9], 64, 64, 4
    $region17: #{tpu_custom_call.1} parent=1 // pred_fallthru
      _
    // Predicated region
    $region18: #{tpu_custom_call.1} parent=1 // pred_check
      _
    $region19: #{tpu_custom_call.1} parent=1 // pred_check_branch
      %77 = sbr.rel (0) target = $region21
    $region20: #{tpu_custom_call.1} parent=1 // pred_region
      %79 = vsyncadd [#allocation9], 0
      %s81 = sshll.u32 %s4, 4
      %s82 = int_to_ptr.hbm [resolvable:$true] %s81
      %s83 = sshll.u32 [#allocation10], 4
      %s84 = int_to_ptr.vmem [resolvable:$true] %s83
      %86 = dma.hbm_to_vmem [thread:$0]  %s82, 16, %s84, [#allocation9]
    $region21: #{tpu_custom_call.1} parent=1 // pred_fallthru
      _
    // Predicated region
    $region22: #{tpu_custom_call.1} parent=1 // pred_check
      _
    $region23: #{tpu_custom_call.1} parent=1 // pred_check_branch
      %88 = sbr.rel (0) target = $region25
    $region24: #{tpu_custom_call.1} parent=1 // pred_region
      %90 = vsyncadd [#allocation12], 0
      %s91 = sshll.u32 %s5, 4
      %s92 = int_to_ptr.hbm [resolvable:$true] %s91
      %s93 = sshll.u32 [#allocation11], 4
      %s94 = int_to_ptr.vmem [resolvable:$true] %s93
      %99 = dma.hbm_to_vmem [thread:$0]  %s92, 1024, %s94, [#allocation12], 64, 64, 4
    $region25: #{tpu_custom_call.1} parent=1 // pred_fallthru
      _
    // Predicated region
    $region26: #{tpu_custom_call.1} parent=1 // pred_check
      _
    $region27: #{tpu_custom_call.1} parent=1 // pred_check_branch
      %101 = sbr.rel (0) target = $region29
    $region28: #{tpu_custom_call.1} parent=1 // pred_region
      %103 = vsyncadd [#allocation12], 0
      %s105 = sshll.u32 %s6, 4
      %s106 = int_to_ptr.hbm [resolvable:$true] %s105
      %s107 = sshll.u32 [#allocation13], 4
      %s108 = int_to_ptr.vmem [resolvable:$true] %s107
      %110 = dma.hbm_to_vmem [thread:$0]  %s106, 16, %s108, [#allocation12]
    $region29: #{tpu_custom_call.1} parent=1 // pred_fallthru
      _
    // Predicated region
    $region30: #{tpu_custom_call.1} parent=1 // pred_check
      _
    $region31: #{tpu_custom_call.1} parent=1 // pred_check_branch
      %112 = sbr.rel (0) target = $region33
    $region32: #{tpu_custom_call.1} parent=1 // pred_region
      %114 = vsyncadd [#allocation15], 0
      %s115 = sshll.u32 %s7, 4
      %s116 = int_to_ptr.hbm [resolvable:$true] %s115
      %s117 = sshll.u32 [#allocation14], 4
      %s118 = int_to_ptr.vmem [resolvable:$true] %s117
      %123 = dma.hbm_to_vmem [thread:$0]  %s116, 1024, %s118, [#allocation15], 64, 64, 4
    $region33: #{tpu_custom_call.1} parent=1 // pred_fallthru
      _
    // Predicated region
    $region34: #{tpu_custom_call.1} parent=1 // pred_check
      _
    $region35: #{tpu_custom_call.1} parent=1 // pred_check_branch
      %125 = sbr.rel (0) target = $region37
    $region36: #{tpu_custom_call.1} parent=1 // pred_region
      %127 = vsyncadd [#allocation15], 0
      %s129 = sshll.u32 %s8, 4
      %s130 = int_to_ptr.hbm [resolvable:$true] %s129
      %s131 = sshll.u32 [#allocation16], 4
      %s132 = int_to_ptr.vmem [resolvable:$true] %s131
      %134 = dma.hbm_to_vmem [thread:$0]  %s130, 16, %s132, [#allocation15]
    $region37: #{tpu_custom_call.1} parent=1 // pred_fallthru
      _
    // Predicated region
    $region38: #{tpu_custom_call.1} parent=1 // pred_check
      _
    $region39: #{tpu_custom_call.1} parent=1 // pred_check_branch
      %136 = sbr.rel (0) target = $region41
    $region40: #{tpu_custom_call.1} parent=1 // pred_region
      %138 = vsyncadd [#allocation18], 0
      %s139 = sshll.u32 %s9, 4
      %s140 = int_to_ptr.hbm [resolvable:$true] %s139
      %s141 = sshll.u32 [#allocation17], 4
      %s142 = int_to_ptr.vmem [resolvable:$true] %s141
      %147 = dma.hbm_to_vmem [thread:$0]  %s140, 1024, %s142, [#allocation18], 64, 64, 4
    $region41: #{tpu_custom_call.1} parent=1 // pred_fallthru
      _
    // Predicated region
    $region42: #{tpu_custom_call.1} parent=1 // pred_check
      _
    $region43: #{tpu_custom_call.1} parent=1 // pred_check_branch
      %149 = sbr.rel (0) target = $region45
    $region44: #{tpu_custom_call.1} parent=1 // pred_region
      %151 = vsyncadd [#allocation18], 0
      %s153 = sshll.u32 %s10, 4
      %s154 = int_to_ptr.hbm [resolvable:$true] %s153
      %s155 = sshll.u32 [#allocation19], 4
      %s156 = int_to_ptr.vmem [resolvable:$true] %s155
      %158 = dma.hbm_to_vmem [thread:$0]  %s154, 16, %s156, [#allocation18]
    $region45: #{tpu_custom_call.1} parent=1 // pred_fallthru
      _
    // Predicated region
    $region46: #{tpu_custom_call.1} parent=1 // pred_check
      _
    $region47: #{tpu_custom_call.1} parent=1 // pred_check_branch
      %160 = sbr.rel (0) target = $region49
    $region48: #{tpu_custom_call.1} parent=1 // pred_region
      %162 = vsyncadd [#allocation21], 0
      %s163 = sshll.u32 %s11, 4
      %s164 = int_to_ptr.hbm [resolvable:$true] %s163
      %s165 = sshll.u32 [#allocation20], 4
      %s166 = int_to_ptr.vmem [resolvable:$true] %s165
      %171 = dma.hbm_to_vmem [thread:$0]  %s164, 1024, %s166, [#allocation21], 64, 64, 4
    $region49: #{tpu_custom_call.1} parent=1 // pred_fallthru
      _
    // Predicated region
    $region50: #{tpu_custom_call.1} parent=1 // pred_check
      _
    $region51: #{tpu_custom_call.1} parent=1 // pred_check_branch
      %173 = sbr.rel (0) target = $region53
    $region52: #{tpu_custom_call.1} parent=1 // pred_region
      %175 = vsyncadd [#allocation21], 0
      %s177 = sshll.u32 %s12, 4
      %s178 = int_to_ptr.hbm [resolvable:$true] %s177
      %s179 = sshll.u32 [#allocation22], 4
      %s180 = int_to_ptr.vmem [resolvable:$true] %s179
      %182 = dma.hbm_to_vmem [thread:$0]  %s178, 16, %s180, [#allocation21]
    $region53: #{tpu_custom_call.1} parent=1 // pred_fallthru
      _
    // Predicated region
    $region54: #{tpu_custom_call.1} parent=1 // pred_check
      _
    $region55: #{tpu_custom_call.1} parent=1 // pred_check_branch
      %184 = sbr.rel (0) target = $region57
    $region56: #{tpu_custom_call.1} parent=1 // pred_region
      %186 = dma.done [#allocation3], 896
    $region57: #{tpu_custom_call.1} parent=1 // pred_fallthru
      _
    // Predicated region
    $region58: #{tpu_custom_call.1} parent=1 // pred_check
      _
    $region59: #{tpu_custom_call.1} parent=1 // pred_check_branch
      %188 = sbr.rel (0) target = $region61
    $region60: #{tpu_custom_call.1} parent=1 // pred_region
      %190 = dma.done [#allocation6], 50176
    $region61: #{tpu_custom_call.1} parent=1 // pred_fallthru
      _
    // Predicated region
    $region62: #{tpu_custom_call.1} parent=1 // pred_check
      _
    $region63: #{tpu_custom_call.1} parent=1 // pred_check_branch
      %192 = sbr.rel (0) target = $region65
    $region64: #{tpu_custom_call.1} parent=1 // pred_region
      %194 = dma.done [#allocation6], 128
    $region65: #{tpu_custom_call.1} parent=1 // pred_fallthru
      _
    // Predicated region
    $region66: #{tpu_custom_call.1} parent=1 // pred_check
      _
    $region67: #{tpu_custom_call.1} parent=1 // pred_check_branch
      %196 = sbr.rel (0) target = $region69
    $region68: #{tpu_custom_call.1} parent=1 // pred_region
      %198 = dma.done [#allocation9], 8192
    $region69: #{tpu_custom_call.1} parent=1 // pred_fallthru
      _
    // Predicated region
    $region70: #{tpu_custom_call.1} parent=1 // pred_check
      _
    $region71: #{tpu_custom_call.1} parent=1 // pred_check_branch
      %200 = sbr.rel (0) target = $region73
    $region72: #{tpu_custom_call.1} parent=1 // pred_region
      %202 = dma.done [#allocation9], 16
    $region73: #{tpu_custom_call.1} parent=1 // pred_fallthru
      _
    // Predicated region
    $region74: #{tpu_custom_call.1} parent=1 // pred_check
      _
    $region75: #{tpu_custom_call.1} parent=1 // pred_check_branch
      %204 = sbr.rel (0) target = $region77
    $region76: #{tpu_custom_call.1} parent=1 // pred_region
      %206 = dma.done [#allocation12], 1024
    $region77: #{tpu_custom_call.1} parent=1 // pred_fallthru
      _
    // Predicated region
    $region78: #{tpu_custom_call.1} parent=1 // pred_check
      _
    $region79: #{tpu_custom_call.1} parent=1 // pred_check_branch
      %208 = sbr.rel (0) target = $region81
    $region80: #{tpu_custom_call.1} parent=1 // pred_region
      %210 = dma.done [#allocation12], 16
    $region81: #{tpu_custom_call.1} parent=1 // pred_fallthru
      _
    // Predicated region
    $region82: #{tpu_custom_call.1} parent=1 // pred_check
      _
    $region83: #{tpu_custom_call.1} parent=1 // pred_check_branch
      %212 = sbr.rel (0) target = $region85
    $region84: #{tpu_custom_call.1} parent=1 // pred_region
      %214 = dma.done [#allocation15], 1024
    $region85: #{tpu_custom_call.1} parent=1 // pred_fallthru
      _
    // Predicated region
    $region86: #{tpu_custom_call.1} parent=1 // pred_check
      _
    $region87: #{tpu_custom_call.1} parent=1 // pred_check_branch
      %216 = sbr.rel (0) target = $region89
    $region88: #{tpu_custom_call.1} parent=1 // pred_region
      %218 = dma.done [#allocation15], 16
    $region89: #{tpu_custom_call.1} parent=1 // pred_fallthru
      _
    // Predicated region
    $region90: #{tpu_custom_call.1} parent=1 // pred_check
      _
    $region91: #{tpu_custom_call.1} parent=1 // pred_check_branch
      %220 = sbr.rel (0) target = $region93
    $region92: #{tpu_custom_call.1} parent=1 // pred_region
      %222 = dma.done [#allocation18], 1024
    $region93: #{tpu_custom_call.1} parent=1 // pred_fallthru
      _
    // Predicated region
    $region94: #{tpu_custom_call.1} parent=1 // pred_check
      _
    $region95: #{tpu_custom_call.1} parent=1 // pred_check_branch
      %224 = sbr.rel (0) target = $region97
    $region96: #{tpu_custom_call.1} parent=1 // pred_region
      %226 = dma.done [#allocation18], 16
    $region97: #{tpu_custom_call.1} parent=1 // pred_fallthru
      _
    // Predicated region
    $region98: #{tpu_custom_call.1} parent=1 // pred_check
      _
    $region99: #{tpu_custom_call.1} parent=1 // pred_check_branch
      %228 = sbr.rel (0) target = $region101
    $region100: #{tpu_custom_call.1} parent=1 // pred_region
      %230 = dma.done [#allocation21], 1024
    $region101: #{tpu_custom_call.1} parent=1 // pred_fallthru
      _
    // Predicated region
    $region102: #{tpu_custom_call.1} parent=1 // pred_check
      _
    $region103: #{tpu_custom_call.1} parent=1 // pred_check_branch
      %232 = sbr.rel (0) target = $region105
    $region104: #{tpu_custom_call.1} parent=1 // pred_region
      %234 = dma.done [#allocation21], 16
    $region105: #{tpu_custom_call.1} parent=1 // pred_fallthru
      _
    %v236 = vld [vmem:[#allocation2] sm:$0xff]
    %v237 = vld [vmem:[#allocation2 + $0x8] sm:$0xff]
    %v238 = vld [vmem:[#allocation2 + $0x10] sm:$0xff]
    %v239 = vld [vmem:[#allocation2 + $0x18] sm:$0xf]
    %v240 = vld [vmem:[#allocation2 + $0x1c] sm:$0xff]
    %v241 = vld [vmem:[#allocation2 + $0x24] sm:$0xff]
    %v242 = vld [vmem:[#allocation2 + $0x2c] sm:$0xff]
    %v243 = vld [vmem:[#allocation2 + $0x34] sm:$0xf]
    %v244 = vld [vmem:[#allocation5] sm:$0xff]
    %v245 = vld [vmem:[#allocation5 + $0x8] sm:$0xff]
    %v246 = vld [vmem:[#allocation5 + $0x10] sm:$0xff]
    %v247 = vld [vmem:[#allocation5 + $0x18] sm:$0xff]
    %v248 = vld [vmem:[#allocation5 + $0x20] sm:$0xff]
    %v249 = vld [vmem:[#allocation5 + $0x28] sm:$0xff]
    %v250 = vld [vmem:[#allocation5 + $0x30] sm:$0xff]
    %v251 = vld [vmem:[#allocation5 + $0x38] sm:$0xff]
    %v252 = vld [vmem:[#allocation5 + $0x40] sm:$0xff]
    %v253 = vld [vmem:[#allocation5 + $0x48] sm:$0xff]
    %v254 = vld [vmem:[#allocation5 + $0x50] sm:$0xff]
    %v255 = vld [vmem:[#allocation5 + $0x58] sm:$0xff]
    %v256 = vld [vmem:[#allocation5 + $0x60] sm:$0xff]
    %v257 = vld [vmem:[#allocation5 + $0x68] sm:$0xff]
    %v258 = vld [vmem:[#allocation5 + $0x70] sm:$0xff]
    %v259 = vld [vmem:[#allocation5 + $0x78] sm:$0xff]
    %v260 = vld [vmem:[#allocation5 + $0x80] sm:$0xff]
    %v261 = vld [vmem:[#allocation5 + $0x88] sm:$0xff]
    %v262 = vld [vmem:[#allocation5 + $0x90] sm:$0xff]
    %v263 = vld [vmem:[#allocation5 + $0x98] sm:$0xff]
    %v264 = vld [vmem:[#allocation5 + $0xa0] sm:$0xff]
    %v265 = vld [vmem:[#allocation5 + $0xa8] sm:$0xff]
    %v266 = vld [vmem:[#allocation5 + $0xb0] sm:$0xff]
    %v267 = vld [vmem:[#allocation5 + $0xb8] sm:$0xff]
    %v268 = vld [vmem:[#allocation5 + $0xc0] sm:$0xff]
    %v269 = vld [vmem:[#allocation5 + $0xc8] sm:$0xff]
    %v270 = vld [vmem:[#allocation5 + $0xd0] sm:$0xff]
    %v271 = vld [vmem:[#allocation5 + $0xd8] sm:$0xff]
    %v272 = vld [vmem:[#allocation5 + $0xe0] sm:$0xff]
    %v273 = vld [vmem:[#allocation5 + $0xe8] sm:$0xff]
    %v274 = vld [vmem:[#allocation5 + $0xf0] sm:$0xff]
    %v275 = vld [vmem:[#allocation5 + $0xf8] sm:$0xff]
    %v276 = vld [vmem:[#allocation5 + $0x100] sm:$0xff]
    %v277 = vld [vmem:[#allocation5 + $0x108] sm:$0xff]
    %v278 = vld [vmem:[#allocation5 + $0x110] sm:$0xff]
    %v279 = vld [vmem:[#allocation5 + $0x118] sm:$0xff]
    %v280 = vld [vmem:[#allocation5 + $0x120] sm:$0xff]
    %v281 = vld [vmem:[#allocation5 + $0x128] sm:$0xff]
    %v282 = vld [vmem:[#allocation5 + $0x130] sm:$0xff]
    %v283 = vld [vmem:[#allocation5 + $0x138] sm:$0xff]
    %v284 = vld [vmem:[#allocation5 + $0x140] sm:$0xff]
    %v285 = vld [vmem:[#allocation5 + $0x148] sm:$0xff]
    %v286 = vld [vmem:[#allocation5 + $0x150] sm:$0xff]
    %v287 = vld [vmem:[#allocation5 + $0x158] sm:$0xff]
    %v288 = vld [vmem:[#allocation5 + $0x160] sm:$0xff]
    %v289 = vld [vmem:[#allocation5 + $0x168] sm:$0xff]
    %v290 = vld [vmem:[#allocation5 + $0x170] sm:$0xff]
    %v291 = vld [vmem:[#allocation5 + $0x178] sm:$0xff]
    %v292 = vld [vmem:[#allocation5 + $0x180] sm:$0xff]
    %v293 = vld [vmem:[#allocation5 + $0x188] sm:$0xff]
    %v294 = vld [vmem:[#allocation5 + $0x190] sm:$0xff]
    %v295 = vld [vmem:[#allocation5 + $0x198] sm:$0xff]
    %v296 = vld [vmem:[#allocation5 + $0x1a0] sm:$0xff]
    %v297 = vld [vmem:[#allocation5 + $0x1a8] sm:$0xff]
    %v298 = vld [vmem:[#allocation5 + $0x1b0] sm:$0xff]
    %v299 = vld [vmem:[#allocation5 + $0x1b8] sm:$0xff]
    %v300 = vld [vmem:[#allocation5 + $0x1c0] sm:$0xff]
    %v301 = vld [vmem:[#allocation5 + $0x1c8] sm:$0xff]
    %v302 = vld [vmem:[#allocation5 + $0x1d0] sm:$0xff]
    %v303 = vld [vmem:[#allocation5 + $0x1d8] sm:$0xff]
    %v304 = vld [vmem:[#allocation5 + $0x1e0] sm:$0xff]
    %v305 = vld [vmem:[#allocation5 + $0x1e8] sm:$0xff]
    %v306 = vld [vmem:[#allocation5 + $0x1f0] sm:$0xff]
    %v307 = vld [vmem:[#allocation5 + $0x1f8] sm:$0xff]
    %v308 = vld [vmem:[#allocation5 + $0x200] sm:$0xff]
    %v309 = vld [vmem:[#allocation5 + $0x208] sm:$0xff]
    %v310 = vld [vmem:[#allocation5 + $0x210] sm:$0xff]
    %v311 = vld [vmem:[#allocation5 + $0x218] sm:$0xff]
    %v312 = vld [vmem:[#allocation5 + $0x220] sm:$0xff]
    %v313 = vld [vmem:[#allocation5 + $0x228] sm:$0xff]
    %v314 = vld [vmem:[#allocation5 + $0x230] sm:$0xff]
    %v315 = vld [vmem:[#allocation5 + $0x238] sm:$0xff]
    %v316 = vld [vmem:[#allocation5 + $0x240] sm:$0xff]
    %v317 = vld [vmem:[#allocation5 + $0x248] sm:$0xff]
    %v318 = vld [vmem:[#allocation5 + $0x250] sm:$0xff]
    %v319 = vld [vmem:[#allocation5 + $0x258] sm:$0xff]
    %v320 = vld [vmem:[#allocation5 + $0x260] sm:$0xff]
    %v321 = vld [vmem:[#allocation5 + $0x268] sm:$0xff]
    %v322 = vld [vmem:[#allocation5 + $0x270] sm:$0xff]
    %v323 = vld [vmem:[#allocation5 + $0x278] sm:$0xff]
    %v324 = vld [vmem:[#allocation5 + $0x280] sm:$0xff]
    %v325 = vld [vmem:[#allocation5 + $0x288] sm:$0xff]
    %v326 = vld [vmem:[#allocation5 + $0x290] sm:$0xff]
    %v327 = vld [vmem:[#allocation5 + $0x298] sm:$0xff]
    %v328 = vld [vmem:[#allocation5 + $0x2a0] sm:$0xff]
    %v329 = vld [vmem:[#allocation5 + $0x2a8] sm:$0xff]
    %v330 = vld [vmem:[#allocation5 + $0x2b0] sm:$0xff]
    %v331 = vld [vmem:[#allocation5 + $0x2b8] sm:$0xff]
    %v332 = vld [vmem:[#allocation5 + $0x2c0] sm:$0xff]
    %v333 = vld [vmem:[#allocation5 + $0x2c8] sm:$0xff]
    %v334 = vld [vmem:[#allocation5 + $0x2d0] sm:$0xff]
    %v335 = vld [vmem:[#allocation5 + $0x2d8] sm:$0xff]
    %v336 = vld [vmem:[#allocation5 + $0x2e0] sm:$0xff]
    %v337 = vld [vmem:[#allocation5 + $0x2e8] sm:$0xff]
    %v338 = vld [vmem:[#allocation5 + $0x2f0] sm:$0xff]
    %v339 = vld [vmem:[#allocation5 + $0x2f8] sm:$0xff]
    %v340 = vld [vmem:[#allocation5 + $0x300] sm:$0xff]
    %v341 = vld [vmem:[#allocation5 + $0x308] sm:$0xff]
    %v342 = vld [vmem:[#allocation5 + $0x310] sm:$0xff]
    %v343 = vld [vmem:[#allocation5 + $0x318] sm:$0xff]
    %v344 = vld [vmem:[#allocation5 + $0x320] sm:$0xff]
    %v345 = vld [vmem:[#allocation5 + $0x328] sm:$0xff]
    %v346 = vld [vmem:[#allocation5 + $0x330] sm:$0xff]
    %v347 = vld [vmem:[#allocation5 + $0x338] sm:$0xff]
    %v348 = vld [vmem:[#allocation5 + $0x340] sm:$0xff]
    %v349 = vld [vmem:[#allocation5 + $0x348] sm:$0xff]
    %v350 = vld [vmem:[#allocation5 + $0x350] sm:$0xff]
    %v351 = vld [vmem:[#allocation5 + $0x358] sm:$0xff]
    %v352 = vld [vmem:[#allocation5 + $0x360] sm:$0xff]
    %v353 = vld [vmem:[#allocation5 + $0x368] sm:$0xff]
    %v354 = vld [vmem:[#allocation5 + $0x370] sm:$0xff]
    %v355 = vld [vmem:[#allocation5 + $0x378] sm:$0xff]
    %v356 = vld [vmem:[#allocation5 + $0x380] sm:$0xff]
    %v357 = vld [vmem:[#allocation5 + $0x388] sm:$0xff]
    %v358 = vld [vmem:[#allocation5 + $0x390] sm:$0xff]
    %v359 = vld [vmem:[#allocation5 + $0x398] sm:$0xff]
    %v360 = vld [vmem:[#allocation5 + $0x3a0] sm:$0xff]
    %v361 = vld [vmem:[#allocation5 + $0x3a8] sm:$0xff]
    %v362 = vld [vmem:[#allocation5 + $0x3b0] sm:$0xff]
    %v363 = vld [vmem:[#allocation5 + $0x3b8] sm:$0xff]
    %v364 = vld [vmem:[#allocation5 + $0x3c0] sm:$0xff]
    %v365 = vld [vmem:[#allocation5 + $0x3c8] sm:$0xff]
    %v366 = vld [vmem:[#allocation5 + $0x3d0] sm:$0xff]
    %v367 = vld [vmem:[#allocation5 + $0x3d8] sm:$0xff]
    %v368 = vld [vmem:[#allocation5 + $0x3e0] sm:$0xff]
    %v369 = vld [vmem:[#allocation5 + $0x3e8] sm:$0xff]
    %v370 = vld [vmem:[#allocation5 + $0x3f0] sm:$0xff]
    %v371 = vld [vmem:[#allocation5 + $0x3f8] sm:$0xff]
    %v372 = vld [vmem:[#allocation5 + $0x400] sm:$0xff]
    %v373 = vld [vmem:[#allocation5 + $0x408] sm:$0xff]
    %v374 = vld [vmem:[#allocation5 + $0x410] sm:$0xff]
    %v375 = vld [vmem:[#allocation5 + $0x418] sm:$0xff]
    %v376 = vld [vmem:[#allocation5 + $0x420] sm:$0xff]
    %v377 = vld [vmem:[#allocation5 + $0x428] sm:$0xff]
    %v378 = vld [vmem:[#allocation5 + $0x430] sm:$0xff]
    %v379 = vld [vmem:[#allocation5 + $0x438] sm:$0xff]
    %v380 = vld [vmem:[#allocation5 + $0x440] sm:$0xff]
    %v381 = vld [vmem:[#allocation5 + $0x448] sm:$0xff]
    %v382 = vld [vmem:[#allocation5 + $0x450] sm:$0xff]
    %v383 = vld [vmem:[#allocation5 + $0x458] sm:$0xff]
    %v384 = vld [vmem:[#allocation5 + $0x460] sm:$0xff]
    %v385 = vld [vmem:[#allocation5 + $0x468] sm:$0xff]
    %v386 = vld [vmem:[#allocation5 + $0x470] sm:$0xff]
    %v387 = vld [vmem:[#allocation5 + $0x478] sm:$0xff]
    %v388 = vld [vmem:[#allocation5 + $0x480] sm:$0xff]
    %v389 = vld [vmem:[#allocation5 + $0x488] sm:$0xff]
    %v390 = vld [vmem:[#allocation5 + $0x490] sm:$0xff]
    %v391 = vld [vmem:[#allocation5 + $0x498] sm:$0xff]
    %v392 = vld [vmem:[#allocation5 + $0x4a0] sm:$0xff]
    %v393 = vld [vmem:[#allocation5 + $0x4a8] sm:$0xff]
    %v394 = vld [vmem:[#allocation5 + $0x4b0] sm:$0xff]
    %v395 = vld [vmem:[#allocation5 + $0x4b8] sm:$0xff]
    %v396 = vld [vmem:[#allocation5 + $0x4c0] sm:$0xff]
    %v397 = vld [vmem:[#allocation5 + $0x4c8] sm:$0xff]
    %v398 = vld [vmem:[#allocation5 + $0x4d0] sm:$0xff]
    %v399 = vld [vmem:[#allocation5 + $0x4d8] sm:$0xff]
    %v400 = vld [vmem:[#allocation5 + $0x4e0] sm:$0xff]
    %v401 = vld [vmem:[#allocation5 + $0x4e8] sm:$0xff]
    %v402 = vld [vmem:[#allocation5 + $0x4f0] sm:$0xff]
    %v403 = vld [vmem:[#allocation5 + $0x4f8] sm:$0xff]
    %v404 = vld [vmem:[#allocation5 + $0x500] sm:$0xff]
    %v405 = vld [vmem:[#allocation5 + $0x508] sm:$0xff]
    %v406 = vld [vmem:[#allocation5 + $0x510] sm:$0xff]
    %v407 = vld [vmem:[#allocation5 + $0x518] sm:$0xff]
    %v408 = vld [vmem:[#allocation5 + $0x520] sm:$0xff]
    %v409 = vld [vmem:[#allocation5 + $0x528] sm:$0xff]
    %v410 = vld [vmem:[#allocation5 + $0x530] sm:$0xff]
    %v411 = vld [vmem:[#allocation5 + $0x538] sm:$0xff]
    %v412 = vld [vmem:[#allocation5 + $0x540] sm:$0xff]
    %v413 = vld [vmem:[#allocation5 + $0x548] sm:$0xff]
    %v414 = vld [vmem:[#allocation5 + $0x550] sm:$0xff]
    %v415 = vld [vmem:[#allocation5 + $0x558] sm:$0xff]
    %v416 = vld [vmem:[#allocation5 + $0x560] sm:$0xff]
    %v417 = vld [vmem:[#allocation5 + $0x568] sm:$0xff]
    %v418 = vld [vmem:[#allocation5 + $0x570] sm:$0xff]
    %v419 = vld [vmem:[#allocation5 + $0x578] sm:$0xff]
    %v420 = vld [vmem:[#allocation5 + $0x580] sm:$0xff]
    %v421 = vld [vmem:[#allocation5 + $0x588] sm:$0xff]
    %v422 = vld [vmem:[#allocation5 + $0x590] sm:$0xff]
    %v423 = vld [vmem:[#allocation5 + $0x598] sm:$0xff]
    %v424 = vld [vmem:[#allocation5 + $0x5a0] sm:$0xff]
    %v425 = vld [vmem:[#allocation5 + $0x5a8] sm:$0xff]
    %v426 = vld [vmem:[#allocation5 + $0x5b0] sm:$0xff]
    %v427 = vld [vmem:[#allocation5 + $0x5b8] sm:$0xff]
    %v428 = vld [vmem:[#allocation5 + $0x5c0] sm:$0xff]
    %v429 = vld [vmem:[#allocation5 + $0x5c8] sm:$0xff]
    %v430 = vld [vmem:[#allocation5 + $0x5d0] sm:$0xff]
    %v431 = vld [vmem:[#allocation5 + $0x5d8] sm:$0xff]
    %v432 = vld [vmem:[#allocation5 + $0x5e0] sm:$0xff]
    %v433 = vld [vmem:[#allocation5 + $0x5e8] sm:$0xff]
    %v434 = vld [vmem:[#allocation5 + $0x5f0] sm:$0xff]
    %v435 = vld [vmem:[#allocation5 + $0x5f8] sm:$0xff]
    %v436 = vld [vmem:[#allocation5 + $0x600] sm:$0xff]
    %v437 = vld [vmem:[#allocation5 + $0x608] sm:$0xff]
    %v438 = vld [vmem:[#allocation5 + $0x610] sm:$0xff]
    %v439 = vld [vmem:[#allocation5 + $0x618] sm:$0xff]
    %v440 = vld [vmem:[#allocation5 + $0x620] sm:$0xff]
    %v441 = vld [vmem:[#allocation5 + $0x628] sm:$0xff]
    %v442 = vld [vmem:[#allocation5 + $0x630] sm:$0xff]
    %v443 = vld [vmem:[#allocation5 + $0x638] sm:$0xff]
    %v444 = vld [vmem:[#allocation5 + $0x640] sm:$0xff]
    %v445 = vld [vmem:[#allocation5 + $0x648] sm:$0xff]
    %v446 = vld [vmem:[#allocation5 + $0x650] sm:$0xff]
    %v447 = vld [vmem:[#allocation5 + $0x658] sm:$0xff]
    %v448 = vld [vmem:[#allocation5 + $0x660] sm:$0xff]
    %v449 = vld [vmem:[#allocation5 + $0x668] sm:$0xff]
    %v450 = vld [vmem:[#allocation5 + $0x670] sm:$0xff]
    %v451 = vld [vmem:[#allocation5 + $0x678] sm:$0xff]
    %v452 = vld [vmem:[#allocation5 + $0x680] sm:$0xff]
    %v453 = vld [vmem:[#allocation5 + $0x688] sm:$0xff]
    %v454 = vld [vmem:[#allocation5 + $0x690] sm:$0xff]
    %v455 = vld [vmem:[#allocation5 + $0x698] sm:$0xff]
    %v456 = vld [vmem:[#allocation5 + $0x6a0] sm:$0xff]
    %v457 = vld [vmem:[#allocation5 + $0x6a8] sm:$0xff]
    %v458 = vld [vmem:[#allocation5 + $0x6b0] sm:$0xff]
    %v459 = vld [vmem:[#allocation5 + $0x6b8] sm:$0xff]
    %v460 = vld [vmem:[#allocation5 + $0x6c0] sm:$0xff]
    %v461 = vld [vmem:[#allocation5 + $0x6c8] sm:$0xff]
    %v462 = vld [vmem:[#allocation5 + $0x6d0] sm:$0xff]
    %v463 = vld [vmem:[#allocation5 + $0x6d8] sm:$0xff]
    %v464 = vld [vmem:[#allocation5 + $0x6e0] sm:$0xff]
    %v465 = vld [vmem:[#allocation5 + $0x6e8] sm:$0xff]
    %v466 = vld [vmem:[#allocation5 + $0x6f0] sm:$0xff]
    %v467 = vld [vmem:[#allocation5 + $0x6f8] sm:$0xff]
    %v468 = vld [vmem:[#allocation5 + $0x700] sm:$0xff]
    %v469 = vld [vmem:[#allocation5 + $0x708] sm:$0xff]
    %v470 = vld [vmem:[#allocation5 + $0x710] sm:$0xff]
    %v471 = vld [vmem:[#allocation5 + $0x718] sm:$0xff]
    %v472 = vld [vmem:[#allocation5 + $0x720] sm:$0xff]
    %v473 = vld [vmem:[#allocation5 + $0x728] sm:$0xff]
    %v474 = vld [vmem:[#allocation5 + $0x730] sm:$0xff]
    %v475 = vld [vmem:[#allocation5 + $0x738] sm:$0xff]
    %v476 = vld [vmem:[#allocation5 + $0x740] sm:$0xff]
    %v477 = vld [vmem:[#allocation5 + $0x748] sm:$0xff]
    %v478 = vld [vmem:[#allocation5 + $0x750] sm:$0xff]
    %v479 = vld [vmem:[#allocation5 + $0x758] sm:$0xff]
    %v480 = vld [vmem:[#allocation5 + $0x760] sm:$0xff]
    %v481 = vld [vmem:[#allocation5 + $0x768] sm:$0xff]
    %v482 = vld [vmem:[#allocation5 + $0x770] sm:$0xff]
    %v483 = vld [vmem:[#allocation5 + $0x778] sm:$0xff]
    %v484 = vld [vmem:[#allocation5 + $0x780] sm:$0xff]
    %v485 = vld [vmem:[#allocation5 + $0x788] sm:$0xff]
    %v486 = vld [vmem:[#allocation5 + $0x790] sm:$0xff]
    %v487 = vld [vmem:[#allocation5 + $0x798] sm:$0xff]
    %v488 = vld [vmem:[#allocation5 + $0x7a0] sm:$0xff]
    %v489 = vld [vmem:[#allocation5 + $0x7a8] sm:$0xff]
    %v490 = vld [vmem:[#allocation5 + $0x7b0] sm:$0xff]
    %v491 = vld [vmem:[#allocation5 + $0x7b8] sm:$0xff]
    %v492 = vld [vmem:[#allocation5 + $0x7c0] sm:$0xff]
    %v493 = vld [vmem:[#allocation5 + $0x7c8] sm:$0xff]
    %v494 = vld [vmem:[#allocation5 + $0x7d0] sm:$0xff]
    %v495 = vld [vmem:[#allocation5 + $0x7d8] sm:$0xff]
    %v496 = vld [vmem:[#allocation5 + $0x7e0] sm:$0xff]
    %v497 = vld [vmem:[#allocation5 + $0x7e8] sm:$0xff]
    %v498 = vld [vmem:[#allocation5 + $0x7f0] sm:$0xff]
    %v499 = vld [vmem:[#allocation5 + $0x7f8] sm:$0xff]
    %v500 = vld [vmem:[#allocation5 + $0x800] sm:$0xff]
    %v501 = vld [vmem:[#allocation5 + $0x808] sm:$0xff]
    %v502 = vld [vmem:[#allocation5 + $0x810] sm:$0xff]
    %v503 = vld [vmem:[#allocation5 + $0x818] sm:$0xff]
    %v504 = vld [vmem:[#allocation5 + $0x820] sm:$0xff]
    %v505 = vld [vmem:[#allocation5 + $0x828] sm:$0xff]
    %v506 = vld [vmem:[#allocation5 + $0x830] sm:$0xff]
    %v507 = vld [vmem:[#allocation5 + $0x838] sm:$0xff]
    %v508 = vld [vmem:[#allocation5 + $0x840] sm:$0xff]
    %v509 = vld [vmem:[#allocation5 + $0x848] sm:$0xff]
    %v510 = vld [vmem:[#allocation5 + $0x850] sm:$0xff]
    %v511 = vld [vmem:[#allocation5 + $0x858] sm:$0xff]
    %v512 = vld [vmem:[#allocation5 + $0x860] sm:$0xff]
    %v513 = vld [vmem:[#allocation5 + $0x868] sm:$0xff]
    %v514 = vld [vmem:[#allocation5 + $0x870] sm:$0xff]
    %v515 = vld [vmem:[#allocation5 + $0x878] sm:$0xff]
    %v516 = vld [vmem:[#allocation5 + $0x880] sm:$0xff]
    %v517 = vld [vmem:[#allocation5 + $0x888] sm:$0xff]
    %v518 = vld [vmem:[#allocation5 + $0x890] sm:$0xff]
    %v519 = vld [vmem:[#allocation5 + $0x898] sm:$0xff]
    %v520 = vld [vmem:[#allocation5 + $0x8a0] sm:$0xff]
    %v521 = vld [vmem:[#allocation5 + $0x8a8] sm:$0xff]
    %v522 = vld [vmem:[#allocation5 + $0x8b0] sm:$0xff]
    %v523 = vld [vmem:[#allocation5 + $0x8b8] sm:$0xff]
    %v524 = vld [vmem:[#allocation5 + $0x8c0] sm:$0xff]
    %v525 = vld [vmem:[#allocation5 + $0x8c8] sm:$0xff]
    %v526 = vld [vmem:[#allocation5 + $0x8d0] sm:$0xff]
    %v527 = vld [vmem:[#allocation5 + $0x8d8] sm:$0xff]
    %v528 = vld [vmem:[#allocation5 + $0x8e0] sm:$0xff]
    %v529 = vld [vmem:[#allocation5 + $0x8e8] sm:$0xff]
    %v530 = vld [vmem:[#allocation5 + $0x8f0] sm:$0xff]
    %v531 = vld [vmem:[#allocation5 + $0x8f8] sm:$0xff]
    %v532 = vld [vmem:[#allocation5 + $0x900] sm:$0xff]
    %v533 = vld [vmem:[#allocation5 + $0x908] sm:$0xff]
    %v534 = vld [vmem:[#allocation5 + $0x910] sm:$0xff]
    %v535 = vld [vmem:[#allocation5 + $0x918] sm:$0xff]
    %v536 = vld [vmem:[#allocation5 + $0x920] sm:$0xff]
    %v537 = vld [vmem:[#allocation5 + $0x928] sm:$0xff]
    %v538 = vld [vmem:[#allocation5 + $0x930] sm:$0xff]
    %v539 = vld [vmem:[#allocation5 + $0x938] sm:$0xff]
    %v540 = vld [vmem:[#allocation5 + $0x940] sm:$0xff]
    %v541 = vld [vmem:[#allocation5 + $0x948] sm:$0xff]
    %v542 = vld [vmem:[#allocation5 + $0x950] sm:$0xff]
    %v543 = vld [vmem:[#allocation5 + $0x958] sm:$0xff]
    %v544 = vld [vmem:[#allocation5 + $0x960] sm:$0xff]
    %v545 = vld [vmem:[#allocation5 + $0x968] sm:$0xff]
    %v546 = vld [vmem:[#allocation5 + $0x970] sm:$0xff]
    %v547 = vld [vmem:[#allocation5 + $0x978] sm:$0xff]
    %v548 = vld [vmem:[#allocation5 + $0x980] sm:$0xff]
    %v549 = vld [vmem:[#allocation5 + $0x988] sm:$0xff]
    %v550 = vld [vmem:[#allocation5 + $0x990] sm:$0xff]
    %v551 = vld [vmem:[#allocation5 + $0x998] sm:$0xff]
    %v552 = vld [vmem:[#allocation5 + $0x9a0] sm:$0xff]
    %v553 = vld [vmem:[#allocation5 + $0x9a8] sm:$0xff]
    %v554 = vld [vmem:[#allocation5 + $0x9b0] sm:$0xff]
    %v555 = vld [vmem:[#allocation5 + $0x9b8] sm:$0xff]
    %v556 = vld [vmem:[#allocation5 + $0x9c0] sm:$0xff]
    %v557 = vld [vmem:[#allocation5 + $0x9c8] sm:$0xff]
    %v558 = vld [vmem:[#allocation5 + $0x9d0] sm:$0xff]
    %v559 = vld [vmem:[#allocation5 + $0x9d8] sm:$0xff]
    %v560 = vld [vmem:[#allocation5 + $0x9e0] sm:$0xff]
    %v561 = vld [vmem:[#allocation5 + $0x9e8] sm:$0xff]
    %v562 = vld [vmem:[#allocation5 + $0x9f0] sm:$0xff]
    %v563 = vld [vmem:[#allocation5 + $0x9f8] sm:$0xff]
    %v564 = vld [vmem:[#allocation5 + $0xa00] sm:$0xff]
    %v565 = vld [vmem:[#allocation5 + $0xa08] sm:$0xff]
    %v566 = vld [vmem:[#allocation5 + $0xa10] sm:$0xff]
    %v567 = vld [vmem:[#allocation5 + $0xa18] sm:$0xff]
    %v568 = vld [vmem:[#allocation5 + $0xa20] sm:$0xff]
    %v569 = vld [vmem:[#allocation5 + $0xa28] sm:$0xff]
    %v570 = vld [vmem:[#allocation5 + $0xa30] sm:$0xff]
    %v571 = vld [vmem:[#allocation5 + $0xa38] sm:$0xff]
    %v572 = vld [vmem:[#allocation5 + $0xa40] sm:$0xff]
    %v573 = vld [vmem:[#allocation5 + $0xa48] sm:$0xff]
    %v574 = vld [vmem:[#allocation5 + $0xa50] sm:$0xff]
    %v575 = vld [vmem:[#allocation5 + $0xa58] sm:$0xff]
    %v576 = vld [vmem:[#allocation5 + $0xa60] sm:$0xff]
    %v577 = vld [vmem:[#allocation5 + $0xa68] sm:$0xff]
    %v578 = vld [vmem:[#allocation5 + $0xa70] sm:$0xff]
    %v579 = vld [vmem:[#allocation5 + $0xa78] sm:$0xff]
    %v580 = vld [vmem:[#allocation5 + $0xa80] sm:$0xff]
    %v581 = vld [vmem:[#allocation5 + $0xa88] sm:$0xff]
    %v582 = vld [vmem:[#allocation5 + $0xa90] sm:$0xff]
    %v583 = vld [vmem:[#allocation5 + $0xa98] sm:$0xff]
    %v584 = vld [vmem:[#allocation5 + $0xaa0] sm:$0xff]
    %v585 = vld [vmem:[#allocation5 + $0xaa8] sm:$0xff]
    %v586 = vld [vmem:[#allocation5 + $0xab0] sm:$0xff]
    %v587 = vld [vmem:[#allocation5 + $0xab8] sm:$0xff]
    %v588 = vld [vmem:[#allocation5 + $0xac0] sm:$0xff]
    %v589 = vld [vmem:[#allocation5 + $0xac8] sm:$0xff]
    %v590 = vld [vmem:[#allocation5 + $0xad0] sm:$0xff]
    %v591 = vld [vmem:[#allocation5 + $0xad8] sm:$0xff]
    %v592 = vld [vmem:[#allocation5 + $0xae0] sm:$0xff]
    %v593 = vld [vmem:[#allocation5 + $0xae8] sm:$0xff]
    %v594 = vld [vmem:[#allocation5 + $0xaf0] sm:$0xff]
    %v595 = vld [vmem:[#allocation5 + $0xaf8] sm:$0xff]
    %v596 = vld [vmem:[#allocation5 + $0xb00] sm:$0xff]
    %v597 = vld [vmem:[#allocation5 + $0xb08] sm:$0xff]
    %v598 = vld [vmem:[#allocation5 + $0xb10] sm:$0xff]
    %v599 = vld [vmem:[#allocation5 + $0xb18] sm:$0xff]
    %v600 = vld [vmem:[#allocation5 + $0xb20] sm:$0xff]
    %v601 = vld [vmem:[#allocation5 + $0xb28] sm:$0xff]
    %v602 = vld [vmem:[#allocation5 + $0xb30] sm:$0xff]
    %v603 = vld [vmem:[#allocation5 + $0xb38] sm:$0xff]
    %v604 = vld [vmem:[#allocation5 + $0xb40] sm:$0xff]
    %v605 = vld [vmem:[#allocation5 + $0xb48] sm:$0xff]
    %v606 = vld [vmem:[#allocation5 + $0xb50] sm:$0xff]
    %v607 = vld [vmem:[#allocation5 + $0xb58] sm:$0xff]
    %v608 = vld [vmem:[#allocation5 + $0xb60] sm:$0xff]
    %v609 = vld [vmem:[#allocation5 + $0xb68] sm:$0xff]
    %v610 = vld [vmem:[#allocation5 + $0xb70] sm:$0xff]
    %v611 = vld [vmem:[#allocation5 + $0xb78] sm:$0xff]
    %v612 = vld [vmem:[#allocation5 + $0xb80] sm:$0xff]
    %v613 = vld [vmem:[#allocation5 + $0xb88] sm:$0xff]
    %v614 = vld [vmem:[#allocation5 + $0xb90] sm:$0xff]
    %v615 = vld [vmem:[#allocation5 + $0xb98] sm:$0xff]
    %v616 = vld [vmem:[#allocation5 + $0xba0] sm:$0xff]
    %v617 = vld [vmem:[#allocation5 + $0xba8] sm:$0xff]
    %v618 = vld [vmem:[#allocation5 + $0xbb0] sm:$0xff]
    %v619 = vld [vmem:[#allocation5 + $0xbb8] sm:$0xff]
    %v620 = vld [vmem:[#allocation5 + $0xbc0] sm:$0xff]
    %v621 = vld [vmem:[#allocation5 + $0xbc8] sm:$0xff]
    %v622 = vld [vmem:[#allocation5 + $0xbd0] sm:$0xff]
    %v623 = vld [vmem:[#allocation5 + $0xbd8] sm:$0xff]
    %v624 = vld [vmem:[#allocation5 + $0xbe0] sm:$0xff]
    %v625 = vld [vmem:[#allocation5 + $0xbe8] sm:$0xff]
    %v626 = vld [vmem:[#allocation5 + $0xbf0] sm:$0xff]
    %v627 = vld [vmem:[#allocation5 + $0xbf8] sm:$0xff]
    %v628 = vld [vmem:[#allocation5 + $0xc00] sm:$0xff]
    %v629 = vld [vmem:[#allocation5 + $0xc08] sm:$0xff]
    %v630 = vld [vmem:[#allocation5 + $0xc10] sm:$0xff]
    %v631 = vld [vmem:[#allocation5 + $0xc18] sm:$0xff]
    %v632 = vld [vmem:[#allocation5 + $0xc20] sm:$0xff]
    %v633 = vld [vmem:[#allocation5 + $0xc28] sm:$0xff]
    %v634 = vld [vmem:[#allocation5 + $0xc30] sm:$0xff]
    %v635 = vld [vmem:[#allocation5 + $0xc38] sm:$0xff]
    %v636 = vld [vmem:[#allocation7] sm:$0xff]
    %v638 = vperm.slane %v636, 0
    %v639 = vperm.slane %v636, 1
    %v640 = vperm.slane %v636, 2
    %v641 = vperm.slane %v636, 3
    %v642 = vperm.slane %v636, 4
    %v643 = vperm.slane %v636, 5
    %v644 = vperm.slane %v636, 6
    %v645 = vperm.slane %v636, 7
    %v662 = vunpack.c.l.b16 %v236
    %v663 = vunpack.c.h.b16 %v236
    %v664 = vunpack.c.l.b16 %v237
    %v665 = vunpack.c.h.b16 %v237
    %v666 = vunpack.c.l.b16 %v238
    %v667 = vunpack.c.h.b16 %v238
    %v668 = vunpack.c.l.b16 %v239
    %v669 = vunpack.c.l.b16 %v240
    %v670 = vunpack.c.h.b16 %v240
    %v671 = vunpack.c.l.b16 %v241
    %v672 = vunpack.c.h.b16 %v241
    %v673 = vunpack.c.l.b16 %v242
    %v674 = vunpack.c.h.b16 %v242
    %v675 = vunpack.c.l.b16 %v243
    %v676 = vpack.c.b16 %v669, %v662
    %v677 = vpack.c.b16 %v670, %v663
    %v678 = vpack.c.b16 %v671, %v664
    %v679 = vpack.c.b16 %v672, %v665
    %v680 = vpack.c.b16 %v673, %v666
    %v681 = vpack.c.b16 %v674, %v667
    %v682 = vpack.c.b16 %v675, %v668
    %v1081 = vunpack.c.l.b16 %v244
    %v1082 = vunpack.c.h.b16 %v244
    %v1083 = vunpack.c.l.b16 %v245
    %v1084 = vunpack.c.h.b16 %v245
    %v1085 = vunpack.c.l.b16 %v246
    %v1086 = vunpack.c.h.b16 %v246
    %v1087 = vunpack.c.l.b16 %v247
    %v1088 = vunpack.c.h.b16 %v247
    %v1089 = vunpack.c.l.b16 %v248
    %v1090 = vunpack.c.h.b16 %v248
    %v1091 = vunpack.c.l.b16 %v249
    %v1092 = vunpack.c.h.b16 %v249
    %v1093 = vunpack.c.l.b16 %v250
    %v1094 = vunpack.c.h.b16 %v250
    %v1095 = vunpack.c.l.b16 %v251
    %v1096 = vunpack.c.h.b16 %v251
    %v1097 = vunpack.c.l.b16 %v252
    %v1098 = vunpack.c.h.b16 %v252
    %v1099 = vunpack.c.l.b16 %v253
    %v1100 = vunpack.c.h.b16 %v253
    %v1101 = vunpack.c.l.b16 %v254
    %v1102 = vunpack.c.h.b16 %v254
    %v1103 = vunpack.c.l.b16 %v255
    %v1104 = vunpack.c.h.b16 %v255
    %v1105 = vunpack.c.l.b16 %v256
    %v1106 = vunpack.c.h.b16 %v256
    %v1107 = vunpack.c.l.b16 %v257
    %v1108 = vunpack.c.h.b16 %v257
    %v1109 = vunpack.c.l.b16 %v258
    %v1110 = vunpack.c.h.b16 %v258
    %v1111 = vunpack.c.l.b16 %v259
    %v1112 = vunpack.c.h.b16 %v259
    %v1113 = vunpack.c.l.b16 %v260
    %v1114 = vunpack.c.h.b16 %v260
    %v1115 = vunpack.c.l.b16 %v261
    %v1116 = vunpack.c.h.b16 %v261
    %v1117 = vunpack.c.l.b16 %v262
    %v1118 = vunpack.c.h.b16 %v262
    %v1119 = vunpack.c.l.b16 %v263
    %v1120 = vunpack.c.h.b16 %v263
    %v1121 = vunpack.c.l.b16 %v264
    %v1122 = vunpack.c.h.b16 %v264
    %v1123 = vunpack.c.l.b16 %v265
    %v1124 = vunpack.c.h.b16 %v265
    %v1125 = vunpack.c.l.b16 %v266
    %v1126 = vunpack.c.h.b16 %v266
    %v1127 = vunpack.c.l.b16 %v267
    %v1128 = vunpack.c.h.b16 %v267
    %v1129 = vunpack.c.l.b16 %v268
    %v1130 = vunpack.c.h.b16 %v268
    %v1131 = vunpack.c.l.b16 %v269
    %v1132 = vunpack.c.h.b16 %v269
    %v1133 = vunpack.c.l.b16 %v270
    %v1134 = vunpack.c.h.b16 %v270
    %v1135 = vunpack.c.l.b16 %v271
    %v1136 = vunpack.c.h.b16 %v271
    %v1137 = vunpack.c.l.b16 %v272
    %v1138 = vunpack.c.h.b16 %v272
    %v1139 = vunpack.c.l.b16 %v273
    %v1140 = vunpack.c.h.b16 %v273
    %v1141 = vunpack.c.l.b16 %v274
    %v1142 = vunpack.c.h.b16 %v274
    %v1143 = vunpack.c.l.b16 %v275
    %v1144 = vunpack.c.h.b16 %v275
    %v1145 = vunpack.c.l.b16 %v276
    %v1146 = vunpack.c.h.b16 %v276
    %v1147 = vunpack.c.l.b16 %v277
    %v1148 = vunpack.c.h.b16 %v277
    %v1149 = vunpack.c.l.b16 %v278
    %v1150 = vunpack.c.h.b16 %v278
    %v1151 = vunpack.c.l.b16 %v279
    %v1152 = vunpack.c.h.b16 %v279
    %v1153 = vunpack.c.l.b16 %v280
    %v1154 = vunpack.c.h.b16 %v280
    %v1155 = vunpack.c.l.b16 %v281
    %v1156 = vunpack.c.h.b16 %v281
    %v1157 = vunpack.c.l.b16 %v282
    %v1158 = vunpack.c.h.b16 %v282
    %v1159 = vunpack.c.l.b16 %v283
    %v1160 = vunpack.c.h.b16 %v283
    %v1161 = vunpack.c.l.b16 %v284
    %v1162 = vunpack.c.h.b16 %v284
    %v1163 = vunpack.c.l.b16 %v285
    %v1164 = vunpack.c.h.b16 %v285
    %v1165 = vunpack.c.l.b16 %v286
    %v1166 = vunpack.c.h.b16 %v286
    %v1167 = vunpack.c.l.b16 %v287
    %v1168 = vunpack.c.h.b16 %v287
    %v1169 = vunpack.c.l.b16 %v288
    %v1170 = vunpack.c.h.b16 %v288
    %v1171 = vunpack.c.l.b16 %v289
    %v1172 = vunpack.c.h.b16 %v289
    %v1173 = vunpack.c.l.b16 %v290
    %v1174 = vunpack.c.h.b16 %v290
    %v1175 = vunpack.c.l.b16 %v291
    %v1176 = vunpack.c.h.b16 %v291
    %v1177 = vunpack.c.l.b16 %v292
    %v1178 = vunpack.c.h.b16 %v292
    %v1179 = vunpack.c.l.b16 %v293
    %v1180 = vunpack.c.h.b16 %v293
    %v1181 = vunpack.c.l.b16 %v294
    %v1182 = vunpack.c.h.b16 %v294
    %v1183 = vunpack.c.l.b16 %v295
    %v1184 = vunpack.c.h.b16 %v295
    %v1185 = vunpack.c.l.b16 %v296
    %v1186 = vunpack.c.h.b16 %v296
    %v1187 = vunpack.c.l.b16 %v297
    %v1188 = vunpack.c.h.b16 %v297
    %v1189 = vunpack.c.l.b16 %v298
    %v1190 = vunpack.c.h.b16 %v298
    %v1191 = vunpack.c.l.b16 %v299
    %v1192 = vunpack.c.h.b16 %v299
    %v1193 = vunpack.c.l.b16 %v300
    %v1194 = vunpack.c.h.b16 %v300
    %v1195 = vunpack.c.l.b16 %v301
    %v1196 = vunpack.c.h.b16 %v301
    %v1197 = vunpack.c.l.b16 %v302
    %v1198 = vunpack.c.h.b16 %v302
    %v1199 = vunpack.c.l.b16 %v303
    %v1200 = vunpack.c.h.b16 %v303
    %v1201 = vunpack.c.l.b16 %v304
    %v1202 = vunpack.c.h.b16 %v304
    %v1203 = vunpack.c.l.b16 %v305
    %v1204 = vunpack.c.h.b16 %v305
    %v1205 = vunpack.c.l.b16 %v306
    %v1206 = vunpack.c.h.b16 %v306
    %v1207 = vunpack.c.l.b16 %v307
    %v1208 = vunpack.c.h.b16 %v307
    %v1209 = vunpack.c.l.b16 %v308
    %v1210 = vunpack.c.h.b16 %v308
    %v1211 = vunpack.c.l.b16 %v309
    %v1212 = vunpack.c.h.b16 %v309
    %v1213 = vunpack.c.l.b16 %v310
    %v1214 = vunpack.c.h.b16 %v310
    %v1215 = vunpack.c.l.b16 %v311
    %v1216 = vunpack.c.h.b16 %v311
    %v1217 = vunpack.c.l.b16 %v312
    %v1218 = vunpack.c.h.b16 %v312
    %v1219 = vunpack.c.l.b16 %v313
    %v1220 = vunpack.c.h.b16 %v313
    %v1221 = vunpack.c.l.b16 %v314
    %v1222 = vunpack.c.h.b16 %v314
    %v1223 = vunpack.c.l.b16 %v315
    %v1224 = vunpack.c.h.b16 %v315
    %v1225 = vunpack.c.l.b16 %v316
    %v1226 = vunpack.c.h.b16 %v316
    %v1227 = vunpack.c.l.b16 %v317
    %v1228 = vunpack.c.h.b16 %v317
    %v1229 = vunpack.c.l.b16 %v318
    %v1230 = vunpack.c.h.b16 %v318
    %v1231 = vunpack.c.l.b16 %v319
    %v1232 = vunpack.c.h.b16 %v319
    %v1233 = vunpack.c.l.b16 %v320
    %v1234 = vunpack.c.h.b16 %v320
    %v1235 = vunpack.c.l.b16 %v321
    %v1236 = vunpack.c.h.b16 %v321
    %v1237 = vunpack.c.l.b16 %v322
    %v1238 = vunpack.c.h.b16 %v322
    %v1239 = vunpack.c.l.b16 %v323
    %v1240 = vunpack.c.h.b16 %v323
    %v1241 = vunpack.c.l.b16 %v324
    %v1242 = vunpack.c.h.b16 %v324
    %v1243 = vunpack.c.l.b16 %v325
    %v1244 = vunpack.c.h.b16 %v325
    %v1245 = vunpack.c.l.b16 %v326
    %v1246 = vunpack.c.h.b16 %v326
    %v1247 = vunpack.c.l.b16 %v327
    %v1248 = vunpack.c.h.b16 %v327
    %v1249 = vunpack.c.l.b16 %v328
    %v1250 = vunpack.c.h.b16 %v328
    %v1251 = vunpack.c.l.b16 %v329
    %v1252 = vunpack.c.h.b16 %v329
    %v1253 = vunpack.c.l.b16 %v330
    %v1254 = vunpack.c.h.b16 %v330
    %v1255 = vunpack.c.l.b16 %v331
    %v1256 = vunpack.c.h.b16 %v331
    %v1257 = vunpack.c.l.b16 %v332
    %v1258 = vunpack.c.h.b16 %v332
    %v1259 = vunpack.c.l.b16 %v333
    %v1260 = vunpack.c.h.b16 %v333
    %v1261 = vunpack.c.l.b16 %v334
    %v1262 = vunpack.c.h.b16 %v334
    %v1263 = vunpack.c.l.b16 %v335
    %v1264 = vunpack.c.h.b16 %v335
    %v1265 = vunpack.c.l.b16 %v336
    %v1266 = vunpack.c.h.b16 %v336
    %v1267 = vunpack.c.l.b16 %v337
    %v1268 = vunpack.c.h.b16 %v337
    %v1269 = vunpack.c.l.b16 %v338
    %v1270 = vunpack.c.h.b16 %v338
    %v1271 = vunpack.c.l.b16 %v339
    %v1272 = vunpack.c.h.b16 %v339
    %v1273 = vunpack.c.l.b16 %v340
    %v1274 = vunpack.c.h.b16 %v340
    %v1275 = vunpack.c.l.b16 %v341
    %v1276 = vunpack.c.h.b16 %v341
    %v1277 = vunpack.c.l.b16 %v342
    %v1278 = vunpack.c.h.b16 %v342
    %v1279 = vunpack.c.l.b16 %v343
    %v1280 = vunpack.c.h.b16 %v343
    %v1281 = vunpack.c.l.b16 %v344
    %v1282 = vunpack.c.h.b16 %v344
    %v1283 = vunpack.c.l.b16 %v345
    %v1284 = vunpack.c.h.b16 %v345
    %v1285 = vunpack.c.l.b16 %v346
    %v1286 = vunpack.c.h.b16 %v346
    %v1287 = vunpack.c.l.b16 %v347
    %v1288 = vunpack.c.h.b16 %v347
    %v1289 = vunpack.c.l.b16 %v348
    %v1290 = vunpack.c.h.b16 %v348
    %v1291 = vunpack.c.l.b16 %v349
    %v1292 = vunpack.c.h.b16 %v349
    %v1293 = vunpack.c.l.b16 %v350
    %v1294 = vunpack.c.h.b16 %v350
    %v1295 = vunpack.c.l.b16 %v351
    %v1296 = vunpack.c.h.b16 %v351
    %v1297 = vunpack.c.l.b16 %v352
    %v1298 = vunpack.c.h.b16 %v352
    %v1299 = vunpack.c.l.b16 %v353
    %v1300 = vunpack.c.h.b16 %v353
    %v1301 = vunpack.c.l.b16 %v354
    %v1302 = vunpack.c.h.b16 %v354
    %v1303 = vunpack.c.l.b16 %v355
    %v1304 = vunpack.c.h.b16 %v355
    %v1305 = vunpack.c.l.b16 %v356
    %v1306 = vunpack.c.h.b16 %v356
    %v1307 = vunpack.c.l.b16 %v357
    %v1308 = vunpack.c.h.b16 %v357
    %v1309 = vunpack.c.l.b16 %v358
    %v1310 = vunpack.c.h.b16 %v358
    %v1311 = vunpack.c.l.b16 %v359
    %v1312 = vunpack.c.h.b16 %v359
    %v1313 = vunpack.c.l.b16 %v360
    %v1314 = vunpack.c.h.b16 %v360
    %v1315 = vunpack.c.l.b16 %v361
    %v1316 = vunpack.c.h.b16 %v361
    %v1317 = vunpack.c.l.b16 %v362
    %v1318 = vunpack.c.h.b16 %v362
    %v1319 = vunpack.c.l.b16 %v363
    %v1320 = vunpack.c.h.b16 %v363
    %v1321 = vunpack.c.l.b16 %v364
    %v1322 = vunpack.c.h.b16 %v364
    %v1323 = vunpack.c.l.b16 %v365
    %v1324 = vunpack.c.h.b16 %v365
    %v1325 = vunpack.c.l.b16 %v366
    %v1326 = vunpack.c.h.b16 %v366
    %v1327 = vunpack.c.l.b16 %v367
    %v1328 = vunpack.c.h.b16 %v367
    %v1329 = vunpack.c.l.b16 %v368
    %v1330 = vunpack.c.h.b16 %v368
    %v1331 = vunpack.c.l.b16 %v369
    %v1332 = vunpack.c.h.b16 %v369
    %v1333 = vunpack.c.l.b16 %v370
    %v1334 = vunpack.c.h.b16 %v370
    %v1335 = vunpack.c.l.b16 %v371
    %v1336 = vunpack.c.h.b16 %v371
    %v1337 = vunpack.c.l.b16 %v372
    %v1338 = vunpack.c.h.b16 %v372
    %v1339 = vunpack.c.l.b16 %v373
    %v1340 = vunpack.c.h.b16 %v373
    %v1341 = vunpack.c.l.b16 %v374
    %v1342 = vunpack.c.h.b16 %v374
    %v1343 = vunpack.c.l.b16 %v375
    %v1344 = vunpack.c.h.b16 %v375
    %v1345 = vunpack.c.l.b16 %v376
    %v1346 = vunpack.c.h.b16 %v376
    %v1347 = vunpack.c.l.b16 %v377
    %v1348 = vunpack.c.h.b16 %v377
    %v1349 = vunpack.c.l.b16 %v378
    %v1350 = vunpack.c.h.b16 %v378
    %v1351 = vunpack.c.l.b16 %v379
    %v1352 = vunpack.c.h.b16 %v379
    %v1353 = vunpack.c.l.b16 %v380
    %v1354 = vunpack.c.h.b16 %v380
    %v1355 = vunpack.c.l.b16 %v381
    %v1356 = vunpack.c.h.b16 %v381
    %v1357 = vunpack.c.l.b16 %v382
    %v1358 = vunpack.c.h.b16 %v382
    %v1359 = vunpack.c.l.b16 %v383
    %v1360 = vunpack.c.h.b16 %v383
    %v1361 = vunpack.c.l.b16 %v384
    %v1362 = vunpack.c.h.b16 %v384
    %v1363 = vunpack.c.l.b16 %v385
    %v1364 = vunpack.c.h.b16 %v385
    %v1365 = vunpack.c.l.b16 %v386
    %v1366 = vunpack.c.h.b16 %v386
    %v1367 = vunpack.c.l.b16 %v387
    %v1368 = vunpack.c.h.b16 %v387
    %v1369 = vunpack.c.l.b16 %v388
    %v1370 = vunpack.c.h.b16 %v388
    %v1371 = vunpack.c.l.b16 %v389
    %v1372 = vunpack.c.h.b16 %v389
    %v1373 = vunpack.c.l.b16 %v390
    %v1374 = vunpack.c.h.b16 %v390
    %v1375 = vunpack.c.l.b16 %v391
    %v1376 = vunpack.c.h.b16 %v391
    %v1377 = vunpack.c.l.b16 %v392
    %v1378 = vunpack.c.h.b16 %v392
    %v1379 = vunpack.c.l.b16 %v393
    %v1380 = vunpack.c.h.b16 %v393
    %v1381 = vunpack.c.l.b16 %v394
    %v1382 = vunpack.c.h.b16 %v394
    %v1383 = vunpack.c.l.b16 %v395
    %v1384 = vunpack.c.h.b16 %v395
    %v1385 = vunpack.c.l.b16 %v396
    %v1386 = vunpack.c.h.b16 %v396
    %v1387 = vunpack.c.l.b16 %v397
    %v1388 = vunpack.c.h.b16 %v397
    %v1389 = vunpack.c.l.b16 %v398
    %v1390 = vunpack.c.h.b16 %v398
    %v1391 = vunpack.c.l.b16 %v399
    %v1392 = vunpack.c.h.b16 %v399
    %v1393 = vunpack.c.l.b16 %v400
    %v1394 = vunpack.c.h.b16 %v400
    %v1395 = vunpack.c.l.b16 %v401
    %v1396 = vunpack.c.h.b16 %v401
    %v1397 = vunpack.c.l.b16 %v402
    %v1398 = vunpack.c.h.b16 %v402
    %v1399 = vunpack.c.l.b16 %v403
    %v1400 = vunpack.c.h.b16 %v403
    %v1401 = vunpack.c.l.b16 %v404
    %v1402 = vunpack.c.h.b16 %v404
    %v1403 = vunpack.c.l.b16 %v405
    %v1404 = vunpack.c.h.b16 %v405
    %v1405 = vunpack.c.l.b16 %v406
    %v1406 = vunpack.c.h.b16 %v406
    %v1407 = vunpack.c.l.b16 %v407
    %v1408 = vunpack.c.h.b16 %v407
    %v1409 = vunpack.c.l.b16 %v408
    %v1410 = vunpack.c.h.b16 %v408
    %v1411 = vunpack.c.l.b16 %v409
    %v1412 = vunpack.c.h.b16 %v409
    %v1413 = vunpack.c.l.b16 %v410
    %v1414 = vunpack.c.h.b16 %v410
    %v1415 = vunpack.c.l.b16 %v411
    %v1416 = vunpack.c.h.b16 %v411
    %v1417 = vunpack.c.l.b16 %v412
    %v1418 = vunpack.c.h.b16 %v412
    %v1419 = vunpack.c.l.b16 %v413
    %v1420 = vunpack.c.h.b16 %v413
    %v1421 = vunpack.c.l.b16 %v414
    %v1422 = vunpack.c.h.b16 %v414
    %v1423 = vunpack.c.l.b16 %v415
    %v1424 = vunpack.c.h.b16 %v415
    %v1425 = vunpack.c.l.b16 %v416
    %v1426 = vunpack.c.h.b16 %v416
    %v1427 = vunpack.c.l.b16 %v417
    %v1428 = vunpack.c.h.b16 %v417
    %v1429 = vunpack.c.l.b16 %v418
    %v1430 = vunpack.c.h.b16 %v418
    %v1431 = vunpack.c.l.b16 %v419
    %v1432 = vunpack.c.h.b16 %v419
    %v1433 = vunpack.c.l.b16 %v420
    %v1434 = vunpack.c.h.b16 %v420
    %v1435 = vunpack.c.l.b16 %v421
    %v1436 = vunpack.c.h.b16 %v421
    %v1437 = vunpack.c.l.b16 %v422
    %v1438 = vunpack.c.h.b16 %v422
    %v1439 = vunpack.c.l.b16 %v423
    %v1440 = vunpack.c.h.b16 %v423
    %v1441 = vunpack.c.l.b16 %v424
    %v1442 = vunpack.c.h.b16 %v424
    %v1443 = vunpack.c.l.b16 %v425
    %v1444 = vunpack.c.h.b16 %v425
    %v1445 = vunpack.c.l.b16 %v426
    %v1446 = vunpack.c.h.b16 %v426
    %v1447 = vunpack.c.l.b16 %v427
    %v1448 = vunpack.c.h.b16 %v427
    %v1449 = vunpack.c.l.b16 %v428
    %v1450 = vunpack.c.h.b16 %v428
    %v1451 = vunpack.c.l.b16 %v429
    %v1452 = vunpack.c.h.b16 %v429
    %v1453 = vunpack.c.l.b16 %v430
    %v1454 = vunpack.c.h.b16 %v430
    %v1455 = vunpack.c.l.b16 %v431
    %v1456 = vunpack.c.h.b16 %v431
    %v1457 = vunpack.c.l.b16 %v432
    %v1458 = vunpack.c.h.b16 %v432
    %v1459 = vunpack.c.l.b16 %v433
    %v1460 = vunpack.c.h.b16 %v433
    %v1461 = vunpack.c.l.b16 %v434
    %v1462 = vunpack.c.h.b16 %v434
    %v1463 = vunpack.c.l.b16 %v435
    %v1464 = vunpack.c.h.b16 %v435
    %v1465 = vunpack.c.l.b16 %v436
    %v1466 = vunpack.c.h.b16 %v436
    %v1467 = vunpack.c.l.b16 %v437
    %v1468 = vunpack.c.h.b16 %v437
    %v1469 = vunpack.c.l.b16 %v438
    %v1470 = vunpack.c.h.b16 %v438
    %v1471 = vunpack.c.l.b16 %v439
    %v1472 = vunpack.c.h.b16 %v439
    %v1473 = vunpack.c.l.b16 %v440
    %v1474 = vunpack.c.h.b16 %v440
    %v1475 = vunpack.c.l.b16 %v441
    %v1476 = vunpack.c.h.b16 %v441
    %v1477 = vunpack.c.l.b16 %v442
    %v1478 = vunpack.c.h.b16 %v442
    %v1479 = vunpack.c.l.b16 %v443
    %v1480 = vunpack.c.h.b16 %v443
    %v1481 = vunpack.c.l.b16 %v444
    %v1482 = vunpack.c.h.b16 %v444
    %v1483 = vunpack.c.l.b16 %v445
    %v1484 = vunpack.c.h.b16 %v445
    %v1485 = vunpack.c.l.b16 %v446
    %v1486 = vunpack.c.h.b16 %v446
    %v1487 = vunpack.c.l.b16 %v447
    %v1488 = vunpack.c.h.b16 %v447
    %v1489 = vunpack.c.l.b16 %v448
    %v1490 = vunpack.c.h.b16 %v448
    %v1491 = vunpack.c.l.b16 %v449
    %v1492 = vunpack.c.h.b16 %v449
    %v1493 = vunpack.c.l.b16 %v450
    %v1494 = vunpack.c.h.b16 %v450
    %v1495 = vunpack.c.l.b16 %v451
    %v1496 = vunpack.c.h.b16 %v451
    %v1497 = vunpack.c.l.b16 %v452
    %v1498 = vunpack.c.h.b16 %v452
    %v1499 = vunpack.c.l.b16 %v453
    %v1500 = vunpack.c.h.b16 %v453
    %v1501 = vunpack.c.l.b16 %v454
    %v1502 = vunpack.c.h.b16 %v454
    %v1503 = vunpack.c.l.b16 %v455
    %v1504 = vunpack.c.h.b16 %v455
    %v1505 = vunpack.c.l.b16 %v456
    %v1506 = vunpack.c.h.b16 %v456
    %v1507 = vunpack.c.l.b16 %v457
    %v1508 = vunpack.c.h.b16 %v457
    %v1509 = vunpack.c.l.b16 %v458
    %v1510 = vunpack.c.h.b16 %v458
    %v1511 = vunpack.c.l.b16 %v459
    %v1512 = vunpack.c.h.b16 %v459
    %v1513 = vunpack.c.l.b16 %v460
    %v1514 = vunpack.c.h.b16 %v460
    %v1515 = vunpack.c.l.b16 %v461
    %v1516 = vunpack.c.h.b16 %v461
    %v1517 = vunpack.c.l.b16 %v462
    %v1518 = vunpack.c.h.b16 %v462
    %v1519 = vunpack.c.l.b16 %v463
    %v1520 = vunpack.c.h.b16 %v463
    %v1521 = vunpack.c.l.b16 %v464
    %v1522 = vunpack.c.h.b16 %v464
    %v1523 = vunpack.c.l.b16 %v465
    %v1524 = vunpack.c.h.b16 %v465
    %v1525 = vunpack.c.l.b16 %v466
    %v1526 = vunpack.c.h.b16 %v466
    %v1527 = vunpack.c.l.b16 %v467
    %v1528 = vunpack.c.h.b16 %v467
    %v1529 = vunpack.c.l.b16 %v468
    %v1530 = vunpack.c.h.b16 %v468
    %v1531 = vunpack.c.l.b16 %v469
    %v1532 = vunpack.c.h.b16 %v469
    %v1533 = vunpack.c.l.b16 %v470
    %v1534 = vunpack.c.h.b16 %v470
    %v1535 = vunpack.c.l.b16 %v471
    %v1536 = vunpack.c.h.b16 %v471
    %v1537 = vunpack.c.l.b16 %v472
    %v1538 = vunpack.c.h.b16 %v472
    %v1539 = vunpack.c.l.b16 %v473
    %v1540 = vunpack.c.h.b16 %v473
    %v1541 = vunpack.c.l.b16 %v474
    %v1542 = vunpack.c.h.b16 %v474
    %v1543 = vunpack.c.l.b16 %v475
    %v1544 = vunpack.c.h.b16 %v475
    %v1545 = vunpack.c.l.b16 %v476
    %v1546 = vunpack.c.h.b16 %v476
    %v1547 = vunpack.c.l.b16 %v477
    %v1548 = vunpack.c.h.b16 %v477
    %v1549 = vunpack.c.l.b16 %v478
    %v1550 = vunpack.c.h.b16 %v478
    %v1551 = vunpack.c.l.b16 %v479
    %v1552 = vunpack.c.h.b16 %v479
    %v1553 = vunpack.c.l.b16 %v480
    %v1554 = vunpack.c.h.b16 %v480
    %v1555 = vunpack.c.l.b16 %v481
    %v1556 = vunpack.c.h.b16 %v481
    %v1557 = vunpack.c.l.b16 %v482
    %v1558 = vunpack.c.h.b16 %v482
    %v1559 = vunpack.c.l.b16 %v483
    %v1560 = vunpack.c.h.b16 %v483
    %v1561 = vunpack.c.l.b16 %v484
    %v1562 = vunpack.c.h.b16 %v484
    %v1563 = vunpack.c.l.b16 %v485
    %v1564 = vunpack.c.h.b16 %v485
    %v1565 = vunpack.c.l.b16 %v486
    %v1566 = vunpack.c.h.b16 %v486
    %v1567 = vunpack.c.l.b16 %v487
    %v1568 = vunpack.c.h.b16 %v487
    %v1569 = vunpack.c.l.b16 %v488
    %v1570 = vunpack.c.h.b16 %v488
    %v1571 = vunpack.c.l.b16 %v489
    %v1572 = vunpack.c.h.b16 %v489
    %v1573 = vunpack.c.l.b16 %v490
    %v1574 = vunpack.c.h.b16 %v490
    %v1575 = vunpack.c.l.b16 %v491
    %v1576 = vunpack.c.h.b16 %v491
    %v1577 = vunpack.c.l.b16 %v492
    %v1578 = vunpack.c.h.b16 %v492
    %v1579 = vunpack.c.l.b16 %v493
    %v1580 = vunpack.c.h.b16 %v493
    %v1581 = vunpack.c.l.b16 %v494
    %v1582 = vunpack.c.h.b16 %v494
    %v1583 = vunpack.c.l.b16 %v495
    %v1584 = vunpack.c.h.b16 %v495
    %v1585 = vunpack.c.l.b16 %v496
    %v1586 = vunpack.c.h.b16 %v496
    %v1587 = vunpack.c.l.b16 %v497
    %v1588 = vunpack.c.h.b16 %v497
    %v1589 = vunpack.c.l.b16 %v498
    %v1590 = vunpack.c.h.b16 %v498
    %v1591 = vunpack.c.l.b16 %v499
    %v1592 = vunpack.c.h.b16 %v499
    %v1593 = vunpack.c.l.b16 %v500
    %v1594 = vunpack.c.h.b16 %v500
    %v1595 = vunpack.c.l.b16 %v501
    %v1596 = vunpack.c.h.b16 %v501
    %v1597 = vunpack.c.l.b16 %v502
    %v1598 = vunpack.c.h.b16 %v502
    %v1599 = vunpack.c.l.b16 %v503
    %v1600 = vunpack.c.h.b16 %v503
    %v1601 = vunpack.c.l.b16 %v504
    %v1602 = vunpack.c.h.b16 %v504
    %v1603 = vunpack.c.l.b16 %v505
    %v1604 = vunpack.c.h.b16 %v505
    %v1605 = vunpack.c.l.b16 %v506
    %v1606 = vunpack.c.h.b16 %v506
    %v1607 = vunpack.c.l.b16 %v507
    %v1608 = vunpack.c.h.b16 %v507
    %v1609 = vunpack.c.l.b16 %v508
    %v1610 = vunpack.c.h.b16 %v508
    %v1611 = vunpack.c.l.b16 %v509
    %v1612 = vunpack.c.h.b16 %v509
    %v1613 = vunpack.c.l.b16 %v510
    %v1614 = vunpack.c.h.b16 %v510
    %v1615 = vunpack.c.l.b16 %v511
    %v1616 = vunpack.c.h.b16 %v511
    %v1617 = vunpack.c.l.b16 %v512
    %v1618 = vunpack.c.h.b16 %v512
    %v1619 = vunpack.c.l.b16 %v513
    %v1620 = vunpack.c.h.b16 %v513
    %v1621 = vunpack.c.l.b16 %v514
    %v1622 = vunpack.c.h.b16 %v514
    %v1623 = vunpack.c.l.b16 %v515
    %v1624 = vunpack.c.h.b16 %v515
    %v1625 = vunpack.c.l.b16 %v516
    %v1626 = vunpack.c.h.b16 %v516
    %v1627 = vunpack.c.l.b16 %v517
    %v1628 = vunpack.c.h.b16 %v517
    %v1629 = vunpack.c.l.b16 %v518
    %v1630 = vunpack.c.h.b16 %v518
    %v1631 = vunpack.c.l.b16 %v519
    %v1632 = vunpack.c.h.b16 %v519
    %v1633 = vunpack.c.l.b16 %v520
    %v1634 = vunpack.c.h.b16 %v520
    %v1635 = vunpack.c.l.b16 %v521
    %v1636 = vunpack.c.h.b16 %v521
    %v1637 = vunpack.c.l.b16 %v522
    %v1638 = vunpack.c.h.b16 %v522
    %v1639 = vunpack.c.l.b16 %v523
    %v1640 = vunpack.c.h.b16 %v523
    %v1641 = vunpack.c.l.b16 %v524
    %v1642 = vunpack.c.h.b16 %v524
    %v1643 = vunpack.c.l.b16 %v525
    %v1644 = vunpack.c.h.b16 %v525
    %v1645 = vunpack.c.l.b16 %v526
    %v1646 = vunpack.c.h.b16 %v526
    %v1647 = vunpack.c.l.b16 %v527
    %v1648 = vunpack.c.h.b16 %v527
    %v1649 = vunpack.c.l.b16 %v528
    %v1650 = vunpack.c.h.b16 %v528
    %v1651 = vunpack.c.l.b16 %v529
    %v1652 = vunpack.c.h.b16 %v529
    %v1653 = vunpack.c.l.b16 %v530
    %v1654 = vunpack.c.h.b16 %v530
    %v1655 = vunpack.c.l.b16 %v531
    %v1656 = vunpack.c.h.b16 %v531
    %v1657 = vunpack.c.l.b16 %v532
    %v1658 = vunpack.c.h.b16 %v532
    %v1659 = vunpack.c.l.b16 %v533
    %v1660 = vunpack.c.h.b16 %v533
    %v1661 = vunpack.c.l.b16 %v534
    %v1662 = vunpack.c.h.b16 %v534
    %v1663 = vunpack.c.l.b16 %v535
    %v1664 = vunpack.c.h.b16 %v535
    %v1665 = vunpack.c.l.b16 %v536
    %v1666 = vunpack.c.h.b16 %v536
    %v1667 = vunpack.c.l.b16 %v537
    %v1668 = vunpack.c.h.b16 %v537
    %v1669 = vunpack.c.l.b16 %v538
    %v1670 = vunpack.c.h.b16 %v538
    %v1671 = vunpack.c.l.b16 %v539
    %v1672 = vunpack.c.h.b16 %v539
    %v1673 = vunpack.c.l.b16 %v540
    %v1674 = vunpack.c.h.b16 %v540
    %v1675 = vunpack.c.l.b16 %v541
    %v1676 = vunpack.c.h.b16 %v541
    %v1677 = vunpack.c.l.b16 %v542
    %v1678 = vunpack.c.h.b16 %v542
    %v1679 = vunpack.c.l.b16 %v543
    %v1680 = vunpack.c.h.b16 %v543
    %v1681 = vunpack.c.l.b16 %v544
    %v1682 = vunpack.c.h.b16 %v544
    %v1683 = vunpack.c.l.b16 %v545
    %v1684 = vunpack.c.h.b16 %v545
    %v1685 = vunpack.c.l.b16 %v546
    %v1686 = vunpack.c.h.b16 %v546
    %v1687 = vunpack.c.l.b16 %v547
    %v1688 = vunpack.c.h.b16 %v547
    %v1689 = vunpack.c.l.b16 %v548
    %v1690 = vunpack.c.h.b16 %v548
    %v1691 = vunpack.c.l.b16 %v549
    %v1692 = vunpack.c.h.b16 %v549
    %v1693 = vunpack.c.l.b16 %v550
    %v1694 = vunpack.c.h.b16 %v550
    %v1695 = vunpack.c.l.b16 %v551
    %v1696 = vunpack.c.h.b16 %v551
    %v1697 = vunpack.c.l.b16 %v552
    %v1698 = vunpack.c.h.b16 %v552
    %v1699 = vunpack.c.l.b16 %v553
    %v1700 = vunpack.c.h.b16 %v553
    %v1701 = vunpack.c.l.b16 %v554
    %v1702 = vunpack.c.h.b16 %v554
    %v1703 = vunpack.c.l.b16 %v555
    %v1704 = vunpack.c.h.b16 %v555
    %v1705 = vunpack.c.l.b16 %v556
    %v1706 = vunpack.c.h.b16 %v556
    %v1707 = vunpack.c.l.b16 %v557
    %v1708 = vunpack.c.h.b16 %v557
    %v1709 = vunpack.c.l.b16 %v558
    %v1710 = vunpack.c.h.b16 %v558
    %v1711 = vunpack.c.l.b16 %v559
    %v1712 = vunpack.c.h.b16 %v559
    %v1713 = vunpack.c.l.b16 %v560
    %v1714 = vunpack.c.h.b16 %v560
    %v1715 = vunpack.c.l.b16 %v561
    %v1716 = vunpack.c.h.b16 %v561
    %v1717 = vunpack.c.l.b16 %v562
    %v1718 = vunpack.c.h.b16 %v562
    %v1719 = vunpack.c.l.b16 %v563
    %v1720 = vunpack.c.h.b16 %v563
    %v1721 = vunpack.c.l.b16 %v564
    %v1722 = vunpack.c.h.b16 %v564
    %v1723 = vunpack.c.l.b16 %v565
    %v1724 = vunpack.c.h.b16 %v565
    %v1725 = vunpack.c.l.b16 %v566
    %v1726 = vunpack.c.h.b16 %v566
    %v1727 = vunpack.c.l.b16 %v567
    %v1728 = vunpack.c.h.b16 %v567
    %v1729 = vunpack.c.l.b16 %v568
    %v1730 = vunpack.c.h.b16 %v568
    %v1731 = vunpack.c.l.b16 %v569
    %v1732 = vunpack.c.h.b16 %v569
    %v1733 = vunpack.c.l.b16 %v570
    %v1734 = vunpack.c.h.b16 %v570
    %v1735 = vunpack.c.l.b16 %v571
    %v1736 = vunpack.c.h.b16 %v571
    %v1737 = vunpack.c.l.b16 %v572
    %v1738 = vunpack.c.h.b16 %v572
    %v1739 = vunpack.c.l.b16 %v573
    %v1740 = vunpack.c.h.b16 %v573
    %v1741 = vunpack.c.l.b16 %v574
    %v1742 = vunpack.c.h.b16 %v574
    %v1743 = vunpack.c.l.b16 %v575
    %v1744 = vunpack.c.h.b16 %v575
    %v1745 = vunpack.c.l.b16 %v576
    %v1746 = vunpack.c.h.b16 %v576
    %v1747 = vunpack.c.l.b16 %v577
    %v1748 = vunpack.c.h.b16 %v577
    %v1749 = vunpack.c.l.b16 %v578
    %v1750 = vunpack.c.h.b16 %v578
    %v1751 = vunpack.c.l.b16 %v579
    %v1752 = vunpack.c.h.b16 %v579
    %v1753 = vunpack.c.l.b16 %v580
    %v1754 = vunpack.c.h.b16 %v580
    %v1755 = vunpack.c.l.b16 %v581
    %v1756 = vunpack.c.h.b16 %v581
    %v1757 = vunpack.c.l.b16 %v582
    %v1758 = vunpack.c.h.b16 %v582
    %v1759 = vunpack.c.l.b16 %v583
    %v1760 = vunpack.c.h.b16 %v583
    %v1761 = vunpack.c.l.b16 %v584
    %v1762 = vunpack.c.h.b16 %v584
    %v1763 = vunpack.c.l.b16 %v585
    %v1764 = vunpack.c.h.b16 %v585
    %v1765 = vunpack.c.l.b16 %v586
    %v1766 = vunpack.c.h.b16 %v586
    %v1767 = vunpack.c.l.b16 %v587
    %v1768 = vunpack.c.h.b16 %v587
    %v1769 = vunpack.c.l.b16 %v588
    %v1770 = vunpack.c.h.b16 %v588
    %v1771 = vunpack.c.l.b16 %v589
    %v1772 = vunpack.c.h.b16 %v589
    %v1773 = vunpack.c.l.b16 %v590
    %v1774 = vunpack.c.h.b16 %v590
    %v1775 = vunpack.c.l.b16 %v591
    %v1776 = vunpack.c.h.b16 %v591
    %v1777 = vunpack.c.l.b16 %v592
    %v1778 = vunpack.c.h.b16 %v592
    %v1779 = vunpack.c.l.b16 %v593
    %v1780 = vunpack.c.h.b16 %v593
    %v1781 = vunpack.c.l.b16 %v594
    %v1782 = vunpack.c.h.b16 %v594
    %v1783 = vunpack.c.l.b16 %v595
    %v1784 = vunpack.c.h.b16 %v595
    %v1785 = vunpack.c.l.b16 %v596
    %v1786 = vunpack.c.h.b16 %v596
    %v1787 = vunpack.c.l.b16 %v597
    %v1788 = vunpack.c.h.b16 %v597
    %v1789 = vunpack.c.l.b16 %v598
    %v1790 = vunpack.c.h.b16 %v598
    %v1791 = vunpack.c.l.b16 %v599
    %v1792 = vunpack.c.h.b16 %v599
    %v1793 = vunpack.c.l.b16 %v600
    %v1794 = vunpack.c.h.b16 %v600
    %v1795 = vunpack.c.l.b16 %v601
    %v1796 = vunpack.c.h.b16 %v601
    %v1797 = vunpack.c.l.b16 %v602
    %v1798 = vunpack.c.h.b16 %v602
    %v1799 = vunpack.c.l.b16 %v603
    %v1800 = vunpack.c.h.b16 %v603
    %v1801 = vunpack.c.l.b16 %v604
    %v1802 = vunpack.c.h.b16 %v604
    %v1803 = vunpack.c.l.b16 %v605
    %v1804 = vunpack.c.h.b16 %v605
    %v1805 = vunpack.c.l.b16 %v606
    %v1806 = vunpack.c.h.b16 %v606
    %v1807 = vunpack.c.l.b16 %v607
    %v1808 = vunpack.c.h.b16 %v607
    %v1809 = vunpack.c.l.b16 %v608
    %v1810 = vunpack.c.h.b16 %v608
    %v1811 = vunpack.c.l.b16 %v609
    %v1812 = vunpack.c.h.b16 %v609
    %v1813 = vunpack.c.l.b16 %v610
    %v1814 = vunpack.c.h.b16 %v610
    %v1815 = vunpack.c.l.b16 %v611
    %v1816 = vunpack.c.h.b16 %v611
    %v1817 = vunpack.c.l.b16 %v612
    %v1818 = vunpack.c.h.b16 %v612
    %v1819 = vunpack.c.l.b16 %v613
    %v1820 = vunpack.c.h.b16 %v613
    %v1821 = vunpack.c.l.b16 %v614
    %v1822 = vunpack.c.h.b16 %v614
    %v1823 = vunpack.c.l.b16 %v615
    %v1824 = vunpack.c.h.b16 %v615
    %v1825 = vunpack.c.l.b16 %v616
    %v1826 = vunpack.c.h.b16 %v616
    %v1827 = vunpack.c.l.b16 %v617
    %v1828 = vunpack.c.h.b16 %v617
    %v1829 = vunpack.c.l.b16 %v618
    %v1830 = vunpack.c.h.b16 %v618
    %v1831 = vunpack.c.l.b16 %v619
    %v1832 = vunpack.c.h.b16 %v619
    %v1833 = vunpack.c.l.b16 %v620
    %v1834 = vunpack.c.h.b16 %v620
    %v1835 = vunpack.c.l.b16 %v621
    %v1836 = vunpack.c.h.b16 %v621
    %v1837 = vunpack.c.l.b16 %v622
    %v1838 = vunpack.c.h.b16 %v622
    %v1839 = vunpack.c.l.b16 %v623
    %v1840 = vunpack.c.h.b16 %v623
    %v1841 = vunpack.c.l.b16 %v624
    %v1842 = vunpack.c.h.b16 %v624
    %v1843 = vunpack.c.l.b16 %v625
    %v1844 = vunpack.c.h.b16 %v625
    %v1845 = vunpack.c.l.b16 %v626
    %v1846 = vunpack.c.h.b16 %v626
    %v1847 = vunpack.c.l.b16 %v627
    %v1848 = vunpack.c.h.b16 %v627
    %v1849 = vunpack.c.l.b16 %v628
    %v1850 = vunpack.c.h.b16 %v628
    %v1851 = vunpack.c.l.b16 %v629
    %v1852 = vunpack.c.h.b16 %v629
    %v1853 = vunpack.c.l.b16 %v630
    %v1854 = vunpack.c.h.b16 %v630
    %v1855 = vunpack.c.l.b16 %v631
    %v1856 = vunpack.c.h.b16 %v631
    %v1857 = vunpack.c.l.b16 %v632
    %v1858 = vunpack.c.h.b16 %v632
    %v1859 = vunpack.c.l.b16 %v633
    %v1860 = vunpack.c.h.b16 %v633
    %v1861 = vunpack.c.l.b16 %v634
    %v1862 = vunpack.c.h.b16 %v634
    %v1863 = vunpack.c.l.b16 %v635
    %v1864 = vunpack.c.h.b16 %v635
    %v1865 = vpack.c.b16 %v1089, %v1081
    %v1866 = vpack.c.b16 %v1090, %v1082
    %v1867 = vpack.c.b16 %v1091, %v1083
    %v1868 = vpack.c.b16 %v1092, %v1084
    %v1869 = vpack.c.b16 %v1093, %v1085
    %v1870 = vpack.c.b16 %v1094, %v1086
    %v1871 = vpack.c.b16 %v1095, %v1087
    %v1872 = vpack.c.b16 %v1096, %v1088
    %v1873 = vpack.c.b16 %v1105, %v1097
    %v1874 = vpack.c.b16 %v1106, %v1098
    %v1875 = vpack.c.b16 %v1107, %v1099
    %v1876 = vpack.c.b16 %v1108, %v1100
    %v1877 = vpack.c.b16 %v1109, %v1101
    %v1878 = vpack.c.b16 %v1110, %v1102
    %v1879 = vpack.c.b16 %v1111, %v1103
    %v1880 = vpack.c.b16 %v1112, %v1104
    %v1881 = vpack.c.b16 %v1121, %v1113
    %v1882 = vpack.c.b16 %v1122, %v1114
    %v1883 = vpack.c.b16 %v1123, %v1115
    %v1884 = vpack.c.b16 %v1124, %v1116
    %v1885 = vpack.c.b16 %v1125, %v1117
    %v1886 = vpack.c.b16 %v1126, %v1118
    %v1887 = vpack.c.b16 %v1127, %v1119
    %v1888 = vpack.c.b16 %v1128, %v1120
    %v1889 = vpack.c.b16 %v1137, %v1129
    %v1890 = vpack.c.b16 %v1138, %v1130
    %v1891 = vpack.c.b16 %v1139, %v1131
    %v1892 = vpack.c.b16 %v1140, %v1132
    %v1893 = vpack.c.b16 %v1141, %v1133
    %v1894 = vpack.c.b16 %v1142, %v1134
    %v1895 = vpack.c.b16 %v1143, %v1135
    %v1896 = vpack.c.b16 %v1144, %v1136
    %v1897 = vpack.c.b16 %v1153, %v1145
    %v1898 = vpack.c.b16 %v1154, %v1146
    %v1899 = vpack.c.b16 %v1155, %v1147
    %v1900 = vpack.c.b16 %v1156, %v1148
    %v1901 = vpack.c.b16 %v1157, %v1149
    %v1902 = vpack.c.b16 %v1158, %v1150
    %v1903 = vpack.c.b16 %v1159, %v1151
    %v1904 = vpack.c.b16 %v1160, %v1152
    %v1905 = vpack.c.b16 %v1169, %v1161
    %v1906 = vpack.c.b16 %v1170, %v1162
    %v1907 = vpack.c.b16 %v1171, %v1163
    %v1908 = vpack.c.b16 %v1172, %v1164
    %v1909 = vpack.c.b16 %v1173, %v1165
    %v1910 = vpack.c.b16 %v1174, %v1166
    %v1911 = vpack.c.b16 %v1175, %v1167
    %v1912 = vpack.c.b16 %v1176, %v1168
    %v1913 = vpack.c.b16 %v1185, %v1177
    %v1914 = vpack.c.b16 %v1186, %v1178
    %v1915 = vpack.c.b16 %v1187, %v1179
    %v1916 = vpack.c.b16 %v1188, %v1180
    %v1917 = vpack.c.b16 %v1189, %v1181
    %v1918 = vpack.c.b16 %v1190, %v1182
    %v1919 = vpack.c.b16 %v1191, %v1183
    %v1920 = vpack.c.b16 %v1192, %v1184
    %v1921 = vpack.c.b16 %v1201, %v1193
    %v1922 = vpack.c.b16 %v1202, %v1194
    %v1923 = vpack.c.b16 %v1203, %v1195
    %v1924 = vpack.c.b16 %v1204, %v1196
    %v1925 = vpack.c.b16 %v1205, %v1197
    %v1926 = vpack.c.b16 %v1206, %v1198
    %v1927 = vpack.c.b16 %v1207, %v1199
    %v1928 = vpack.c.b16 %v1208, %v1200
    %v1929 = vpack.c.b16 %v1217, %v1209
    %v1930 = vpack.c.b16 %v1218, %v1210
    %v1931 = vpack.c.b16 %v1219, %v1211
    %v1932 = vpack.c.b16 %v1220, %v1212
    %v1933 = vpack.c.b16 %v1221, %v1213
    %v1934 = vpack.c.b16 %v1222, %v1214
    %v1935 = vpack.c.b16 %v1223, %v1215
    %v1936 = vpack.c.b16 %v1224, %v1216
    %v1937 = vpack.c.b16 %v1233, %v1225
    %v1938 = vpack.c.b16 %v1234, %v1226
    %v1939 = vpack.c.b16 %v1235, %v1227
    %v1940 = vpack.c.b16 %v1236, %v1228
    %v1941 = vpack.c.b16 %v1237, %v1229
    %v1942 = vpack.c.b16 %v1238, %v1230
    %v1943 = vpack.c.b16 %v1239, %v1231
    %v1944 = vpack.c.b16 %v1240, %v1232
    %v1945 = vpack.c.b16 %v1249, %v1241
    %v1946 = vpack.c.b16 %v1250, %v1242
    %v1947 = vpack.c.b16 %v1251, %v1243
    %v1948 = vpack.c.b16 %v1252, %v1244
    %v1949 = vpack.c.b16 %v1253, %v1245
    %v1950 = vpack.c.b16 %v1254, %v1246
    %v1951 = vpack.c.b16 %v1255, %v1247
    %v1952 = vpack.c.b16 %v1256, %v1248
    %v1953 = vpack.c.b16 %v1265, %v1257
    %v1954 = vpack.c.b16 %v1266, %v1258
    %v1955 = vpack.c.b16 %v1267, %v1259
    %v1956 = vpack.c.b16 %v1268, %v1260
    %v1957 = vpack.c.b16 %v1269, %v1261
    %v1958 = vpack.c.b16 %v1270, %v1262
    %v1959 = vpack.c.b16 %v1271, %v1263
    %v1960 = vpack.c.b16 %v1272, %v1264
    %v1961 = vpack.c.b16 %v1281, %v1273
    %v1962 = vpack.c.b16 %v1282, %v1274
    %v1963 = vpack.c.b16 %v1283, %v1275
    %v1964 = vpack.c.b16 %v1284, %v1276
    %v1965 = vpack.c.b16 %v1285, %v1277
    %v1966 = vpack.c.b16 %v1286, %v1278
    %v1967 = vpack.c.b16 %v1287, %v1279
    %v1968 = vpack.c.b16 %v1288, %v1280
    %v1969 = vpack.c.b16 %v1297, %v1289
    %v1970 = vpack.c.b16 %v1298, %v1290
    %v1971 = vpack.c.b16 %v1299, %v1291
    %v1972 = vpack.c.b16 %v1300, %v1292
    %v1973 = vpack.c.b16 %v1301, %v1293
    %v1974 = vpack.c.b16 %v1302, %v1294
    %v1975 = vpack.c.b16 %v1303, %v1295
    %v1976 = vpack.c.b16 %v1304, %v1296
    %v1977 = vpack.c.b16 %v1313, %v1305
    %v1978 = vpack.c.b16 %v1314, %v1306
    %v1979 = vpack.c.b16 %v1315, %v1307
    %v1980 = vpack.c.b16 %v1316, %v1308
    %v1981 = vpack.c.b16 %v1317, %v1309
    %v1982 = vpack.c.b16 %v1318, %v1310
    %v1983 = vpack.c.b16 %v1319, %v1311
    %v1984 = vpack.c.b16 %v1320, %v1312
    %v1985 = vpack.c.b16 %v1329, %v1321
    %v1986 = vpack.c.b16 %v1330, %v1322
    %v1987 = vpack.c.b16 %v1331, %v1323
    %v1988 = vpack.c.b16 %v1332, %v1324
    %v1989 = vpack.c.b16 %v1333, %v1325
    %v1990 = vpack.c.b16 %v1334, %v1326
    %v1991 = vpack.c.b16 %v1335, %v1327
    %v1992 = vpack.c.b16 %v1336, %v1328
    %v1993 = vpack.c.b16 %v1345, %v1337
    %v1994 = vpack.c.b16 %v1346, %v1338
    %v1995 = vpack.c.b16 %v1347, %v1339
    %v1996 = vpack.c.b16 %v1348, %v1340
    %v1997 = vpack.c.b16 %v1349, %v1341
    %v1998 = vpack.c.b16 %v1350, %v1342
    %v1999 = vpack.c.b16 %v1351, %v1343
    %v2000 = vpack.c.b16 %v1352, %v1344
    %v2001 = vpack.c.b16 %v1361, %v1353
    %v2002 = vpack.c.b16 %v1362, %v1354
    %v2003 = vpack.c.b16 %v1363, %v1355
    %v2004 = vpack.c.b16 %v1364, %v1356
    %v2005 = vpack.c.b16 %v1365, %v1357
    %v2006 = vpack.c.b16 %v1366, %v1358
    %v2007 = vpack.c.b16 %v1367, %v1359
    %v2008 = vpack.c.b16 %v1368, %v1360
    %v2009 = vpack.c.b16 %v1377, %v1369
    %v2010 = vpack.c.b16 %v1378, %v1370
    %v2011 = vpack.c.b16 %v1379, %v1371
    %v2012 = vpack.c.b16 %v1380, %v1372
    %v2013 = vpack.c.b16 %v1381, %v1373
    %v2014 = vpack.c.b16 %v1382, %v1374
    %v2015 = vpack.c.b16 %v1383, %v1375
    %v2016 = vpack.c.b16 %v1384, %v1376
    %v2017 = vpack.c.b16 %v1393, %v1385
    %v2018 = vpack.c.b16 %v1394, %v1386
    %v2019 = vpack.c.b16 %v1395, %v1387
    %v2020 = vpack.c.b16 %v1396, %v1388
    %v2021 = vpack.c.b16 %v1397, %v1389
    %v2022 = vpack.c.b16 %v1398, %v1390
    %v2023 = vpack.c.b16 %v1399, %v1391
    %v2024 = vpack.c.b16 %v1400, %v1392
    %v2025 = vpack.c.b16 %v1409, %v1401
    %v2026 = vpack.c.b16 %v1410, %v1402
    %v2027 = vpack.c.b16 %v1411, %v1403
    %v2028 = vpack.c.b16 %v1412, %v1404
    %v2029 = vpack.c.b16 %v1413, %v1405
    %v2030 = vpack.c.b16 %v1414, %v1406
    %v2031 = vpack.c.b16 %v1415, %v1407
    %v2032 = vpack.c.b16 %v1416, %v1408
    %v2033 = vpack.c.b16 %v1425, %v1417
    %v2034 = vpack.c.b16 %v1426, %v1418
    %v2035 = vpack.c.b16 %v1427, %v1419
    %v2036 = vpack.c.b16 %v1428, %v1420
    %v2037 = vpack.c.b16 %v1429, %v1421
    %v2038 = vpack.c.b16 %v1430, %v1422
    %v2039 = vpack.c.b16 %v1431, %v1423
    %v2040 = vpack.c.b16 %v1432, %v1424
    %v2041 = vpack.c.b16 %v1441, %v1433
    %v2042 = vpack.c.b16 %v1442, %v1434
    %v2043 = vpack.c.b16 %v1443, %v1435
    %v2044 = vpack.c.b16 %v1444, %v1436
    %v2045 = vpack.c.b16 %v1445, %v1437
    %v2046 = vpack.c.b16 %v1446, %v1438
    %v2047 = vpack.c.b16 %v1447, %v1439
    %v2048 = vpack.c.b16 %v1448, %v1440
    %v2049 = vpack.c.b16 %v1457, %v1449
    %v2050 = vpack.c.b16 %v1458, %v1450
    %v2051 = vpack.c.b16 %v1459, %v1451
    %v2052 = vpack.c.b16 %v1460, %v1452
    %v2053 = vpack.c.b16 %v1461, %v1453
    %v2054 = vpack.c.b16 %v1462, %v1454
    %v2055 = vpack.c.b16 %v1463, %v1455
    %v2056 = vpack.c.b16 %v1464, %v1456
    %v2057 = vpack.c.b16 %v1473, %v1465
    %v2058 = vpack.c.b16 %v1474, %v1466
    %v2059 = vpack.c.b16 %v1475, %v1467
    %v2060 = vpack.c.b16 %v1476, %v1468
    %v2061 = vpack.c.b16 %v1477, %v1469
    %v2062 = vpack.c.b16 %v1478, %v1470
    %v2063 = vpack.c.b16 %v1479, %v1471
    %v2064 = vpack.c.b16 %v1480, %v1472
    %v2065 = vpack.c.b16 %v1489, %v1481
    %v2066 = vpack.c.b16 %v1490, %v1482
    %v2067 = vpack.c.b16 %v1491, %v1483
    %v2068 = vpack.c.b16 %v1492, %v1484
    %v2069 = vpack.c.b16 %v1493, %v1485
    %v2070 = vpack.c.b16 %v1494, %v1486
    %v2071 = vpack.c.b16 %v1495, %v1487
    %v2072 = vpack.c.b16 %v1496, %v1488
    %v2073 = vpack.c.b16 %v1505, %v1497
    %v2074 = vpack.c.b16 %v1506, %v1498
    %v2075 = vpack.c.b16 %v1507, %v1499
    %v2076 = vpack.c.b16 %v1508, %v1500
    %v2077 = vpack.c.b16 %v1509, %v1501
    %v2078 = vpack.c.b16 %v1510, %v1502
    %v2079 = vpack.c.b16 %v1511, %v1503
    %v2080 = vpack.c.b16 %v1512, %v1504
    %v2081 = vpack.c.b16 %v1521, %v1513
    %v2082 = vpack.c.b16 %v1522, %v1514
    %v2083 = vpack.c.b16 %v1523, %v1515
    %v2084 = vpack.c.b16 %v1524, %v1516
    %v2085 = vpack.c.b16 %v1525, %v1517
    %v2086 = vpack.c.b16 %v1526, %v1518
    %v2087 = vpack.c.b16 %v1527, %v1519
    %v2088 = vpack.c.b16 %v1528, %v1520
    %v2089 = vpack.c.b16 %v1537, %v1529
    %v2090 = vpack.c.b16 %v1538, %v1530
    %v2091 = vpack.c.b16 %v1539, %v1531
    %v2092 = vpack.c.b16 %v1540, %v1532
    %v2093 = vpack.c.b16 %v1541, %v1533
    %v2094 = vpack.c.b16 %v1542, %v1534
    %v2095 = vpack.c.b16 %v1543, %v1535
    %v2096 = vpack.c.b16 %v1544, %v1536
    %v2097 = vpack.c.b16 %v1553, %v1545
    %v2098 = vpack.c.b16 %v1554, %v1546
    %v2099 = vpack.c.b16 %v1555, %v1547
    %v2100 = vpack.c.b16 %v1556, %v1548
    %v2101 = vpack.c.b16 %v1557, %v1549
    %v2102 = vpack.c.b16 %v1558, %v1550
    %v2103 = vpack.c.b16 %v1559, %v1551
    %v2104 = vpack.c.b16 %v1560, %v1552
    %v2105 = vpack.c.b16 %v1569, %v1561
    %v2106 = vpack.c.b16 %v1570, %v1562
    %v2107 = vpack.c.b16 %v1571, %v1563
    %v2108 = vpack.c.b16 %v1572, %v1564
    %v2109 = vpack.c.b16 %v1573, %v1565
    %v2110 = vpack.c.b16 %v1574, %v1566
    %v2111 = vpack.c.b16 %v1575, %v1567
    %v2112 = vpack.c.b16 %v1576, %v1568
    %v2113 = vpack.c.b16 %v1585, %v1577
    %v2114 = vpack.c.b16 %v1586, %v1578
    %v2115 = vpack.c.b16 %v1587, %v1579
    %v2116 = vpack.c.b16 %v1588, %v1580
    %v2117 = vpack.c.b16 %v1589, %v1581
    %v2118 = vpack.c.b16 %v1590, %v1582
    %v2119 = vpack.c.b16 %v1591, %v1583
    %v2120 = vpack.c.b16 %v1592, %v1584
    %v2121 = vpack.c.b16 %v1601, %v1593
    %v2122 = vpack.c.b16 %v1602, %v1594
    %v2123 = vpack.c.b16 %v1603, %v1595
    %v2124 = vpack.c.b16 %v1604, %v1596
    %v2125 = vpack.c.b16 %v1605, %v1597
    %v2126 = vpack.c.b16 %v1606, %v1598
    %v2127 = vpack.c.b16 %v1607, %v1599
    %v2128 = vpack.c.b16 %v1608, %v1600
    %v2129 = vpack.c.b16 %v1617, %v1609
    %v2130 = vpack.c.b16 %v1618, %v1610
    %v2131 = vpack.c.b16 %v1619, %v1611
    %v2132 = vpack.c.b16 %v1620, %v1612
    %v2133 = vpack.c.b16 %v1621, %v1613
    %v2134 = vpack.c.b16 %v1622, %v1614
    %v2135 = vpack.c.b16 %v1623, %v1615
    %v2136 = vpack.c.b16 %v1624, %v1616
    %v2137 = vpack.c.b16 %v1633, %v1625
    %v2138 = vpack.c.b16 %v1634, %v1626
    %v2139 = vpack.c.b16 %v1635, %v1627
    %v2140 = vpack.c.b16 %v1636, %v1628
    %v2141 = vpack.c.b16 %v1637, %v1629
    %v2142 = vpack.c.b16 %v1638, %v1630
    %v2143 = vpack.c.b16 %v1639, %v1631
    %v2144 = vpack.c.b16 %v1640, %v1632
    %v2145 = vpack.c.b16 %v1649, %v1641
    %v2146 = vpack.c.b16 %v1650, %v1642
    %v2147 = vpack.c.b16 %v1651, %v1643
    %v2148 = vpack.c.b16 %v1652, %v1644
    %v2149 = vpack.c.b16 %v1653, %v1645
    %v2150 = vpack.c.b16 %v1654, %v1646
    %v2151 = vpack.c.b16 %v1655, %v1647
    %v2152 = vpack.c.b16 %v1656, %v1648
    %v2153 = vpack.c.b16 %v1665, %v1657
    %v2154 = vpack.c.b16 %v1666, %v1658
    %v2155 = vpack.c.b16 %v1667, %v1659
    %v2156 = vpack.c.b16 %v1668, %v1660
    %v2157 = vpack.c.b16 %v1669, %v1661
    %v2158 = vpack.c.b16 %v1670, %v1662
    %v2159 = vpack.c.b16 %v1671, %v1663
    %v2160 = vpack.c.b16 %v1672, %v1664
    %v2161 = vpack.c.b16 %v1681, %v1673
    %v2162 = vpack.c.b16 %v1682, %v1674
    %v2163 = vpack.c.b16 %v1683, %v1675
    %v2164 = vpack.c.b16 %v1684, %v1676
    %v2165 = vpack.c.b16 %v1685, %v1677
    %v2166 = vpack.c.b16 %v1686, %v1678
    %v2167 = vpack.c.b16 %v1687, %v1679
    %v2168 = vpack.c.b16 %v1688, %v1680
    %v2169 = vpack.c.b16 %v1697, %v1689
    %v2170 = vpack.c.b16 %v1698, %v1690
    %v2171 = vpack.c.b16 %v1699, %v1691
    %v2172 = vpack.c.b16 %v1700, %v1692
    %v2173 = vpack.c.b16 %v1701, %v1693
    %v2174 = vpack.c.b16 %v1702, %v1694
    %v2175 = vpack.c.b16 %v1703, %v1695
    %v2176 = vpack.c.b16 %v1704, %v1696
    %v2177 = vpack.c.b16 %v1713, %v1705
    %v2178 = vpack.c.b16 %v1714, %v1706
    %v2179 = vpack.c.b16 %v1715, %v1707
    %v2180 = vpack.c.b16 %v1716, %v1708
    %v2181 = vpack.c.b16 %v1717, %v1709
    %v2182 = vpack.c.b16 %v1718, %v1710
    %v2183 = vpack.c.b16 %v1719, %v1711
    %v2184 = vpack.c.b16 %v1720, %v1712
    %v2185 = vpack.c.b16 %v1729, %v1721
    %v2186 = vpack.c.b16 %v1730, %v1722
    %v2187 = vpack.c.b16 %v1731, %v1723
    %v2188 = vpack.c.b16 %v1732, %v1724
    %v2189 = vpack.c.b16 %v1733, %v1725
    %v2190 = vpack.c.b16 %v1734, %v1726
    %v2191 = vpack.c.b16 %v1735, %v1727
    %v2192 = vpack.c.b16 %v1736, %v1728
    %v2193 = vpack.c.b16 %v1745, %v1737
    %v2194 = vpack.c.b16 %v1746, %v1738
    %v2195 = vpack.c.b16 %v1747, %v1739
    %v2196 = vpack.c.b16 %v1748, %v1740
    %v2197 = vpack.c.b16 %v1749, %v1741
    %v2198 = vpack.c.b16 %v1750, %v1742
    %v2199 = vpack.c.b16 %v1751, %v1743
    %v2200 = vpack.c.b16 %v1752, %v1744
    %v2201 = vpack.c.b16 %v1761, %v1753
    %v2202 = vpack.c.b16 %v1762, %v1754
    %v2203 = vpack.c.b16 %v1763, %v1755
    %v2204 = vpack.c.b16 %v1764, %v1756
    %v2205 = vpack.c.b16 %v1765, %v1757
    %v2206 = vpack.c.b16 %v1766, %v1758
    %v2207 = vpack.c.b16 %v1767, %v1759
    %v2208 = vpack.c.b16 %v1768, %v1760
    %v2209 = vpack.c.b16 %v1777, %v1769
    %v2210 = vpack.c.b16 %v1778, %v1770
    %v2211 = vpack.c.b16 %v1779, %v1771
    %v2212 = vpack.c.b16 %v1780, %v1772
    %v2213 = vpack.c.b16 %v1781, %v1773
    %v2214 = vpack.c.b16 %v1782, %v1774
    %v2215 = vpack.c.b16 %v1783, %v1775
    %v2216 = vpack.c.b16 %v1784, %v1776
    %v2217 = vpack.c.b16 %v1793, %v1785
    %v2218 = vpack.c.b16 %v1794, %v1786
    %v2219 = vpack.c.b16 %v1795, %v1787
    %v2220 = vpack.c.b16 %v1796, %v1788
    %v2221 = vpack.c.b16 %v1797, %v1789
    %v2222 = vpack.c.b16 %v1798, %v1790
    %v2223 = vpack.c.b16 %v1799, %v1791
    %v2224 = vpack.c.b16 %v1800, %v1792
    %v2225 = vpack.c.b16 %v1809, %v1801
    %v2226 = vpack.c.b16 %v1810, %v1802
    %v2227 = vpack.c.b16 %v1811, %v1803
    %v2228 = vpack.c.b16 %v1812, %v1804
    %v2229 = vpack.c.b16 %v1813, %v1805
    %v2230 = vpack.c.b16 %v1814, %v1806
    %v2231 = vpack.c.b16 %v1815, %v1807
    %v2232 = vpack.c.b16 %v1816, %v1808
    %v2233 = vpack.c.b16 %v1825, %v1817
    %v2234 = vpack.c.b16 %v1826, %v1818
    %v2235 = vpack.c.b16 %v1827, %v1819
    %v2236 = vpack.c.b16 %v1828, %v1820
    %v2237 = vpack.c.b16 %v1829, %v1821
    %v2238 = vpack.c.b16 %v1830, %v1822
    %v2239 = vpack.c.b16 %v1831, %v1823
    %v2240 = vpack.c.b16 %v1832, %v1824
    %v2241 = vpack.c.b16 %v1841, %v1833
    %v2242 = vpack.c.b16 %v1842, %v1834
    %v2243 = vpack.c.b16 %v1843, %v1835
    %v2244 = vpack.c.b16 %v1844, %v1836
    %v2245 = vpack.c.b16 %v1845, %v1837
    %v2246 = vpack.c.b16 %v1846, %v1838
    %v2247 = vpack.c.b16 %v1847, %v1839
    %v2248 = vpack.c.b16 %v1848, %v1840
    %v2249 = vpack.c.b16 %v1857, %v1849
    %v2250 = vpack.c.b16 %v1858, %v1850
    %v2251 = vpack.c.b16 %v1859, %v1851
    %v2252 = vpack.c.b16 %v1860, %v1852
    %v2253 = vpack.c.b16 %v1861, %v1853
    %v2254 = vpack.c.b16 %v1862, %v1854
    %v2255 = vpack.c.b16 %v1863, %v1855
    %v2256 = vpack.c.b16 %v1864, %v1856
    %vm2649 = vcmask 130048
    %v2651 = vsel %vm2649, %v682, 0
    %2653 = vmatpush.bf16.msra.mxu0 %v1921
    %2654 = vmatpush.bf16.msra.mxu0 %v1913
    %2655 = vmatpush.bf16.msra.mxu0 %v1905
    %2656 = vmatpush.bf16.msra.mxu0 %v1897
    %2657 = vmatpush.bf16.msra.mxu0 %v1889
    %2658 = vmatpush.bf16.msra.mxu0 %v1881
    %2659 = vmatpush.bf16.msra.mxu0 %v1873
    %2660 = vmatpush.bf16.msra.mxu0 %v1865
    %2661 = vmatmul.bf16.gmra.mxu0 %v676
    %v2662 = vpop.f32.mrf.mxu0
    %v2663 = vadd.f32 %v638, %v2662
    %v2664 = vpop.f32.mrf.mxu0
    %v2665 = vadd.f32 %v638, %v2664
    %2666 = vdwg.mxu0
    %2667 = vmatpush.bf16.msra.mxu0 %v1985
    %2668 = vmatpush.bf16.msra.mxu0 %v1977
    %2669 = vmatpush.bf16.msra.mxu0 %v1969
    %2670 = vmatpush.bf16.msra.mxu0 %v1961
    %2671 = vmatpush.bf16.msra.mxu0 %v1953
    %2672 = vmatpush.bf16.msra.mxu0 %v1945
    %2673 = vmatpush.bf16.msra.mxu0 %v1937
    %2674 = vmatpush.bf16.msra.mxu0 %v1929
    %2675 = vmatmul.bf16.gmra.mxu0 %v677
    %v2676 = vpop.f32.mrf.mxu0
    %v2677 = vadd.f32 %v2663, %v2676
    %v2678 = vpop.f32.mrf.mxu0
    %v2679 = vadd.f32 %v2665, %v2678
    %2680 = vdwg.mxu0
    %2681 = vmatpush.bf16.msra.mxu0 %v2049
    %2682 = vmatpush.bf16.msra.mxu0 %v2041
    %2683 = vmatpush.bf16.msra.mxu0 %v2033
    %2684 = vmatpush.bf16.msra.mxu0 %v2025
    %2685 = vmatpush.bf16.msra.mxu0 %v2017
    %2686 = vmatpush.bf16.msra.mxu0 %v2009
    %2687 = vmatpush.bf16.msra.mxu0 %v2001
    %2688 = vmatpush.bf16.msra.mxu0 %v1993
    %2689 = vmatmul.bf16.gmra.mxu0 %v678
    %v2690 = vpop.f32.mrf.mxu0
    %v2691 = vadd.f32 %v2677, %v2690
    %v2692 = vpop.f32.mrf.mxu0
    %v2693 = vadd.f32 %v2679, %v2692
    %2694 = vdwg.mxu0
    %2695 = vmatpush.bf16.msra.mxu0 %v2113
    %2696 = vmatpush.bf16.msra.mxu0 %v2105
    %2697 = vmatpush.bf16.msra.mxu0 %v2097
    %2698 = vmatpush.bf16.msra.mxu0 %v2089
    %2699 = vmatpush.bf16.msra.mxu0 %v2081
    %2700 = vmatpush.bf16.msra.mxu0 %v2073
    %2701 = vmatpush.bf16.msra.mxu0 %v2065
    %2702 = vmatpush.bf16.msra.mxu0 %v2057
    %2703 = vmatmul.bf16.gmra.mxu0 %v679
    %v2704 = vpop.f32.mrf.mxu0
    %v2705 = vadd.f32 %v2691, %v2704
    %v2706 = vpop.f32.mrf.mxu0
    %v2707 = vadd.f32 %v2693, %v2706
    %2708 = vdwg.mxu0
    %2709 = vmatpush.bf16.msra.mxu0 %v2177
    %2710 = vmatpush.bf16.msra.mxu0 %v2169
    %2711 = vmatpush.bf16.msra.mxu0 %v2161
    %2712 = vmatpush.bf16.msra.mxu0 %v2153
    %2713 = vmatpush.bf16.msra.mxu0 %v2145
    %2714 = vmatpush.bf16.msra.mxu0 %v2137
    %2715 = vmatpush.bf16.msra.mxu0 %v2129
    %2716 = vmatpush.bf16.msra.mxu0 %v2121
    %2717 = vmatmul.bf16.gmra.mxu0 %v680
    %v2718 = vpop.f32.mrf.mxu0
    %v2719 = vadd.f32 %v2705, %v2718
    %v2720 = vpop.f32.mrf.mxu0
    %v2721 = vadd.f32 %v2707, %v2720
    %2722 = vdwg.mxu0
    %2723 = vmatpush.bf16.msra.mxu0 %v2241
    %2724 = vmatpush.bf16.msra.mxu0 %v2233
    %2725 = vmatpush.bf16.msra.mxu0 %v2225
    %2726 = vmatpush.bf16.msra.mxu0 %v2217
    %2727 = vmatpush.bf16.msra.mxu0 %v2209
    %2728 = vmatpush.bf16.msra.mxu0 %v2201
    %2729 = vmatpush.bf16.msra.mxu0 %v2193
    %2730 = vmatpush.bf16.msra.mxu0 %v2185
    %2731 = vmatmul.bf16.gmra.mxu0 %v681
    %v2732 = vpop.f32.mrf.mxu0
    %v2733 = vadd.f32 %v2719, %v2732
    %v2734 = vpop.f32.mrf.mxu0
    %v2735 = vadd.f32 %v2721, %v2734
    %2736 = vdwg.mxu0
    %2737 = vmatpush.bf16.msra.mxu0 0
    %2738 = vmatpush.bf16.msra.mxu0 0
    %2739 = vmatpush.bf16.msra.mxu0 0
    %2740 = vmatpush.bf16.msra.mxu0 0
    %2741 = vmatpush.bf16.msra.mxu0 0
    %2742 = vmatpush.bf16.msra.mxu0 0
    %2743 = vmatpush.bf16.msra.mxu0 0
    %2744 = vmatpush.bf16.msra.mxu0 %v2249
    %2745 = vmatmul.bf16.gmra.mxu0 %v2651
    %v2746 = vpop.f32.mrf.mxu0
    %v2747 = vadd.f32 %v2733, %v2746
    %v2748 = vpop.f32.mrf.mxu0
    %v2749 = vadd.f32 %v2735, %v2748
    %2750 = vdwg.mxu0
    %2751 = vmatpush.bf16.msra.mxu0 %v1922
    %2752 = vmatpush.bf16.msra.mxu0 %v1914
    %2753 = vmatpush.bf16.msra.mxu0 %v1906
    %2754 = vmatpush.bf16.msra.mxu0 %v1898
    %2755 = vmatpush.bf16.msra.mxu0 %v1890
    %2756 = vmatpush.bf16.msra.mxu0 %v1882
    %2757 = vmatpush.bf16.msra.mxu0 %v1874
    %2758 = vmatpush.bf16.msra.mxu0 %v1866
    %2759 = vmatmul.bf16.gmra.mxu0 %v676
    %v2760 = vpop.f32.mrf.mxu0
    %v2761 = vadd.f32 %v639, %v2760
    %v2762 = vpop.f32.mrf.mxu0
    %v2763 = vadd.f32 %v639, %v2762
    %2764 = vdwg.mxu0
    %2765 = vmatpush.bf16.msra.mxu0 %v1986
    %2766 = vmatpush.bf16.msra.mxu0 %v1978
    %2767 = vmatpush.bf16.msra.mxu0 %v1970
    %2768 = vmatpush.bf16.msra.mxu0 %v1962
    %2769 = vmatpush.bf16.msra.mxu0 %v1954
    %2770 = vmatpush.bf16.msra.mxu0 %v1946
    %2771 = vmatpush.bf16.msra.mxu0 %v1938
    %2772 = vmatpush.bf16.msra.mxu0 %v1930
    %2773 = vmatmul.bf16.gmra.mxu0 %v677
    %v2774 = vpop.f32.mrf.mxu0
    %v2775 = vadd.f32 %v2761, %v2774
    %v2776 = vpop.f32.mrf.mxu0
    %v2777 = vadd.f32 %v2763, %v2776
    %2778 = vdwg.mxu0
    %2779 = vmatpush.bf16.msra.mxu0 %v2050
    %2780 = vmatpush.bf16.msra.mxu0 %v2042
    %2781 = vmatpush.bf16.msra.mxu0 %v2034
    %2782 = vmatpush.bf16.msra.mxu0 %v2026
    %2783 = vmatpush.bf16.msra.mxu0 %v2018
    %2784 = vmatpush.bf16.msra.mxu0 %v2010
    %2785 = vmatpush.bf16.msra.mxu0 %v2002
    %2786 = vmatpush.bf16.msra.mxu0 %v1994
    %2787 = vmatmul.bf16.gmra.mxu0 %v678
    %v2788 = vpop.f32.mrf.mxu0
    %v2789 = vadd.f32 %v2775, %v2788
    %v2790 = vpop.f32.mrf.mxu0
    %v2791 = vadd.f32 %v2777, %v2790
    %2792 = vdwg.mxu0
    %2793 = vmatpush.bf16.msra.mxu0 %v2114
    %2794 = vmatpush.bf16.msra.mxu0 %v2106
    %2795 = vmatpush.bf16.msra.mxu0 %v2098
    %2796 = vmatpush.bf16.msra.mxu0 %v2090
    %2797 = vmatpush.bf16.msra.mxu0 %v2082
    %2798 = vmatpush.bf16.msra.mxu0 %v2074
    %2799 = vmatpush.bf16.msra.mxu0 %v2066
    %2800 = vmatpush.bf16.msra.mxu0 %v2058
    %2801 = vmatmul.bf16.gmra.mxu0 %v679
    %v2802 = vpop.f32.mrf.mxu0
    %v2803 = vadd.f32 %v2789, %v2802
    %v2804 = vpop.f32.mrf.mxu0
    %v2805 = vadd.f32 %v2791, %v2804
    %2806 = vdwg.mxu0
    %2807 = vmatpush.bf16.msra.mxu0 %v2178
    %2808 = vmatpush.bf16.msra.mxu0 %v2170
    %2809 = vmatpush.bf16.msra.mxu0 %v2162
    %2810 = vmatpush.bf16.msra.mxu0 %v2154
    %2811 = vmatpush.bf16.msra.mxu0 %v2146
    %2812 = vmatpush.bf16.msra.mxu0 %v2138
    %2813 = vmatpush.bf16.msra.mxu0 %v2130
    %2814 = vmatpush.bf16.msra.mxu0 %v2122
    %2815 = vmatmul.bf16.gmra.mxu0 %v680
    %v2816 = vpop.f32.mrf.mxu0
    %v2817 = vadd.f32 %v2803, %v2816
    %v2818 = vpop.f32.mrf.mxu0
    %v2819 = vadd.f32 %v2805, %v2818
    %2820 = vdwg.mxu0
    %2821 = vmatpush.bf16.msra.mxu0 %v2242
    %2822 = vmatpush.bf16.msra.mxu0 %v2234
    %2823 = vmatpush.bf16.msra.mxu0 %v2226
    %2824 = vmatpush.bf16.msra.mxu0 %v2218
    %2825 = vmatpush.bf16.msra.mxu0 %v2210
    %2826 = vmatpush.bf16.msra.mxu0 %v2202
    %2827 = vmatpush.bf16.msra.mxu0 %v2194
    %2828 = vmatpush.bf16.msra.mxu0 %v2186
    %2829 = vmatmul.bf16.gmra.mxu0 %v681
    %v2830 = vpop.f32.mrf.mxu0
    %v2831 = vadd.f32 %v2817, %v2830
    %v2832 = vpop.f32.mrf.mxu0
    %v2833 = vadd.f32 %v2819, %v2832
    %2834 = vdwg.mxu0
    %2835 = vmatpush.bf16.msra.mxu0 0
    %2836 = vmatpush.bf16.msra.mxu0 0
    %2837 = vmatpush.bf16.msra.mxu0 0
    %2838 = vmatpush.bf16.msra.mxu0 0
    %2839 = vmatpush.bf16.msra.mxu0 0
    %2840 = vmatpush.bf16.msra.mxu0 0
    %2841 = vmatpush.bf16.msra.mxu0 0
    %2842 = vmatpush.bf16.msra.mxu0 %v2250
    %2843 = vmatmul.bf16.gmra.mxu0 %v2651
    %v2844 = vpop.f32.mrf.mxu0
    %v2845 = vadd.f32 %v2831, %v2844
    %v2846 = vpop.f32.mrf.mxu0
    %v2847 = vadd.f32 %v2833, %v2846
    %2848 = vdwg.mxu0
    %2849 = vmatpush.bf16.msra.mxu0 %v1923
    %2850 = vmatpush.bf16.msra.mxu0 %v1915
    %2851 = vmatpush.bf16.msra.mxu0 %v1907
    %2852 = vmatpush.bf16.msra.mxu0 %v1899
    %2853 = vmatpush.bf16.msra.mxu0 %v1891
    %2854 = vmatpush.bf16.msra.mxu0 %v1883
    %2855 = vmatpush.bf16.msra.mxu0 %v1875
    %2856 = vmatpush.bf16.msra.mxu0 %v1867
    %2857 = vmatmul.bf16.gmra.mxu0 %v676
    %v2858 = vpop.f32.mrf.mxu0
    %v2859 = vadd.f32 %v640, %v2858
    %v2860 = vpop.f32.mrf.mxu0
    %v2861 = vadd.f32 %v640, %v2860
    %2862 = vdwg.mxu0
    %2863 = vmatpush.bf16.msra.mxu0 %v1987
    %2864 = vmatpush.bf16.msra.mxu0 %v1979
    %2865 = vmatpush.bf16.msra.mxu0 %v1971
    %2866 = vmatpush.bf16.msra.mxu0 %v1963
    %2867 = vmatpush.bf16.msra.mxu0 %v1955
    %2868 = vmatpush.bf16.msra.mxu0 %v1947
    %2869 = vmatpush.bf16.msra.mxu0 %v1939
    %2870 = vmatpush.bf16.msra.mxu0 %v1931
    %2871 = vmatmul.bf16.gmra.mxu0 %v677
    %v2872 = vpop.f32.mrf.mxu0
    %v2873 = vadd.f32 %v2859, %v2872
    %v2874 = vpop.f32.mrf.mxu0
    %v2875 = vadd.f32 %v2861, %v2874
    %2876 = vdwg.mxu0
    %2877 = vmatpush.bf16.msra.mxu0 %v2051
    %2878 = vmatpush.bf16.msra.mxu0 %v2043
    %2879 = vmatpush.bf16.msra.mxu0 %v2035
    %2880 = vmatpush.bf16.msra.mxu0 %v2027
    %2881 = vmatpush.bf16.msra.mxu0 %v2019
    %2882 = vmatpush.bf16.msra.mxu0 %v2011
    %2883 = vmatpush.bf16.msra.mxu0 %v2003
    %2884 = vmatpush.bf16.msra.mxu0 %v1995
    %2885 = vmatmul.bf16.gmra.mxu0 %v678
    %v2886 = vpop.f32.mrf.mxu0
    %v2887 = vadd.f32 %v2873, %v2886
    %v2888 = vpop.f32.mrf.mxu0
    %v2889 = vadd.f32 %v2875, %v2888
    %2890 = vdwg.mxu0
    %2891 = vmatpush.bf16.msra.mxu0 %v2115
    %2892 = vmatpush.bf16.msra.mxu0 %v2107
    %2893 = vmatpush.bf16.msra.mxu0 %v2099
    %2894 = vmatpush.bf16.msra.mxu0 %v2091
    %2895 = vmatpush.bf16.msra.mxu0 %v2083
    %2896 = vmatpush.bf16.msra.mxu0 %v2075
    %2897 = vmatpush.bf16.msra.mxu0 %v2067
    %2898 = vmatpush.bf16.msra.mxu0 %v2059
    %2899 = vmatmul.bf16.gmra.mxu0 %v679
    %v2900 = vpop.f32.mrf.mxu0
    %v2901 = vadd.f32 %v2887, %v2900
    %v2902 = vpop.f32.mrf.mxu0
    %v2903 = vadd.f32 %v2889, %v2902
    %2904 = vdwg.mxu0
    %2905 = vmatpush.bf16.msra.mxu0 %v2179
    %2906 = vmatpush.bf16.msra.mxu0 %v2171
    %2907 = vmatpush.bf16.msra.mxu0 %v2163
    %2908 = vmatpush.bf16.msra.mxu0 %v2155
    %2909 = vmatpush.bf16.msra.mxu0 %v2147
    %2910 = vmatpush.bf16.msra.mxu0 %v2139
    %2911 = vmatpush.bf16.msra.mxu0 %v2131
    %2912 = vmatpush.bf16.msra.mxu0 %v2123
    %2913 = vmatmul.bf16.gmra.mxu0 %v680
    %v2914 = vpop.f32.mrf.mxu0
    %v2915 = vadd.f32 %v2901, %v2914
    %v2916 = vpop.f32.mrf.mxu0
    %v2917 = vadd.f32 %v2903, %v2916
    %2918 = vdwg.mxu0
    %2919 = vmatpush.bf16.msra.mxu0 %v2243
    %2920 = vmatpush.bf16.msra.mxu0 %v2235
    %2921 = vmatpush.bf16.msra.mxu0 %v2227
    %2922 = vmatpush.bf16.msra.mxu0 %v2219
    %2923 = vmatpush.bf16.msra.mxu0 %v2211
    %2924 = vmatpush.bf16.msra.mxu0 %v2203
    %2925 = vmatpush.bf16.msra.mxu0 %v2195
    %2926 = vmatpush.bf16.msra.mxu0 %v2187
    %2927 = vmatmul.bf16.gmra.mxu0 %v681
    %v2928 = vpop.f32.mrf.mxu0
    %v2929 = vadd.f32 %v2915, %v2928
    %v2930 = vpop.f32.mrf.mxu0
    %v2931 = vadd.f32 %v2917, %v2930
    %2932 = vdwg.mxu0
    %2933 = vmatpush.bf16.msra.mxu0 0
    %2934 = vmatpush.bf16.msra.mxu0 0
    %2935 = vmatpush.bf16.msra.mxu0 0
    %2936 = vmatpush.bf16.msra.mxu0 0
    %2937 = vmatpush.bf16.msra.mxu0 0
    %2938 = vmatpush.bf16.msra.mxu0 0
    %2939 = vmatpush.bf16.msra.mxu0 0
    %2940 = vmatpush.bf16.msra.mxu0 %v2251
    %2941 = vmatmul.bf16.gmra.mxu0 %v2651
    %v2942 = vpop.f32.mrf.mxu0
    %v2943 = vadd.f32 %v2929, %v2942
    %v2944 = vpop.f32.mrf.mxu0
    %v2945 = vadd.f32 %v2931, %v2944
    %2946 = vdwg.mxu0
    %2947 = vmatpush.bf16.msra.mxu0 %v1924
    %2948 = vmatpush.bf16.msra.mxu0 %v1916
    %2949 = vmatpush.bf16.msra.mxu0 %v1908
    %2950 = vmatpush.bf16.msra.mxu0 %v1900
    %2951 = vmatpush.bf16.msra.mxu0 %v1892
    %2952 = vmatpush.bf16.msra.mxu0 %v1884
    %2953 = vmatpush.bf16.msra.mxu0 %v1876
    %2954 = vmatpush.bf16.msra.mxu0 %v1868
    %2955 = vmatmul.bf16.gmra.mxu0 %v676
    %v2956 = vpop.f32.mrf.mxu0
    %v2957 = vadd.f32 %v641, %v2956
    %v2958 = vpop.f32.mrf.mxu0
    %v2959 = vadd.f32 %v641, %v2958
    %2960 = vdwg.mxu0
    %2961 = vmatpush.bf16.msra.mxu0 %v1988
    %2962 = vmatpush.bf16.msra.mxu0 %v1980
    %2963 = vmatpush.bf16.msra.mxu0 %v1972
    %2964 = vmatpush.bf16.msra.mxu0 %v1964
    %2965 = vmatpush.bf16.msra.mxu0 %v1956
    %2966 = vmatpush.bf16.msra.mxu0 %v1948
    %2967 = vmatpush.bf16.msra.mxu0 %v1940
    %2968 = vmatpush.bf16.msra.mxu0 %v1932
    %2969 = vmatmul.bf16.gmra.mxu0 %v677
    %v2970 = vpop.f32.mrf.mxu0
    %v2971 = vadd.f32 %v2957, %v2970
    %v2972 = vpop.f32.mrf.mxu0
    %v2973 = vadd.f32 %v2959, %v2972
    %2974 = vdwg.mxu0
    %2975 = vmatpush.bf16.msra.mxu0 %v2052
    %2976 = vmatpush.bf16.msra.mxu0 %v2044
    %2977 = vmatpush.bf16.msra.mxu0 %v2036
    %2978 = vmatpush.bf16.msra.mxu0 %v2028
    %2979 = vmatpush.bf16.msra.mxu0 %v2020
    %2980 = vmatpush.bf16.msra.mxu0 %v2012
    %2981 = vmatpush.bf16.msra.mxu0 %v2004
    %2982 = vmatpush.bf16.msra.mxu0 %v1996
    %2983 = vmatmul.bf16.gmra.mxu0 %v678
    %v2984 = vpop.f32.mrf.mxu0
    %v2985 = vadd.f32 %v2971, %v2984
    %v2986 = vpop.f32.mrf.mxu0
    %v2987 = vadd.f32 %v2973, %v2986
    %2988 = vdwg.mxu0
    %2989 = vmatpush.bf16.msra.mxu0 %v2116
    %2990 = vmatpush.bf16.msra.mxu0 %v2108
    %2991 = vmatpush.bf16.msra.mxu0 %v2100
    %2992 = vmatpush.bf16.msra.mxu0 %v2092
    %2993 = vmatpush.bf16.msra.mxu0 %v2084
    %2994 = vmatpush.bf16.msra.mxu0 %v2076
    %2995 = vmatpush.bf16.msra.mxu0 %v2068
    %2996 = vmatpush.bf16.msra.mxu0 %v2060
    %2997 = vmatmul.bf16.gmra.mxu0 %v679
    %v2998 = vpop.f32.mrf.mxu0
    %v2999 = vadd.f32 %v2985, %v2998
    %v3000 = vpop.f32.mrf.mxu0
    %v3001 = vadd.f32 %v2987, %v3000
    %3002 = vdwg.mxu0
    %3003 = vmatpush.bf16.msra.mxu0 %v2180
    %3004 = vmatpush.bf16.msra.mxu0 %v2172
    %3005 = vmatpush.bf16.msra.mxu0 %v2164
    %3006 = vmatpush.bf16.msra.mxu0 %v2156
    %3007 = vmatpush.bf16.msra.mxu0 %v2148
    %3008 = vmatpush.bf16.msra.mxu0 %v2140
    %3009 = vmatpush.bf16.msra.mxu0 %v2132
    %3010 = vmatpush.bf16.msra.mxu0 %v2124
    %3011 = vmatmul.bf16.gmra.mxu0 %v680
    %v3012 = vpop.f32.mrf.mxu0
    %v3013 = vadd.f32 %v2999, %v3012
    %v3014 = vpop.f32.mrf.mxu0
    %v3015 = vadd.f32 %v3001, %v3014
    %3016 = vdwg.mxu0
    %3017 = vmatpush.bf16.msra.mxu0 %v2244
    %3018 = vmatpush.bf16.msra.mxu0 %v2236
    %3019 = vmatpush.bf16.msra.mxu0 %v2228
    %3020 = vmatpush.bf16.msra.mxu0 %v2220
    %3021 = vmatpush.bf16.msra.mxu0 %v2212
    %3022 = vmatpush.bf16.msra.mxu0 %v2204
    %3023 = vmatpush.bf16.msra.mxu0 %v2196
    %3024 = vmatpush.bf16.msra.mxu0 %v2188
    %3025 = vmatmul.bf16.gmra.mxu0 %v681
    %v3026 = vpop.f32.mrf.mxu0
    %v3027 = vadd.f32 %v3013, %v3026
    %v3028 = vpop.f32.mrf.mxu0
    %v3029 = vadd.f32 %v3015, %v3028
    %3030 = vdwg.mxu0
    %3031 = vmatpush.bf16.msra.mxu0 0
    %3032 = vmatpush.bf16.msra.mxu0 0
    %3033 = vmatpush.bf16.msra.mxu0 0
    %3034 = vmatpush.bf16.msra.mxu0 0
    %3035 = vmatpush.bf16.msra.mxu0 0
    %3036 = vmatpush.bf16.msra.mxu0 0
    %3037 = vmatpush.bf16.msra.mxu0 0
    %3038 = vmatpush.bf16.msra.mxu0 %v2252
    %3039 = vmatmul.bf16.gmra.mxu0 %v2651
    %v3040 = vpop.f32.mrf.mxu0
    %v3041 = vadd.f32 %v3027, %v3040
    %v3042 = vpop.f32.mrf.mxu0
    %v3043 = vadd.f32 %v3029, %v3042
    %3044 = vdwg.mxu0
    %3045 = vmatpush.bf16.msra.mxu0 %v1925
    %3046 = vmatpush.bf16.msra.mxu0 %v1917
    %3047 = vmatpush.bf16.msra.mxu0 %v1909
    %3048 = vmatpush.bf16.msra.mxu0 %v1901
    %3049 = vmatpush.bf16.msra.mxu0 %v1893
    %3050 = vmatpush.bf16.msra.mxu0 %v1885
    %3051 = vmatpush.bf16.msra.mxu0 %v1877
    %3052 = vmatpush.bf16.msra.mxu0 %v1869
    %3053 = vmatmul.bf16.gmra.mxu0 %v676
    %v3054 = vpop.f32.mrf.mxu0
    %v3055 = vadd.f32 %v642, %v3054
    %v3056 = vpop.f32.mrf.mxu0
    %v3057 = vadd.f32 %v642, %v3056
    %3058 = vdwg.mxu0
    %3059 = vmatpush.bf16.msra.mxu0 %v1989
    %3060 = vmatpush.bf16.msra.mxu0 %v1981
    %3061 = vmatpush.bf16.msra.mxu0 %v1973
    %3062 = vmatpush.bf16.msra.mxu0 %v1965
    %3063 = vmatpush.bf16.msra.mxu0 %v1957
    %3064 = vmatpush.bf16.msra.mxu0 %v1949
    %3065 = vmatpush.bf16.msra.mxu0 %v1941
    %3066 = vmatpush.bf16.msra.mxu0 %v1933
    %3067 = vmatmul.bf16.gmra.mxu0 %v677
    %v3068 = vpop.f32.mrf.mxu0
    %v3069 = vadd.f32 %v3055, %v3068
    %v3070 = vpop.f32.mrf.mxu0
    %v3071 = vadd.f32 %v3057, %v3070
    %3072 = vdwg.mxu0
    %3073 = vmatpush.bf16.msra.mxu0 %v2053
    %3074 = vmatpush.bf16.msra.mxu0 %v2045
    %3075 = vmatpush.bf16.msra.mxu0 %v2037
    %3076 = vmatpush.bf16.msra.mxu0 %v2029
    %3077 = vmatpush.bf16.msra.mxu0 %v2021
    %3078 = vmatpush.bf16.msra.mxu0 %v2013
    %3079 = vmatpush.bf16.msra.mxu0 %v2005
    %3080 = vmatpush.bf16.msra.mxu0 %v1997
    %3081 = vmatmul.bf16.gmra.mxu0 %v678
    %v3082 = vpop.f32.mrf.mxu0
    %v3083 = vadd.f32 %v3069, %v3082
    %v3084 = vpop.f32.mrf.mxu0
    %v3085 = vadd.f32 %v3071, %v3084
    %3086 = vdwg.mxu0
    %3087 = vmatpush.bf16.msra.mxu0 %v2117
    %3088 = vmatpush.bf16.msra.mxu0 %v2109
    %3089 = vmatpush.bf16.msra.mxu0 %v2101
    %3090 = vmatpush.bf16.msra.mxu0 %v2093
    %3091 = vmatpush.bf16.msra.mxu0 %v2085
    %3092 = vmatpush.bf16.msra.mxu0 %v2077
    %3093 = vmatpush.bf16.msra.mxu0 %v2069
    %3094 = vmatpush.bf16.msra.mxu0 %v2061
    %3095 = vmatmul.bf16.gmra.mxu0 %v679
    %v3096 = vpop.f32.mrf.mxu0
    %v3097 = vadd.f32 %v3083, %v3096
    %v3098 = vpop.f32.mrf.mxu0
    %v3099 = vadd.f32 %v3085, %v3098
    %3100 = vdwg.mxu0
    %3101 = vmatpush.bf16.msra.mxu0 %v2181
    %3102 = vmatpush.bf16.msra.mxu0 %v2173
    %3103 = vmatpush.bf16.msra.mxu0 %v2165
    %3104 = vmatpush.bf16.msra.mxu0 %v2157
    %3105 = vmatpush.bf16.msra.mxu0 %v2149
    %3106 = vmatpush.bf16.msra.mxu0 %v2141
    %3107 = vmatpush.bf16.msra.mxu0 %v2133
    %3108 = vmatpush.bf16.msra.mxu0 %v2125
    %3109 = vmatmul.bf16.gmra.mxu0 %v680
    %v3110 = vpop.f32.mrf.mxu0
    %v3111 = vadd.f32 %v3097, %v3110
    %v3112 = vpop.f32.mrf.mxu0
    %v3113 = vadd.f32 %v3099, %v3112
    %3114 = vdwg.mxu0
    %3115 = vmatpush.bf16.msra.mxu0 %v2245
    %3116 = vmatpush.bf16.msra.mxu0 %v2237
    %3117 = vmatpush.bf16.msra.mxu0 %v2229
    %3118 = vmatpush.bf16.msra.mxu0 %v2221
    %3119 = vmatpush.bf16.msra.mxu0 %v2213
    %3120 = vmatpush.bf16.msra.mxu0 %v2205
    %3121 = vmatpush.bf16.msra.mxu0 %v2197
    %3122 = vmatpush.bf16.msra.mxu0 %v2189
    %3123 = vmatmul.bf16.gmra.mxu0 %v681
    %v3124 = vpop.f32.mrf.mxu0
    %v3125 = vadd.f32 %v3111, %v3124
    %v3126 = vpop.f32.mrf.mxu0
    %v3127 = vadd.f32 %v3113, %v3126
    %3128 = vdwg.mxu0
    %3129 = vmatpush.bf16.msra.mxu0 0
    %3130 = vmatpush.bf16.msra.mxu0 0
    %3131 = vmatpush.bf16.msra.mxu0 0
    %3132 = vmatpush.bf16.msra.mxu0 0
    %3133 = vmatpush.bf16.msra.mxu0 0
    %3134 = vmatpush.bf16.msra.mxu0 0
    %3135 = vmatpush.bf16.msra.mxu0 0
    %3136 = vmatpush.bf16.msra.mxu0 %v2253
    %3137 = vmatmul.bf16.gmra.mxu0 %v2651
    %v3138 = vpop.f32.mrf.mxu0
    %v3139 = vadd.f32 %v3125, %v3138
    %v3140 = vpop.f32.mrf.mxu0
    %v3141 = vadd.f32 %v3127, %v3140
    %3142 = vdwg.mxu0
    %3143 = vmatpush.bf16.msra.mxu0 %v1926
    %3144 = vmatpush.bf16.msra.mxu0 %v1918
    %3145 = vmatpush.bf16.msra.mxu0 %v1910
    %3146 = vmatpush.bf16.msra.mxu0 %v1902
    %3147 = vmatpush.bf16.msra.mxu0 %v1894
    %3148 = vmatpush.bf16.msra.mxu0 %v1886
    %3149 = vmatpush.bf16.msra.mxu0 %v1878
    %3150 = vmatpush.bf16.msra.mxu0 %v1870
    %3151 = vmatmul.bf16.gmra.mxu0 %v676
    %v3152 = vpop.f32.mrf.mxu0
    %v3153 = vadd.f32 %v643, %v3152
    %v3154 = vpop.f32.mrf.mxu0
    %v3155 = vadd.f32 %v643, %v3154
    %3156 = vdwg.mxu0
    %3157 = vmatpush.bf16.msra.mxu0 %v1990
    %3158 = vmatpush.bf16.msra.mxu0 %v1982
    %3159 = vmatpush.bf16.msra.mxu0 %v1974
    %3160 = vmatpush.bf16.msra.mxu0 %v1966
    %3161 = vmatpush.bf16.msra.mxu0 %v1958
    %3162 = vmatpush.bf16.msra.mxu0 %v1950
    %3163 = vmatpush.bf16.msra.mxu0 %v1942
    %3164 = vmatpush.bf16.msra.mxu0 %v1934
    %3165 = vmatmul.bf16.gmra.mxu0 %v677
    %v3166 = vpop.f32.mrf.mxu0
    %v3167 = vadd.f32 %v3153, %v3166
    %v3168 = vpop.f32.mrf.mxu0
    %v3169 = vadd.f32 %v3155, %v3168
    %3170 = vdwg.mxu0
    %3171 = vmatpush.bf16.msra.mxu0 %v2054
    %3172 = vmatpush.bf16.msra.mxu0 %v2046
    %3173 = vmatpush.bf16.msra.mxu0 %v2038
    %3174 = vmatpush.bf16.msra.mxu0 %v2030
    %3175 = vmatpush.bf16.msra.mxu0 %v2022
    %3176 = vmatpush.bf16.msra.mxu0 %v2014
    %3177 = vmatpush.bf16.msra.mxu0 %v2006
    %3178 = vmatpush.bf16.msra.mxu0 %v1998
    %3179 = vmatmul.bf16.gmra.mxu0 %v678
    %v3180 = vpop.f32.mrf.mxu0
    %v3181 = vadd.f32 %v3167, %v3180
    %v3182 = vpop.f32.mrf.mxu0
    %v3183 = vadd.f32 %v3169, %v3182
    %3184 = vdwg.mxu0
    %3185 = vmatpush.bf16.msra.mxu0 %v2118
    %3186 = vmatpush.bf16.msra.mxu0 %v2110
    %3187 = vmatpush.bf16.msra.mxu0 %v2102
    %3188 = vmatpush.bf16.msra.mxu0 %v2094
    %3189 = vmatpush.bf16.msra.mxu0 %v2086
    %3190 = vmatpush.bf16.msra.mxu0 %v2078
    %3191 = vmatpush.bf16.msra.mxu0 %v2070
    %3192 = vmatpush.bf16.msra.mxu0 %v2062
    %3193 = vmatmul.bf16.gmra.mxu0 %v679
    %v3194 = vpop.f32.mrf.mxu0
    %v3195 = vadd.f32 %v3181, %v3194
    %v3196 = vpop.f32.mrf.mxu0
    %v3197 = vadd.f32 %v3183, %v3196
    %3198 = vdwg.mxu0
    %3199 = vmatpush.bf16.msra.mxu0 %v2182
    %3200 = vmatpush.bf16.msra.mxu0 %v2174
    %3201 = vmatpush.bf16.msra.mxu0 %v2166
    %3202 = vmatpush.bf16.msra.mxu0 %v2158
    %3203 = vmatpush.bf16.msra.mxu0 %v2150
    %3204 = vmatpush.bf16.msra.mxu0 %v2142
    %3205 = vmatpush.bf16.msra.mxu0 %v2134
    %3206 = vmatpush.bf16.msra.mxu0 %v2126
    %3207 = vmatmul.bf16.gmra.mxu0 %v680
    %v3208 = vpop.f32.mrf.mxu0
    %v3209 = vadd.f32 %v3195, %v3208
    %v3210 = vpop.f32.mrf.mxu0
    %v3211 = vadd.f32 %v3197, %v3210
    %3212 = vdwg.mxu0
    %3213 = vmatpush.bf16.msra.mxu0 %v2246
    %3214 = vmatpush.bf16.msra.mxu0 %v2238
    %3215 = vmatpush.bf16.msra.mxu0 %v2230
    %3216 = vmatpush.bf16.msra.mxu0 %v2222
    %3217 = vmatpush.bf16.msra.mxu0 %v2214
    %3218 = vmatpush.bf16.msra.mxu0 %v2206
    %3219 = vmatpush.bf16.msra.mxu0 %v2198
    %3220 = vmatpush.bf16.msra.mxu0 %v2190
    %3221 = vmatmul.bf16.gmra.mxu0 %v681
    %v3222 = vpop.f32.mrf.mxu0
    %v3223 = vadd.f32 %v3209, %v3222
    %v3224 = vpop.f32.mrf.mxu0
    %v3225 = vadd.f32 %v3211, %v3224
    %3226 = vdwg.mxu0
    %3227 = vmatpush.bf16.msra.mxu0 0
    %3228 = vmatpush.bf16.msra.mxu0 0
    %3229 = vmatpush.bf16.msra.mxu0 0
    %3230 = vmatpush.bf16.msra.mxu0 0
    %3231 = vmatpush.bf16.msra.mxu0 0
    %3232 = vmatpush.bf16.msra.mxu0 0
    %3233 = vmatpush.bf16.msra.mxu0 0
    %3234 = vmatpush.bf16.msra.mxu0 %v2254
    %3235 = vmatmul.bf16.gmra.mxu0 %v2651
    %v3236 = vpop.f32.mrf.mxu0
    %v3237 = vadd.f32 %v3223, %v3236
    %v3238 = vpop.f32.mrf.mxu0
    %v3239 = vadd.f32 %v3225, %v3238
    %3240 = vdwg.mxu0
    %3241 = vmatpush.bf16.msra.mxu0 %v1927
    %3242 = vmatpush.bf16.msra.mxu0 %v1919
    %3243 = vmatpush.bf16.msra.mxu0 %v1911
    %3244 = vmatpush.bf16.msra.mxu0 %v1903
    %3245 = vmatpush.bf16.msra.mxu0 %v1895
    %3246 = vmatpush.bf16.msra.mxu0 %v1887
    %3247 = vmatpush.bf16.msra.mxu0 %v1879
    %3248 = vmatpush.bf16.msra.mxu0 %v1871
    %3249 = vmatmul.bf16.gmra.mxu0 %v676
    %v3250 = vpop.f32.mrf.mxu0
    %v3251 = vadd.f32 %v644, %v3250
    %v3252 = vpop.f32.mrf.mxu0
    %v3253 = vadd.f32 %v644, %v3252
    %3254 = vdwg.mxu0
    %3255 = vmatpush.bf16.msra.mxu0 %v1991
    %3256 = vmatpush.bf16.msra.mxu0 %v1983
    %3257 = vmatpush.bf16.msra.mxu0 %v1975
    %3258 = vmatpush.bf16.msra.mxu0 %v1967
    %3259 = vmatpush.bf16.msra.mxu0 %v1959
    %3260 = vmatpush.bf16.msra.mxu0 %v1951
    %3261 = vmatpush.bf16.msra.mxu0 %v1943
    %3262 = vmatpush.bf16.msra.mxu0 %v1935
    %3263 = vmatmul.bf16.gmra.mxu0 %v677
    %v3264 = vpop.f32.mrf.mxu0
    %v3265 = vadd.f32 %v3251, %v3264
    %v3266 = vpop.f32.mrf.mxu0
    %v3267 = vadd.f32 %v3253, %v3266
    %3268 = vdwg.mxu0
    %3269 = vmatpush.bf16.msra.mxu0 %v2055
    %3270 = vmatpush.bf16.msra.mxu0 %v2047
    %3271 = vmatpush.bf16.msra.mxu0 %v2039
    %3272 = vmatpush.bf16.msra.mxu0 %v2031
    %3273 = vmatpush.bf16.msra.mxu0 %v2023
    %3274 = vmatpush.bf16.msra.mxu0 %v2015
    %3275 = vmatpush.bf16.msra.mxu0 %v2007
    %3276 = vmatpush.bf16.msra.mxu0 %v1999
    %3277 = vmatmul.bf16.gmra.mxu0 %v678
    %v3278 = vpop.f32.mrf.mxu0
    %v3279 = vadd.f32 %v3265, %v3278
    %v3280 = vpop.f32.mrf.mxu0
    %v3281 = vadd.f32 %v3267, %v3280
    %3282 = vdwg.mxu0
    %3283 = vmatpush.bf16.msra.mxu0 %v2119
    %3284 = vmatpush.bf16.msra.mxu0 %v2111
    %3285 = vmatpush.bf16.msra.mxu0 %v2103
    %3286 = vmatpush.bf16.msra.mxu0 %v2095
    %3287 = vmatpush.bf16.msra.mxu0 %v2087
    %3288 = vmatpush.bf16.msra.mxu0 %v2079
    %3289 = vmatpush.bf16.msra.mxu0 %v2071
    %3290 = vmatpush.bf16.msra.mxu0 %v2063
    %3291 = vmatmul.bf16.gmra.mxu0 %v679
    %v3292 = vpop.f32.mrf.mxu0
    %v3293 = vadd.f32 %v3279, %v3292
    %v3294 = vpop.f32.mrf.mxu0
    %v3295 = vadd.f32 %v3281, %v3294
    %3296 = vdwg.mxu0
    %3297 = vmatpush.bf16.msra.mxu0 %v2183
    %3298 = vmatpush.bf16.msra.mxu0 %v2175
    %3299 = vmatpush.bf16.msra.mxu0 %v2167
    %3300 = vmatpush.bf16.msra.mxu0 %v2159
    %3301 = vmatpush.bf16.msra.mxu0 %v2151
    %3302 = vmatpush.bf16.msra.mxu0 %v2143
    %3303 = vmatpush.bf16.msra.mxu0 %v2135
    %3304 = vmatpush.bf16.msra.mxu0 %v2127
    %3305 = vmatmul.bf16.gmra.mxu0 %v680
    %v3306 = vpop.f32.mrf.mxu0
    %v3307 = vadd.f32 %v3293, %v3306
    %v3308 = vpop.f32.mrf.mxu0
    %v3309 = vadd.f32 %v3295, %v3308
    %3310 = vdwg.mxu0
    %3311 = vmatpush.bf16.msra.mxu0 %v2247
    %3312 = vmatpush.bf16.msra.mxu0 %v2239
    %3313 = vmatpush.bf16.msra.mxu0 %v2231
    %3314 = vmatpush.bf16.msra.mxu0 %v2223
    %3315 = vmatpush.bf16.msra.mxu0 %v2215
    %3316 = vmatpush.bf16.msra.mxu0 %v2207
    %3317 = vmatpush.bf16.msra.mxu0 %v2199
    %3318 = vmatpush.bf16.msra.mxu0 %v2191
    %3319 = vmatmul.bf16.gmra.mxu0 %v681
    %v3320 = vpop.f32.mrf.mxu0
    %v3321 = vadd.f32 %v3307, %v3320
    %v3322 = vpop.f32.mrf.mxu0
    %v3323 = vadd.f32 %v3309, %v3322
    %3324 = vdwg.mxu0
    %3325 = vmatpush.bf16.msra.mxu0 0
    %3326 = vmatpush.bf16.msra.mxu0 0
    %3327 = vmatpush.bf16.msra.mxu0 0
    %3328 = vmatpush.bf16.msra.mxu0 0
    %3329 = vmatpush.bf16.msra.mxu0 0
    %3330 = vmatpush.bf16.msra.mxu0 0
    %3331 = vmatpush.bf16.msra.mxu0 0
    %3332 = vmatpush.bf16.msra.mxu0 %v2255
    %3333 = vmatmul.bf16.gmra.mxu0 %v2651
    %v3334 = vpop.f32.mrf.mxu0
    %v3335 = vadd.f32 %v3321, %v3334
    %v3336 = vpop.f32.mrf.mxu0
    %v3337 = vadd.f32 %v3323, %v3336
    %3338 = vdwg.mxu0
    %3339 = vmatpush.bf16.msra.mxu0 %v1928
    %3340 = vmatpush.bf16.msra.mxu0 %v1920
    %3341 = vmatpush.bf16.msra.mxu0 %v1912
    %3342 = vmatpush.bf16.msra.mxu0 %v1904
    %3343 = vmatpush.bf16.msra.mxu0 %v1896
    %3344 = vmatpush.bf16.msra.mxu0 %v1888
    %3345 = vmatpush.bf16.msra.mxu0 %v1880
    %3346 = vmatpush.bf16.msra.mxu0 %v1872
    %3347 = vmatmul.bf16.gmra.mxu0 %v676
    %v3348 = vpop.f32.mrf.mxu0
    %v3349 = vadd.f32 %v645, %v3348
    %v3350 = vpop.f32.mrf.mxu0
    %v3351 = vadd.f32 %v645, %v3350
    %3352 = vdwg.mxu0
    %3353 = vmatpush.bf16.msra.mxu0 %v1992
    %3354 = vmatpush.bf16.msra.mxu0 %v1984
    %3355 = vmatpush.bf16.msra.mxu0 %v1976
    %3356 = vmatpush.bf16.msra.mxu0 %v1968
    %3357 = vmatpush.bf16.msra.mxu0 %v1960
    %3358 = vmatpush.bf16.msra.mxu0 %v1952
    %3359 = vmatpush.bf16.msra.mxu0 %v1944
    %3360 = vmatpush.bf16.msra.mxu0 %v1936
    %3361 = vmatmul.bf16.gmra.mxu0 %v677
    %v3362 = vpop.f32.mrf.mxu0
    %v3363 = vadd.f32 %v3349, %v3362
    %v3364 = vpop.f32.mrf.mxu0
    %v3365 = vadd.f32 %v3351, %v3364
    %3366 = vdwg.mxu0
    %3367 = vmatpush.bf16.msra.mxu0 %v2056
    %3368 = vmatpush.bf16.msra.mxu0 %v2048
    %3369 = vmatpush.bf16.msra.mxu0 %v2040
    %3370 = vmatpush.bf16.msra.mxu0 %v2032
    %3371 = vmatpush.bf16.msra.mxu0 %v2024
    %3372 = vmatpush.bf16.msra.mxu0 %v2016
    %3373 = vmatpush.bf16.msra.mxu0 %v2008
    %3374 = vmatpush.bf16.msra.mxu0 %v2000
    %3375 = vmatmul.bf16.gmra.mxu0 %v678
    %v3376 = vpop.f32.mrf.mxu0
    %v3377 = vadd.f32 %v3363, %v3376
    %v3378 = vpop.f32.mrf.mxu0
    %v3379 = vadd.f32 %v3365, %v3378
    %3380 = vdwg.mxu0
    %3381 = vmatpush.bf16.msra.mxu0 %v2120
    %3382 = vmatpush.bf16.msra.mxu0 %v2112
    %3383 = vmatpush.bf16.msra.mxu0 %v2104
    %3384 = vmatpush.bf16.msra.mxu0 %v2096
    %3385 = vmatpush.bf16.msra.mxu0 %v2088
    %3386 = vmatpush.bf16.msra.mxu0 %v2080
    %3387 = vmatpush.bf16.msra.mxu0 %v2072
    %3388 = vmatpush.bf16.msra.mxu0 %v2064
    %3389 = vmatmul.bf16.gmra.mxu0 %v679
    %v3390 = vpop.f32.mrf.mxu0
    %v3391 = vadd.f32 %v3377, %v3390
    %v3392 = vpop.f32.mrf.mxu0
    %v3393 = vadd.f32 %v3379, %v3392
    %3394 = vdwg.mxu0
    %3395 = vmatpush.bf16.msra.mxu0 %v2184
    %3396 = vmatpush.bf16.msra.mxu0 %v2176
    %3397 = vmatpush.bf16.msra.mxu0 %v2168
    %3398 = vmatpush.bf16.msra.mxu0 %v2160
    %3399 = vmatpush.bf16.msra.mxu0 %v2152
    %3400 = vmatpush.bf16.msra.mxu0 %v2144
    %3401 = vmatpush.bf16.msra.mxu0 %v2136
    %3402 = vmatpush.bf16.msra.mxu0 %v2128
    %3403 = vmatmul.bf16.gmra.mxu0 %v680
    %v3404 = vpop.f32.mrf.mxu0
    %v3405 = vadd.f32 %v3391, %v3404
    %v3406 = vpop.f32.mrf.mxu0
    %v3407 = vadd.f32 %v3393, %v3406
    %3408 = vdwg.mxu0
    %3409 = vmatpush.bf16.msra.mxu0 %v2248
    %3410 = vmatpush.bf16.msra.mxu0 %v2240
    %3411 = vmatpush.bf16.msra.mxu0 %v2232
    %3412 = vmatpush.bf16.msra.mxu0 %v2224
    %3413 = vmatpush.bf16.msra.mxu0 %v2216
    %3414 = vmatpush.bf16.msra.mxu0 %v2208
    %3415 = vmatpush.bf16.msra.mxu0 %v2200
    %3416 = vmatpush.bf16.msra.mxu0 %v2192
    %3417 = vmatmul.bf16.gmra.mxu0 %v681
    %v3418 = vpop.f32.mrf.mxu0
    %v3419 = vadd.f32 %v3405, %v3418
    %v3420 = vpop.f32.mrf.mxu0
    %v3421 = vadd.f32 %v3407, %v3420
    %3422 = vdwg.mxu0
    %3423 = vmatpush.bf16.msra.mxu0 0
    %3424 = vmatpush.bf16.msra.mxu0 0
    %3425 = vmatpush.bf16.msra.mxu0 0
    %3426 = vmatpush.bf16.msra.mxu0 0
    %3427 = vmatpush.bf16.msra.mxu0 0
    %3428 = vmatpush.bf16.msra.mxu0 0
    %3429 = vmatpush.bf16.msra.mxu0 0
    %3430 = vmatpush.bf16.msra.mxu0 %v2256
    %3431 = vmatmul.bf16.gmra.mxu0 %v2651
    %v3432 = vpop.f32.mrf.mxu0
    %v3433 = vadd.f32 %v3419, %v3432
    %v3434 = vpop.f32.mrf.mxu0
    %v3435 = vadd.f32 %v3421, %v3434
    %3436 = vdwg.mxu0
    %v3437 = vmax.f32 %v2747, 0.0
    %v3438 = vmax.f32 %v2845, 0.0
    %v3439 = vmax.f32 %v2943, 0.0
    %v3440 = vmax.f32 %v3041, 0.0
    %v3441 = vmax.f32 %v3139, 0.0
    %v3442 = vmax.f32 %v3237, 0.0
    %v3443 = vmax.f32 %v3335, 0.0
    %v3444 = vmax.f32 %v3433, 0.0
    %v3445 = vmax.f32 %v2749, 0.0
    %v3446 = vmax.f32 %v2847, 0.0
    %v3447 = vmax.f32 %v2945, 0.0
    %v3448 = vmax.f32 %v3043, 0.0
    %v3449 = vmax.f32 %v3141, 0.0
    %v3450 = vmax.f32 %v3239, 0.0
    %v3451 = vmax.f32 %v3337, 0.0
    %v3452 = vmax.f32 %v3435, 0.0
    %v3453 = vpack.c.bf16 %v3445, %v3437
    %v3454 = vpack.c.bf16 %v3446, %v3438
    %v3455 = vpack.c.bf16 %v3447, %v3439
    %v3456 = vpack.c.bf16 %v3448, %v3440
    %v3457 = vpack.c.bf16 %v3449, %v3441
    %v3458 = vpack.c.bf16 %v3450, %v3442
    %v3459 = vpack.c.bf16 %v3451, %v3443
    %v3460 = vpack.c.bf16 %v3452, %v3444
    %v3461 = vld [vmem:[#allocation8] sm:$0xf]
    %v3462 = vld [vmem:[#allocation8 + $0x4] sm:$0xf]
    %v3463 = vld [vmem:[#allocation8 + $0x8] sm:$0xf]
    %v3464 = vld [vmem:[#allocation8 + $0xc] sm:$0xf]
    %v3465 = vld [vmem:[#allocation8 + $0x10] sm:$0xf]
    %v3466 = vld [vmem:[#allocation8 + $0x14] sm:$0xf]
    %v3467 = vld [vmem:[#allocation8 + $0x18] sm:$0xf]
    %v3468 = vld [vmem:[#allocation8 + $0x1c] sm:$0xf]
    %v3469 = vld [vmem:[#allocation8 + $0x20] sm:$0xf]
    %v3470 = vld [vmem:[#allocation8 + $0x24] sm:$0xf]
    %v3471 = vld [vmem:[#allocation8 + $0x28] sm:$0xf]
    %v3472 = vld [vmem:[#allocation8 + $0x2c] sm:$0xf]
    %v3473 = vld [vmem:[#allocation8 + $0x30] sm:$0xf]
    %v3474 = vld [vmem:[#allocation8 + $0x34] sm:$0xf]
    %v3475 = vld [vmem:[#allocation8 + $0x38] sm:$0xf]
    %v3476 = vld [vmem:[#allocation8 + $0x3c] sm:$0xf]
    %v3477 = vld [vmem:[#allocation8 + $0x40] sm:$0xf]
    %v3478 = vld [vmem:[#allocation8 + $0x44] sm:$0xf]
    %v3479 = vld [vmem:[#allocation8 + $0x48] sm:$0xf]
    %v3480 = vld [vmem:[#allocation8 + $0x4c] sm:$0xf]
    %v3481 = vld [vmem:[#allocation8 + $0x50] sm:$0xf]
    %v3482 = vld [vmem:[#allocation8 + $0x54] sm:$0xf]
    %v3483 = vld [vmem:[#allocation8 + $0x58] sm:$0xf]
    %v3484 = vld [vmem:[#allocation8 + $0x5c] sm:$0xf]
    %v3485 = vld [vmem:[#allocation8 + $0x60] sm:$0xf]
    %v3486 = vld [vmem:[#allocation8 + $0x64] sm:$0xf]
    %v3487 = vld [vmem:[#allocation8 + $0x68] sm:$0xf]
    %v3488 = vld [vmem:[#allocation8 + $0x6c] sm:$0xf]
    %v3489 = vld [vmem:[#allocation8 + $0x70] sm:$0xf]
    %v3490 = vld [vmem:[#allocation8 + $0x74] sm:$0xf]
    %v3491 = vld [vmem:[#allocation8 + $0x78] sm:$0xf]
    %v3492 = vld [vmem:[#allocation8 + $0x7c] sm:$0xf]
    %v3493 = vld [vmem:[#allocation8 + $0x80] sm:$0xf]
    %v3494 = vld [vmem:[#allocation8 + $0x84] sm:$0xf]
    %v3495 = vld [vmem:[#allocation8 + $0x88] sm:$0xf]
    %v3496 = vld [vmem:[#allocation8 + $0x8c] sm:$0xf]
    %v3497 = vld [vmem:[#allocation8 + $0x90] sm:$0xf]
    %v3498 = vld [vmem:[#allocation8 + $0x94] sm:$0xf]
    %v3499 = vld [vmem:[#allocation8 + $0x98] sm:$0xf]
    %v3500 = vld [vmem:[#allocation8 + $0x9c] sm:$0xf]
    %v3501 = vld [vmem:[#allocation8 + $0xa0] sm:$0xf]
    %v3502 = vld [vmem:[#allocation8 + $0xa4] sm:$0xf]
    %v3503 = vld [vmem:[#allocation8 + $0xa8] sm:$0xf]
    %v3504 = vld [vmem:[#allocation8 + $0xac] sm:$0xf]
    %v3505 = vld [vmem:[#allocation8 + $0xb0] sm:$0xf]
    %v3506 = vld [vmem:[#allocation8 + $0xb4] sm:$0xf]
    %v3507 = vld [vmem:[#allocation8 + $0xb8] sm:$0xf]
    %v3508 = vld [vmem:[#allocation8 + $0xbc] sm:$0xf]
    %v3509 = vld [vmem:[#allocation8 + $0xc0] sm:$0xf]
    %v3510 = vld [vmem:[#allocation8 + $0xc4] sm:$0xf]
    %v3511 = vld [vmem:[#allocation8 + $0xc8] sm:$0xf]
    %v3512 = vld [vmem:[#allocation8 + $0xcc] sm:$0xf]
    %v3513 = vld [vmem:[#allocation8 + $0xd0] sm:$0xf]
    %v3514 = vld [vmem:[#allocation8 + $0xd4] sm:$0xf]
    %v3515 = vld [vmem:[#allocation8 + $0xd8] sm:$0xf]
    %v3516 = vld [vmem:[#allocation8 + $0xdc] sm:$0xf]
    %v3517 = vld [vmem:[#allocation8 + $0xe0] sm:$0xf]
    %v3518 = vld [vmem:[#allocation8 + $0xe4] sm:$0xf]
    %v3519 = vld [vmem:[#allocation8 + $0xe8] sm:$0xf]
    %v3520 = vld [vmem:[#allocation8 + $0xec] sm:$0xf]
    %v3521 = vld [vmem:[#allocation8 + $0xf0] sm:$0xf]
    %v3522 = vld [vmem:[#allocation8 + $0xf4] sm:$0xf]
    %v3523 = vld [vmem:[#allocation8 + $0xf8] sm:$0xf]
    %v3524 = vld [vmem:[#allocation8 + $0xfc] sm:$0xf]
    %v3525 = vld [vmem:[#allocation8 + $0x100] sm:$0xf]
    %v3526 = vld [vmem:[#allocation8 + $0x104] sm:$0xf]
    %v3527 = vld [vmem:[#allocation8 + $0x108] sm:$0xf]
    %v3528 = vld [vmem:[#allocation8 + $0x10c] sm:$0xf]
    %v3529 = vld [vmem:[#allocation8 + $0x110] sm:$0xf]
    %v3530 = vld [vmem:[#allocation8 + $0x114] sm:$0xf]
    %v3531 = vld [vmem:[#allocation8 + $0x118] sm:$0xf]
    %v3532 = vld [vmem:[#allocation8 + $0x11c] sm:$0xf]
    %v3533 = vld [vmem:[#allocation8 + $0x120] sm:$0xf]
    %v3534 = vld [vmem:[#allocation8 + $0x124] sm:$0xf]
    %v3535 = vld [vmem:[#allocation8 + $0x128] sm:$0xf]
    %v3536 = vld [vmem:[#allocation8 + $0x12c] sm:$0xf]
    %v3537 = vld [vmem:[#allocation8 + $0x130] sm:$0xf]
    %v3538 = vld [vmem:[#allocation8 + $0x134] sm:$0xf]
    %v3539 = vld [vmem:[#allocation8 + $0x138] sm:$0xf]
    %v3540 = vld [vmem:[#allocation8 + $0x13c] sm:$0xf]
    %v3541 = vld [vmem:[#allocation8 + $0x140] sm:$0xf]
    %v3542 = vld [vmem:[#allocation8 + $0x144] sm:$0xf]
    %v3543 = vld [vmem:[#allocation8 + $0x148] sm:$0xf]
    %v3544 = vld [vmem:[#allocation8 + $0x14c] sm:$0xf]
    %v3545 = vld [vmem:[#allocation8 + $0x150] sm:$0xf]
    %v3546 = vld [vmem:[#allocation8 + $0x154] sm:$0xf]
    %v3547 = vld [vmem:[#allocation8 + $0x158] sm:$0xf]
    %v3548 = vld [vmem:[#allocation8 + $0x15c] sm:$0xf]
    %v3549 = vld [vmem:[#allocation8 + $0x160] sm:$0xf]
    %v3550 = vld [vmem:[#allocation8 + $0x164] sm:$0xf]
    %v3551 = vld [vmem:[#allocation8 + $0x168] sm:$0xf]
    %v3552 = vld [vmem:[#allocation8 + $0x16c] sm:$0xf]
    %v3553 = vld [vmem:[#allocation8 + $0x170] sm:$0xf]
    %v3554 = vld [vmem:[#allocation8 + $0x174] sm:$0xf]
    %v3555 = vld [vmem:[#allocation8 + $0x178] sm:$0xf]
    %v3556 = vld [vmem:[#allocation8 + $0x17c] sm:$0xf]
    %v3557 = vld [vmem:[#allocation8 + $0x180] sm:$0xf]
    %v3558 = vld [vmem:[#allocation8 + $0x184] sm:$0xf]
    %v3559 = vld [vmem:[#allocation8 + $0x188] sm:$0xf]
    %v3560 = vld [vmem:[#allocation8 + $0x18c] sm:$0xf]
    %v3561 = vld [vmem:[#allocation8 + $0x190] sm:$0xf]
    %v3562 = vld [vmem:[#allocation8 + $0x194] sm:$0xf]
    %v3563 = vld [vmem:[#allocation8 + $0x198] sm:$0xf]
    %v3564 = vld [vmem:[#allocation8 + $0x19c] sm:$0xf]
    %v3565 = vld [vmem:[#allocation8 + $0x1a0] sm:$0xf]
    %v3566 = vld [vmem:[#allocation8 + $0x1a4] sm:$0xf]
    %v3567 = vld [vmem:[#allocation8 + $0x1a8] sm:$0xf]
    %v3568 = vld [vmem:[#allocation8 + $0x1ac] sm:$0xf]
    %v3569 = vld [vmem:[#allocation8 + $0x1b0] sm:$0xf]
    %v3570 = vld [vmem:[#allocation8 + $0x1b4] sm:$0xf]
    %v3571 = vld [vmem:[#allocation8 + $0x1b8] sm:$0xf]
    %v3572 = vld [vmem:[#allocation8 + $0x1bc] sm:$0xf]
    %v3573 = vld [vmem:[#allocation8 + $0x1c0] sm:$0xf]
    %v3574 = vld [vmem:[#allocation8 + $0x1c4] sm:$0xf]
    %v3575 = vld [vmem:[#allocation8 + $0x1c8] sm:$0xf]
    %v3576 = vld [vmem:[#allocation8 + $0x1cc] sm:$0xf]
    %v3577 = vld [vmem:[#allocation8 + $0x1d0] sm:$0xf]
    %v3578 = vld [vmem:[#allocation8 + $0x1d4] sm:$0xf]
    %v3579 = vld [vmem:[#allocation8 + $0x1d8] sm:$0xf]
    %v3580 = vld [vmem:[#allocation8 + $0x1dc] sm:$0xf]
    %v3581 = vld [vmem:[#allocation8 + $0x1e0] sm:$0xf]
    %v3582 = vld [vmem:[#allocation8 + $0x1e4] sm:$0xf]
    %v3583 = vld [vmem:[#allocation8 + $0x1e8] sm:$0xf]
    %v3584 = vld [vmem:[#allocation8 + $0x1ec] sm:$0xf]
    %v3585 = vld [vmem:[#allocation8 + $0x1f0] sm:$0xf]
    %v3586 = vld [vmem:[#allocation8 + $0x1f4] sm:$0xf]
    %v3587 = vld [vmem:[#allocation8 + $0x1f8] sm:$0xf]
    %v3588 = vld [vmem:[#allocation8 + $0x1fc] sm:$0xf]
    %v3589 = vld [vmem:[#allocation10] sm:$0x1]
    %v3591 = vperm.slane %v3589, 0
    %v3721 = vunpack.c.l.b16 %v3461
    %v3722 = vunpack.c.l.b16 %v3462
    %v3723 = vunpack.c.l.b16 %v3463
    %v3724 = vunpack.c.l.b16 %v3464
    %v3725 = vunpack.c.l.b16 %v3465
    %v3726 = vunpack.c.l.b16 %v3466
    %v3727 = vunpack.c.l.b16 %v3467
    %v3728 = vunpack.c.l.b16 %v3468
    %v3729 = vunpack.c.l.b16 %v3469
    %v3730 = vunpack.c.l.b16 %v3470
    %v3731 = vunpack.c.l.b16 %v3471
    %v3732 = vunpack.c.l.b16 %v3472
    %v3733 = vunpack.c.l.b16 %v3473
    %v3734 = vunpack.c.l.b16 %v3474
    %v3735 = vunpack.c.l.b16 %v3475
    %v3736 = vunpack.c.l.b16 %v3476
    %v3737 = vunpack.c.l.b16 %v3477
    %v3738 = vunpack.c.l.b16 %v3478
    %v3739 = vunpack.c.l.b16 %v3479
    %v3740 = vunpack.c.l.b16 %v3480
    %v3741 = vunpack.c.l.b16 %v3481
    %v3742 = vunpack.c.l.b16 %v3482
    %v3743 = vunpack.c.l.b16 %v3483
    %v3744 = vunpack.c.l.b16 %v3484
    %v3745 = vunpack.c.l.b16 %v3485
    %v3746 = vunpack.c.l.b16 %v3486
    %v3747 = vunpack.c.l.b16 %v3487
    %v3748 = vunpack.c.l.b16 %v3488
    %v3749 = vunpack.c.l.b16 %v3489
    %v3750 = vunpack.c.l.b16 %v3490
    %v3751 = vunpack.c.l.b16 %v3491
    %v3752 = vunpack.c.l.b16 %v3492
    %v3753 = vunpack.c.l.b16 %v3493
    %v3754 = vunpack.c.l.b16 %v3494
    %v3755 = vunpack.c.l.b16 %v3495
    %v3756 = vunpack.c.l.b16 %v3496
    %v3757 = vunpack.c.l.b16 %v3497
    %v3758 = vunpack.c.l.b16 %v3498
    %v3759 = vunpack.c.l.b16 %v3499
    %v3760 = vunpack.c.l.b16 %v3500
    %v3761 = vunpack.c.l.b16 %v3501
    %v3762 = vunpack.c.l.b16 %v3502
    %v3763 = vunpack.c.l.b16 %v3503
    %v3764 = vunpack.c.l.b16 %v3504
    %v3765 = vunpack.c.l.b16 %v3505
    %v3766 = vunpack.c.l.b16 %v3506
    %v3767 = vunpack.c.l.b16 %v3507
    %v3768 = vunpack.c.l.b16 %v3508
    %v3769 = vunpack.c.l.b16 %v3509
    %v3770 = vunpack.c.l.b16 %v3510
    %v3771 = vunpack.c.l.b16 %v3511
    %v3772 = vunpack.c.l.b16 %v3512
    %v3773 = vunpack.c.l.b16 %v3513
    %v3774 = vunpack.c.l.b16 %v3514
    %v3775 = vunpack.c.l.b16 %v3515
    %v3776 = vunpack.c.l.b16 %v3516
    %v3777 = vunpack.c.l.b16 %v3517
    %v3778 = vunpack.c.l.b16 %v3518
    %v3779 = vunpack.c.l.b16 %v3519
    %v3780 = vunpack.c.l.b16 %v3520
    %v3781 = vunpack.c.l.b16 %v3521
    %v3782 = vunpack.c.l.b16 %v3522
    %v3783 = vunpack.c.l.b16 %v3523
    %v3784 = vunpack.c.l.b16 %v3524
    %v3785 = vunpack.c.l.b16 %v3525
    %v3786 = vunpack.c.l.b16 %v3526
    %v3787 = vunpack.c.l.b16 %v3527
    %v3788 = vunpack.c.l.b16 %v3528
    %v3789 = vunpack.c.l.b16 %v3529
    %v3790 = vunpack.c.l.b16 %v3530
    %v3791 = vunpack.c.l.b16 %v3531
    %v3792 = vunpack.c.l.b16 %v3532
    %v3793 = vunpack.c.l.b16 %v3533
    %v3794 = vunpack.c.l.b16 %v3534
    %v3795 = vunpack.c.l.b16 %v3535
    %v3796 = vunpack.c.l.b16 %v3536
    %v3797 = vunpack.c.l.b16 %v3537
    %v3798 = vunpack.c.l.b16 %v3538
    %v3799 = vunpack.c.l.b16 %v3539
    %v3800 = vunpack.c.l.b16 %v3540
    %v3801 = vunpack.c.l.b16 %v3541
    %v3802 = vunpack.c.l.b16 %v3542
    %v3803 = vunpack.c.l.b16 %v3543
    %v3804 = vunpack.c.l.b16 %v3544
    %v3805 = vunpack.c.l.b16 %v3545
    %v3806 = vunpack.c.l.b16 %v3546
    %v3807 = vunpack.c.l.b16 %v3547
    %v3808 = vunpack.c.l.b16 %v3548
    %v3809 = vunpack.c.l.b16 %v3549
    %v3810 = vunpack.c.l.b16 %v3550
    %v3811 = vunpack.c.l.b16 %v3551
    %v3812 = vunpack.c.l.b16 %v3552
    %v3813 = vunpack.c.l.b16 %v3553
    %v3814 = vunpack.c.l.b16 %v3554
    %v3815 = vunpack.c.l.b16 %v3555
    %v3816 = vunpack.c.l.b16 %v3556
    %v3817 = vunpack.c.l.b16 %v3557
    %v3818 = vunpack.c.l.b16 %v3558
    %v3819 = vunpack.c.l.b16 %v3559
    %v3820 = vunpack.c.l.b16 %v3560
    %v3821 = vunpack.c.l.b16 %v3561
    %v3822 = vunpack.c.l.b16 %v3562
    %v3823 = vunpack.c.l.b16 %v3563
    %v3824 = vunpack.c.l.b16 %v3564
    %v3825 = vunpack.c.l.b16 %v3565
    %v3826 = vunpack.c.l.b16 %v3566
    %v3827 = vunpack.c.l.b16 %v3567
    %v3828 = vunpack.c.l.b16 %v3568
    %v3829 = vunpack.c.l.b16 %v3569
    %v3830 = vunpack.c.l.b16 %v3570
    %v3831 = vunpack.c.l.b16 %v3571
    %v3832 = vunpack.c.l.b16 %v3572
    %v3833 = vunpack.c.l.b16 %v3573
    %v3834 = vunpack.c.l.b16 %v3574
    %v3835 = vunpack.c.l.b16 %v3575
    %v3836 = vunpack.c.l.b16 %v3576
    %v3837 = vunpack.c.l.b16 %v3577
    %v3838 = vunpack.c.l.b16 %v3578
    %v3839 = vunpack.c.l.b16 %v3579
    %v3840 = vunpack.c.l.b16 %v3580
    %v3841 = vunpack.c.l.b16 %v3581
    %v3842 = vunpack.c.l.b16 %v3582
    %v3843 = vunpack.c.l.b16 %v3583
    %v3844 = vunpack.c.l.b16 %v3584
    %v3845 = vunpack.c.l.b16 %v3585
    %v3846 = vunpack.c.l.b16 %v3586
    %v3847 = vunpack.c.l.b16 %v3587
    %v3848 = vunpack.c.l.b16 %v3588
    %v3849 = vpack.c.b16 %v3722, %v3721
    %v3850 = vpack.c.b16 %v3724, %v3723
    %v3851 = vpack.c.b16 %v3726, %v3725
    %v3852 = vpack.c.b16 %v3728, %v3727
    %v3853 = vpack.c.b16 %v3730, %v3729
    %v3854 = vpack.c.b16 %v3732, %v3731
    %v3855 = vpack.c.b16 %v3734, %v3733
    %v3856 = vpack.c.b16 %v3736, %v3735
    %v3857 = vpack.c.b16 %v3738, %v3737
    %v3858 = vpack.c.b16 %v3740, %v3739
    %v3859 = vpack.c.b16 %v3742, %v3741
    %v3860 = vpack.c.b16 %v3744, %v3743
    %v3861 = vpack.c.b16 %v3746, %v3745
    %v3862 = vpack.c.b16 %v3748, %v3747
    %v3863 = vpack.c.b16 %v3750, %v3749
    %v3864 = vpack.c.b16 %v3752, %v3751
    %v3865 = vpack.c.b16 %v3754, %v3753
    %v3866 = vpack.c.b16 %v3756, %v3755
    %v3867 = vpack.c.b16 %v3758, %v3757
    %v3868 = vpack.c.b16 %v3760, %v3759
    %v3869 = vpack.c.b16 %v3762, %v3761
    %v3870 = vpack.c.b16 %v3764, %v3763
    %v3871 = vpack.c.b16 %v3766, %v3765
    %v3872 = vpack.c.b16 %v3768, %v3767
    %v3873 = vpack.c.b16 %v3770, %v3769
    %v3874 = vpack.c.b16 %v3772, %v3771
    %v3875 = vpack.c.b16 %v3774, %v3773
    %v3876 = vpack.c.b16 %v3776, %v3775
    %v3877 = vpack.c.b16 %v3778, %v3777
    %v3878 = vpack.c.b16 %v3780, %v3779
    %v3879 = vpack.c.b16 %v3782, %v3781
    %v3880 = vpack.c.b16 %v3784, %v3783
    %v3881 = vpack.c.b16 %v3786, %v3785
    %v3882 = vpack.c.b16 %v3788, %v3787
    %v3883 = vpack.c.b16 %v3790, %v3789
    %v3884 = vpack.c.b16 %v3792, %v3791
    %v3885 = vpack.c.b16 %v3794, %v3793
    %v3886 = vpack.c.b16 %v3796, %v3795
    %v3887 = vpack.c.b16 %v3798, %v3797
    %v3888 = vpack.c.b16 %v3800, %v3799
    %v3889 = vpack.c.b16 %v3802, %v3801
    %v3890 = vpack.c.b16 %v3804, %v3803
    %v3891 = vpack.c.b16 %v3806, %v3805
    %v3892 = vpack.c.b16 %v3808, %v3807
    %v3893 = vpack.c.b16 %v3810, %v3809
    %v3894 = vpack.c.b16 %v3812, %v3811
    %v3895 = vpack.c.b16 %v3814, %v3813
    %v3896 = vpack.c.b16 %v3816, %v3815
    %v3897 = vpack.c.b16 %v3818, %v3817
    %v3898 = vpack.c.b16 %v3820, %v3819
    %v3899 = vpack.c.b16 %v3822, %v3821
    %v3900 = vpack.c.b16 %v3824, %v3823
    %v3901 = vpack.c.b16 %v3826, %v3825
    %v3902 = vpack.c.b16 %v3828, %v3827
    %v3903 = vpack.c.b16 %v3830, %v3829
    %v3904 = vpack.c.b16 %v3832, %v3831
    %v3905 = vpack.c.b16 %v3834, %v3833
    %v3906 = vpack.c.b16 %v3836, %v3835
    %v3907 = vpack.c.b16 %v3838, %v3837
    %v3908 = vpack.c.b16 %v3840, %v3839
    %v3909 = vpack.c.b16 %v3842, %v3841
    %v3910 = vpack.c.b16 %v3844, %v3843
    %v3911 = vpack.c.b16 %v3846, %v3845
    %v3912 = vpack.c.b16 %v3848, %v3847
    %3977 = vmatpush.bf16.msra.mxu0 %v3856
    %3978 = vmatpush.bf16.msra.mxu0 %v3855
    %3979 = vmatpush.bf16.msra.mxu0 %v3854
    %3980 = vmatpush.bf16.msra.mxu0 %v3853
    %3981 = vmatpush.bf16.msra.mxu0 %v3852
    %3982 = vmatpush.bf16.msra.mxu0 %v3851
    %3983 = vmatpush.bf16.msra.mxu0 %v3850
    %3984 = vmatpush.bf16.msra.mxu0 %v3849
    %3985 = vmatmul.bf16.gmra.mxu0 %v3453
    %v3986 = vpop.f32.mrf.mxu0
    %v3987 = vadd.f32 %v3591, %v3986
    %v3988 = vpop.f32.mrf.mxu0
    %v3989 = vadd.f32 %v3591, %v3988
    %3990 = vdwg.mxu0
    %3991 = vmatpush.bf16.msra.mxu0 %v3864
    %3992 = vmatpush.bf16.msra.mxu0 %v3863
    %3993 = vmatpush.bf16.msra.mxu0 %v3862
    %3994 = vmatpush.bf16.msra.mxu0 %v3861
    %3995 = vmatpush.bf16.msra.mxu0 %v3860
    %3996 = vmatpush.bf16.msra.mxu0 %v3859
    %3997 = vmatpush.bf16.msra.mxu0 %v3858
    %3998 = vmatpush.bf16.msra.mxu0 %v3857
    %3999 = vmatmul.bf16.gmra.mxu0 %v3454
    %v4000 = vpop.f32.mrf.mxu0
    %v4001 = vadd.f32 %v3987, %v4000
    %v4002 = vpop.f32.mrf.mxu0
    %v4003 = vadd.f32 %v3989, %v4002
    %4004 = vdwg.mxu0
    %4005 = vmatpush.bf16.msra.mxu0 %v3872
    %4006 = vmatpush.bf16.msra.mxu0 %v3871
    %4007 = vmatpush.bf16.msra.mxu0 %v3870
    %4008 = vmatpush.bf16.msra.mxu0 %v3869
    %4009 = vmatpush.bf16.msra.mxu0 %v3868
    %4010 = vmatpush.bf16.msra.mxu0 %v3867
    %4011 = vmatpush.bf16.msra.mxu0 %v3866
    %4012 = vmatpush.bf16.msra.mxu0 %v3865
    %4013 = vmatmul.bf16.gmra.mxu0 %v3455
    %v4014 = vpop.f32.mrf.mxu0
    %v4015 = vadd.f32 %v4001, %v4014
    %v4016 = vpop.f32.mrf.mxu0
    %v4017 = vadd.f32 %v4003, %v4016
    %4018 = vdwg.mxu0
    %4019 = vmatpush.bf16.msra.mxu0 %v3880
    %4020 = vmatpush.bf16.msra.mxu0 %v3879
    %4021 = vmatpush.bf16.msra.mxu0 %v3878
    %4022 = vmatpush.bf16.msra.mxu0 %v3877
    %4023 = vmatpush.bf16.msra.mxu0 %v3876
    %4024 = vmatpush.bf16.msra.mxu0 %v3875
    %4025 = vmatpush.bf16.msra.mxu0 %v3874
    %4026 = vmatpush.bf16.msra.mxu0 %v3873
    %4027 = vmatmul.bf16.gmra.mxu0 %v3456
    %v4028 = vpop.f32.mrf.mxu0
    %v4029 = vadd.f32 %v4015, %v4028
    %v4030 = vpop.f32.mrf.mxu0
    %v4031 = vadd.f32 %v4017, %v4030
    %4032 = vdwg.mxu0
    %4033 = vmatpush.bf16.msra.mxu0 %v3888
    %4034 = vmatpush.bf16.msra.mxu0 %v3887
    %4035 = vmatpush.bf16.msra.mxu0 %v3886
    %4036 = vmatpush.bf16.msra.mxu0 %v3885
    %4037 = vmatpush.bf16.msra.mxu0 %v3884
    %4038 = vmatpush.bf16.msra.mxu0 %v3883
    %4039 = vmatpush.bf16.msra.mxu0 %v3882
    %4040 = vmatpush.bf16.msra.mxu0 %v3881
    %4041 = vmatmul.bf16.gmra.mxu0 %v3457
    %v4042 = vpop.f32.mrf.mxu0
    %v4043 = vadd.f32 %v4029, %v4042
    %v4044 = vpop.f32.mrf.mxu0
    %v4045 = vadd.f32 %v4031, %v4044
    %4046 = vdwg.mxu0
    %4047 = vmatpush.bf16.msra.mxu0 %v3896
    %4048 = vmatpush.bf16.msra.mxu0 %v3895
    %4049 = vmatpush.bf16.msra.mxu0 %v3894
    %4050 = vmatpush.bf16.msra.mxu0 %v3893
    %4051 = vmatpush.bf16.msra.mxu0 %v3892
    %4052 = vmatpush.bf16.msra.mxu0 %v3891
    %4053 = vmatpush.bf16.msra.mxu0 %v3890
    %4054 = vmatpush.bf16.msra.mxu0 %v3889
    %4055 = vmatmul.bf16.gmra.mxu0 %v3458
    %v4056 = vpop.f32.mrf.mxu0
    %v4057 = vadd.f32 %v4043, %v4056
    %v4058 = vpop.f32.mrf.mxu0
    %v4059 = vadd.f32 %v4045, %v4058
    %4060 = vdwg.mxu0
    %4061 = vmatpush.bf16.msra.mxu0 %v3904
    %4062 = vmatpush.bf16.msra.mxu0 %v3903
    %4063 = vmatpush.bf16.msra.mxu0 %v3902
    %4064 = vmatpush.bf16.msra.mxu0 %v3901
    %4065 = vmatpush.bf16.msra.mxu0 %v3900
    %4066 = vmatpush.bf16.msra.mxu0 %v3899
    %4067 = vmatpush.bf16.msra.mxu0 %v3898
    %4068 = vmatpush.bf16.msra.mxu0 %v3897
    %4069 = vmatmul.bf16.gmra.mxu0 %v3459
    %v4070 = vpop.f32.mrf.mxu0
    %v4071 = vadd.f32 %v4057, %v4070
    %v4072 = vpop.f32.mrf.mxu0
    %v4073 = vadd.f32 %v4059, %v4072
    %4074 = vdwg.mxu0
    %4075 = vmatpush.bf16.msra.mxu0 %v3912
    %4076 = vmatpush.bf16.msra.mxu0 %v3911
    %4077 = vmatpush.bf16.msra.mxu0 %v3910
    %4078 = vmatpush.bf16.msra.mxu0 %v3909
    %4079 = vmatpush.bf16.msra.mxu0 %v3908
    %4080 = vmatpush.bf16.msra.mxu0 %v3907
    %4081 = vmatpush.bf16.msra.mxu0 %v3906
    %4082 = vmatpush.bf16.msra.mxu0 %v3905
    %4083 = vmatmul.bf16.gmra.mxu0 %v3460
    %v4084 = vpop.f32.mrf.mxu0
    %v4085 = vadd.f32 %v4071, %v4084
    %v4086 = vpop.f32.mrf.mxu0
    %v4087 = vadd.f32 %v4073, %v4086
    %4088 = vdwg.mxu0
    %v4089 = vmax.f32 %v4085, 0.0
    %v4090 = vmax.f32 %v4087, 0.0
    %v4091 = vpack.c.bf16 %v4090, %v4089
    %v4092 = vld [vmem:[#allocation11] sm:$0xf]
    %v4093 = vld [vmem:[#allocation11 + $0x4] sm:$0xf]
    %v4094 = vld [vmem:[#allocation11 + $0x8] sm:$0xf]
    %v4095 = vld [vmem:[#allocation11 + $0xc] sm:$0xf]
    %v4096 = vld [vmem:[#allocation11 + $0x10] sm:$0xf]
    %v4097 = vld [vmem:[#allocation11 + $0x14] sm:$0xf]
    %v4098 = vld [vmem:[#allocation11 + $0x18] sm:$0xf]
    %v4099 = vld [vmem:[#allocation11 + $0x1c] sm:$0xf]
    %v4100 = vld [vmem:[#allocation11 + $0x20] sm:$0xf]
    %v4101 = vld [vmem:[#allocation11 + $0x24] sm:$0xf]
    %v4102 = vld [vmem:[#allocation11 + $0x28] sm:$0xf]
    %v4103 = vld [vmem:[#allocation11 + $0x2c] sm:$0xf]
    %v4104 = vld [vmem:[#allocation11 + $0x30] sm:$0xf]
    %v4105 = vld [vmem:[#allocation11 + $0x34] sm:$0xf]
    %v4106 = vld [vmem:[#allocation11 + $0x38] sm:$0xf]
    %v4107 = vld [vmem:[#allocation11 + $0x3c] sm:$0xf]
    %v4108 = vld [vmem:[#allocation13] sm:$0x1]
    %v4110 = vperm.slane %v4108, 0
    %v4128 = vunpack.c.l.b16 %v4092
    %v4129 = vunpack.c.l.b16 %v4093
    %v4130 = vunpack.c.l.b16 %v4094
    %v4131 = vunpack.c.l.b16 %v4095
    %v4132 = vunpack.c.l.b16 %v4096
    %v4133 = vunpack.c.l.b16 %v4097
    %v4134 = vunpack.c.l.b16 %v4098
    %v4135 = vunpack.c.l.b16 %v4099
    %v4136 = vunpack.c.l.b16 %v4100
    %v4137 = vunpack.c.l.b16 %v4101
    %v4138 = vunpack.c.l.b16 %v4102
    %v4139 = vunpack.c.l.b16 %v4103
    %v4140 = vunpack.c.l.b16 %v4104
    %v4141 = vunpack.c.l.b16 %v4105
    %v4142 = vunpack.c.l.b16 %v4106
    %v4143 = vunpack.c.l.b16 %v4107
    %v4144 = vpack.c.b16 %v4129, %v4128
    %v4145 = vpack.c.b16 %v4131, %v4130
    %v4146 = vpack.c.b16 %v4133, %v4132
    %v4147 = vpack.c.b16 %v4135, %v4134
    %v4148 = vpack.c.b16 %v4137, %v4136
    %v4149 = vpack.c.b16 %v4139, %v4138
    %v4150 = vpack.c.b16 %v4141, %v4140
    %v4151 = vpack.c.b16 %v4143, %v4142
    %4160 = vmatpush.bf16.msra.mxu0 %v4151
    %4161 = vmatpush.bf16.msra.mxu0 %v4150
    %4162 = vmatpush.bf16.msra.mxu0 %v4149
    %4163 = vmatpush.bf16.msra.mxu0 %v4148
    %4164 = vmatpush.bf16.msra.mxu0 %v4147
    %4165 = vmatpush.bf16.msra.mxu0 %v4146
    %4166 = vmatpush.bf16.msra.mxu0 %v4145
    %4167 = vmatpush.bf16.msra.mxu0 %v4144
    %4168 = vmatmul.bf16.gmra.mxu0 %v4091
    %v4169 = vpop.f32.mrf.mxu0
    %v4170 = vadd.f32 %v4110, %v4169
    %v4171 = vpop.f32.mrf.mxu0
    %v4172 = vadd.f32 %v4110, %v4171
    %4173 = vdwg.mxu0
    %v4174 = vmax.f32 %v4170, 0.0
    %v4175 = vmax.f32 %v4172, 0.0
    %v4176 = vpack.c.bf16 %v4175, %v4174
    %v4177 = vld [vmem:[#allocation14] sm:$0xf]
    %v4178 = vld [vmem:[#allocation14 + $0x4] sm:$0xf]
    %v4179 = vld [vmem:[#allocation14 + $0x8] sm:$0xf]
    %v4180 = vld [vmem:[#allocation14 + $0xc] sm:$0xf]
    %v4181 = vld [vmem:[#allocation14 + $0x10] sm:$0xf]
    %v4182 = vld [vmem:[#allocation14 + $0x14] sm:$0xf]
    %v4183 = vld [vmem:[#allocation14 + $0x18] sm:$0xf]
    %v4184 = vld [vmem:[#allocation14 + $0x1c] sm:$0xf]
    %v4185 = vld [vmem:[#allocation14 + $0x20] sm:$0xf]
    %v4186 = vld [vmem:[#allocation14 + $0x24] sm:$0xf]
    %v4187 = vld [vmem:[#allocation14 + $0x28] sm:$0xf]
    %v4188 = vld [vmem:[#allocation14 + $0x2c] sm:$0xf]
    %v4189 = vld [vmem:[#allocation14 + $0x30] sm:$0xf]
    %v4190 = vld [vmem:[#allocation14 + $0x34] sm:$0xf]
    %v4191 = vld [vmem:[#allocation14 + $0x38] sm:$0xf]
    %v4192 = vld [vmem:[#allocation14 + $0x3c] sm:$0xf]
    %v4193 = vld [vmem:[#allocation16] sm:$0x1]
    %v4195 = vperm.slane %v4193, 0
    %v4213 = vunpack.c.l.b16 %v4177
    %v4214 = vunpack.c.l.b16 %v4178
    %v4215 = vunpack.c.l.b16 %v4179
    %v4216 = vunpack.c.l.b16 %v4180
    %v4217 = vunpack.c.l.b16 %v4181
    %v4218 = vunpack.c.l.b16 %v4182
    %v4219 = vunpack.c.l.b16 %v4183
    %v4220 = vunpack.c.l.b16 %v4184
    %v4221 = vunpack.c.l.b16 %v4185
    %v4222 = vunpack.c.l.b16 %v4186
    %v4223 = vunpack.c.l.b16 %v4187
    %v4224 = vunpack.c.l.b16 %v4188
    %v4225 = vunpack.c.l.b16 %v4189
    %v4226 = vunpack.c.l.b16 %v4190
    %v4227 = vunpack.c.l.b16 %v4191
    %v4228 = vunpack.c.l.b16 %v4192
    %v4229 = vpack.c.b16 %v4214, %v4213
    %v4230 = vpack.c.b16 %v4216, %v4215
    %v4231 = vpack.c.b16 %v4218, %v4217
    %v4232 = vpack.c.b16 %v4220, %v4219
    %v4233 = vpack.c.b16 %v4222, %v4221
    %v4234 = vpack.c.b16 %v4224, %v4223
    %v4235 = vpack.c.b16 %v4226, %v4225
    %v4236 = vpack.c.b16 %v4228, %v4227
    %4245 = vmatpush.bf16.msra.mxu0 %v4236
    %4246 = vmatpush.bf16.msra.mxu0 %v4235
    %4247 = vmatpush.bf16.msra.mxu0 %v4234
    %4248 = vmatpush.bf16.msra.mxu0 %v4233
    %4249 = vmatpush.bf16.msra.mxu0 %v4232
    %4250 = vmatpush.bf16.msra.mxu0 %v4231
    %4251 = vmatpush.bf16.msra.mxu0 %v4230
    %4252 = vmatpush.bf16.msra.mxu0 %v4229
    %4253 = vmatmul.bf16.gmra.mxu0 %v4176
    %v4254 = vpop.f32.mrf.mxu0
    %v4255 = vadd.f32 %v4195, %v4254
    %v4256 = vpop.f32.mrf.mxu0
    %v4257 = vadd.f32 %v4195, %v4256
    %4258 = vdwg.mxu0
    %v4259 = vmax.f32 %v4255, 0.0
    %v4260 = vmax.f32 %v4257, 0.0
    %v4261 = vpack.c.bf16 %v4260, %v4259
    %v4262 = vld [vmem:[#allocation17] sm:$0xf]
    %v4263 = vld [vmem:[#allocation17 + $0x4] sm:$0xf]
    %v4264 = vld [vmem:[#allocation17 + $0x8] sm:$0xf]
    %v4265 = vld [vmem:[#allocation17 + $0xc] sm:$0xf]
    %v4266 = vld [vmem:[#allocation17 + $0x10] sm:$0xf]
    %v4267 = vld [vmem:[#allocation17 + $0x14] sm:$0xf]
    %v4268 = vld [vmem:[#allocation17 + $0x18] sm:$0xf]
    %v4269 = vld [vmem:[#allocation17 + $0x1c] sm:$0xf]
    %v4270 = vld [vmem:[#allocation17 + $0x20] sm:$0xf]
    %v4271 = vld [vmem:[#allocation17 + $0x24] sm:$0xf]
    %v4272 = vld [vmem:[#allocation17 + $0x28] sm:$0xf]
    %v4273 = vld [vmem:[#allocation17 + $0x2c] sm:$0xf]
    %v4274 = vld [vmem:[#allocation17 + $0x30] sm:$0xf]
    %v4275 = vld [vmem:[#allocation17 + $0x34] sm:$0xf]
    %v4276 = vld [vmem:[#allocation17 + $0x38] sm:$0xf]
    %v4277 = vld [vmem:[#allocation17 + $0x3c] sm:$0xf]
    %v4278 = vld [vmem:[#allocation19] sm:$0x1]
    %v4280 = vperm.slane %v4278, 0
    %v4298 = vunpack.c.l.b16 %v4262
    %v4299 = vunpack.c.l.b16 %v4263
    %v4300 = vunpack.c.l.b16 %v4264
    %v4301 = vunpack.c.l.b16 %v4265
    %v4302 = vunpack.c.l.b16 %v4266
    %v4303 = vunpack.c.l.b16 %v4267
    %v4304 = vunpack.c.l.b16 %v4268
    %v4305 = vunpack.c.l.b16 %v4269
    %v4306 = vunpack.c.l.b16 %v4270
    %v4307 = vunpack.c.l.b16 %v4271
    %v4308 = vunpack.c.l.b16 %v4272
    %v4309 = vunpack.c.l.b16 %v4273
    %v4310 = vunpack.c.l.b16 %v4274
    %v4311 = vunpack.c.l.b16 %v4275
    %v4312 = vunpack.c.l.b16 %v4276
    %v4313 = vunpack.c.l.b16 %v4277
    %v4314 = vpack.c.b16 %v4299, %v4298
    %v4315 = vpack.c.b16 %v4301, %v4300
    %v4316 = vpack.c.b16 %v4303, %v4302
    %v4317 = vpack.c.b16 %v4305, %v4304
    %v4318 = vpack.c.b16 %v4307, %v4306
    %v4319 = vpack.c.b16 %v4309, %v4308
    %v4320 = vpack.c.b16 %v4311, %v4310
    %v4321 = vpack.c.b16 %v4313, %v4312
    %4330 = vmatpush.bf16.msra.mxu0 %v4321
    %4331 = vmatpush.bf16.msra.mxu0 %v4320
    %4332 = vmatpush.bf16.msra.mxu0 %v4319
    %4333 = vmatpush.bf16.msra.mxu0 %v4318
    %4334 = vmatpush.bf16.msra.mxu0 %v4317
    %4335 = vmatpush.bf16.msra.mxu0 %v4316
    %4336 = vmatpush.bf16.msra.mxu0 %v4315
    %4337 = vmatpush.bf16.msra.mxu0 %v4314
    %4338 = vmatmul.bf16.gmra.mxu0 %v4261
    %v4339 = vpop.f32.mrf.mxu0
    %v4340 = vadd.f32 %v4280, %v4339
    %v4341 = vpop.f32.mrf.mxu0
    %v4342 = vadd.f32 %v4280, %v4341
    %4343 = vdwg.mxu0
    %v4344 = vmax.f32 %v4340, 0.0
    %v4345 = vmax.f32 %v4342, 0.0
    %v4346 = vpack.c.bf16 %v4345, %v4344
    %v4347 = vld [vmem:[#allocation20] sm:$0xf]
    %v4348 = vld [vmem:[#allocation20 + $0x4] sm:$0xf]
    %v4349 = vld [vmem:[#allocation20 + $0x8] sm:$0xf]
    %v4350 = vld [vmem:[#allocation20 + $0xc] sm:$0xf]
    %v4351 = vld [vmem:[#allocation20 + $0x10] sm:$0xf]
    %v4352 = vld [vmem:[#allocation20 + $0x14] sm:$0xf]
    %v4353 = vld [vmem:[#allocation20 + $0x18] sm:$0xf]
    %v4354 = vld [vmem:[#allocation20 + $0x1c] sm:$0xf]
    %v4355 = vld [vmem:[#allocation20 + $0x20] sm:$0xf]
    %v4356 = vld [vmem:[#allocation20 + $0x24] sm:$0xf]
    %v4357 = vld [vmem:[#allocation20 + $0x28] sm:$0xf]
    %v4358 = vld [vmem:[#allocation20 + $0x2c] sm:$0xf]
    %v4359 = vld [vmem:[#allocation20 + $0x30] sm:$0xf]
    %v4360 = vld [vmem:[#allocation20 + $0x34] sm:$0xf]
    %v4361 = vld [vmem:[#allocation20 + $0x38] sm:$0xf]
    %v4362 = vld [vmem:[#allocation20 + $0x3c] sm:$0xf]
    %v4363 = vld [vmem:[#allocation22] sm:$0x1]
    %v4365 = vperm.slane %v4363, 0
    %v4383 = vunpack.c.l.b16 %v4347
    %v4384 = vunpack.c.l.b16 %v4348
    %v4385 = vunpack.c.l.b16 %v4349
    %v4386 = vunpack.c.l.b16 %v4350
    %v4387 = vunpack.c.l.b16 %v4351
    %v4388 = vunpack.c.l.b16 %v4352
    %v4389 = vunpack.c.l.b16 %v4353
    %v4390 = vunpack.c.l.b16 %v4354
    %v4391 = vunpack.c.l.b16 %v4355
    %v4392 = vunpack.c.l.b16 %v4356
    %v4393 = vunpack.c.l.b16 %v4357
    %v4394 = vunpack.c.l.b16 %v4358
    %v4395 = vunpack.c.l.b16 %v4359
    %v4396 = vunpack.c.l.b16 %v4360
    %v4397 = vunpack.c.l.b16 %v4361
    %v4398 = vunpack.c.l.b16 %v4362
    %v4399 = vpack.c.b16 %v4384, %v4383
    %v4400 = vpack.c.b16 %v4386, %v4385
    %v4401 = vpack.c.b16 %v4388, %v4387
    %v4402 = vpack.c.b16 %v4390, %v4389
    %v4403 = vpack.c.b16 %v4392, %v4391
    %v4404 = vpack.c.b16 %v4394, %v4393
    %v4405 = vpack.c.b16 %v4396, %v4395
    %v4406 = vpack.c.b16 %v4398, %v4397
    %4415 = vmatpush.bf16.msra.mxu0 %v4406
    %4416 = vmatpush.bf16.msra.mxu0 %v4405
    %4417 = vmatpush.bf16.msra.mxu0 %v4404
    %4418 = vmatpush.bf16.msra.mxu0 %v4403
    %4419 = vmatpush.bf16.msra.mxu0 %v4402
    %4420 = vmatpush.bf16.msra.mxu0 %v4401
    %4421 = vmatpush.bf16.msra.mxu0 %v4400
    %4422 = vmatpush.bf16.msra.mxu0 %v4399
    %4423 = vmatmul.bf16.gmra.mxu0 %v4346
    %v4424 = vpop.f32.mrf.mxu0
    %v4425 = vadd.f32 %v4365, %v4424
    %v4426 = vpop.f32.mrf.mxu0
    %v4427 = vadd.f32 %v4365, %v4426
    %4428 = vdwg.mxu0
    %4429 = vmax.xlane.f32.xlu0 %v4425
    %v4430 = vpop.xlane.xlu0 %4429
    %4431 = vmax.xlane.f32.xlu0 %v4427
    %v4432 = vpop.xlane.xlu0 %4431
    %v4433 = vsub.f32 %v4425, %v4430
    %v4434 = vsub.f32 %v4427, %v4432
    %v4435 = vmul.f32 %v4433, 1.442695
    %v4436 = vpow.pop %v4435
    %v4437 = vmul.f32 %v4434, 1.442695
    %v4438 = vpow.pop %v4437
    %4439 = vadd.xlane.f32.xlu0 %v4436
    %v4440 = vpop.xlane.xlu0 %4439
    %4441 = vadd.xlane.f32.xlu0 %v4438
    %v4442 = vpop.xlane.xlu0 %4441
    %v4443 = vrcp.pop %v4440
    %v4444 = vrcp.pop %v4442
    %v4445 = vmul.f32 %v4440, %v4443
    %v4446 = vmul.f32 %v4442, %v4444
    %v4447 = vsub.f32 2.0, %v4445
    %v4448 = vsub.f32 2.0, %v4446
    %v4449 = vmul.f32 %v4443, %v4447
    %v4450 = vmul.f32 %v4444, %v4448
    %v4451 = vmul.f32 %v4436, %v4449
    %v4452 = vmul.f32 %v4438, %v4450
    %4453 = vst [vmem:[#allocation23] sm:$0xff] %v4451
    %4454 = vst [vmem:[#allocation23 + $0x8] sm:$0xff] %v4452
    // Predicated region
    $region106: #{tpu_custom_call.1} parent=1 // pred_check
      _
    $region107: #{tpu_custom_call.1} parent=1 // pred_check_branch
      %4456 = sbr.rel (0) target = $region109
    $region108: #{tpu_custom_call.1} parent=1 // pred_region
      %4458 = vsyncadd [#allocation4], 0
      %s4459 = sshll.u32 [#allocation23], 4
      %s4460 = int_to_ptr.vmem [resolvable:$true] %s4459
      %s4461 = sshll.u32 %s13, 4
      %s4462 = int_to_ptr.hbm [resolvable:$true] %s4461
      %4467 = dma.vmem_to_hbm [thread:$0]  %s4460, 256, %s4462, [#allocation4], 128, 128, 8
    $region109: #{tpu_custom_call.1} parent=1 // pred_fallthru
      _
    // Predicated region
    $region110: #{tpu_custom_call.1} parent=1 // pred_check
      _
    $region111: #{tpu_custom_call.1} parent=1 // pred_check_branch
      %4469 = sbr.rel (0) target = $region113
    $region112: #{tpu_custom_call.1} parent=1 // pred_region
      %4471 = dma.done [#allocation4], 256
    $region113: #{tpu_custom_call.1} parent=1 // pred_fallthru
      _
    %4472 = vsyncpa [#allocation3], 1
    %4473 = vsyncpa [#allocation6], 1
    %4474 = vsyncpa [#allocation9], 1
    %4475 = vsyncpa [#allocation12], 1
    %4476 = vsyncpa [#allocation15], 1
    %4477 = vsyncpa [#allocation18], 1
    %4478 = vsyncpa [#allocation21], 1
    %4479 = vsyncpa [#allocation4], 1

</llo_original>
